<compile_context>
chip_gen: v6e
topology: v6e:2x2x1
jax: 0.10.0
libtpu: 0.0.40
codegen_flags: <defaults>
</compile_context>

<pallas_src>
import jax
import jax.numpy as jnp
from jax import lax
from jax.experimental import pallas as pl
from jax.experimental.pallas import tpu as pltpu

NUM_CLASSES = 10
SEQ_LEN = 128            # Linear(512, 256) requires 16 ch * (SEQ_LEN // 4) == 512
IN_CH = 2
N_BATCH = 2
FEAT_L = SEQ_LEN // 4    # 32
FEAT_C = 16
FLAT = FEAT_L * FEAT_C   # 512

# MXU-operand dtype for the big FC weights (f32 accumulation via preferred_element_type).
# jnp.float32 gives bit-exact parity; bf16 halves the only real HBM traffic on v6e/v7x.
FC_MXU_DTYPE = jnp.bfloat16


def _leaky(v):
    return jnp.where(v > 0, v, 0.01 * v)


def _shifted_pm1(h, sample_len):
    """h[l-1] and h[l+1] per sample-local position on an (N*L, C) channels-last slab.

    The +/-1 temporal shifts are sublane rotations (pltpu.roll, non-negative shifts only);
    rows that would read across a sample boundary (or wrap around the slab) are zeroed,
    reproducing Conv1d's zero padding.  sample_len is a power of two.
    """
    rows = h.shape[0]
    pos = lax.broadcasted_iota(jnp.int32, h.shape, 0) & (sample_len - 1)
    hm1 = jnp.where(pos == 0, 0.0, pltpu.roll(h, shift=1, axis=0))                        # h[r-1]
    hp1 = jnp.where(pos == sample_len - 1, 0.0, pltpu.roll(h, shift=rows - 1, axis=0))    # h[r+1]
    return hm1, hp1


def _conv3_mxu(h, sample_len, w_ref, b_ref):
    """Conv1d(kernel=3, stride=1, padding=1) on an (N*L, Cin) slab via channel contractions.

    w_ref: (3, Cin, Cout) with tap k multiplying h[l-1+k]; b_ref: (1, Cout).  The three tap
    matmuls are independent f32-accumulating MXU pushes that pipeline back-to-back.
    """
    hm1, hp1 = _shifted_pm1(h, sample_len)
    y = (jnp.dot(hm1, w_ref[0], preferred_element_type=jnp.float32)
         + jnp.dot(h, w_ref[1], preferred_element_type=jnp.float32)
         + jnp.dot(hp1, w_ref[2], preferred_element_type=jnp.float32))
    return y + b_ref[...]


def _conv1_vpu(x, sample_len, w_ref, b_ref):
    """First conv (Cin=2, k=3) on the VPU: 6 broadcast multiply-adds, no MXU round trip.

    w_ref: (6, Cout) with row k*2+ci = tap k (multiplying x[l-1+k]), input channel ci.
    """
    xm1, xp1 = _shifted_pm1(x, sample_len)
    y = (xm1[:, 0:1] * w_ref[0:1, :] + xm1[:, 1:2] * w_ref[1:2, :]
         + x[:, 0:1] * w_ref[2:3, :] + x[:, 1:2] * w_ref[3:4, :]
         + xp1[:, 0:1] * w_ref[4:5, :] + xp1[:, 1:2] * w_ref[5:6, :])
    return y + b_ref[...]


def _maxpool2(h, s_ref):
    """MaxPool1d(2) on an (N*L, C) slab: max with the +1-shifted copy, stage once, then one
    even sublane-strided read.  L is even so pool pairs never straddle sample boundaries."""
    rows = h.shape[0]
    s_ref[...] = jnp.maximum(h, pltpu.roll(h, shift=rows - 1, axis=0))   # m[r] = max(h[r], h[r+1])
    return s_ref[pl.ds(0, rows // 2, stride=2), :]


def legacy_cnn_kernel(x_ref, w1_ref, b1_ref, w2_ref, b2_ref, w3_ref, b3_ref,
                      wf1_ref, bf1_ref, wf2_ref, bf2_ref, wf3_ref, bf3_ref,
                      o_ref, pool1_s, pool2_s, z3_s, flat_s):
    n = o_ref.shape[0]

    # -------- feature stack: whole batch as one channels-last slab --------
    h = _leaky(_conv1_vpu(x_ref[...], SEQ_LEN, w1_ref, b1_ref))       # (n*128, 64)  BN1 folded
    h = _maxpool2(h, pool1_s)                                         # (n*64, 64)
    h = _leaky(_conv3_mxu(h, SEQ_LEN // 2, w2_ref, b2_ref))           # (n*64, 32)   BN2 folded
    h = _maxpool2(h, pool2_s)                                         # (n*32, 32)
    h = _leaky(_conv3_mxu(h, FEAT_L, w3_ref, b3_ref))                 # (n*32, 16)   no BN (spec)

    # -------- flatten: (n*32, 16) slab -> lane-dense (n, 512) rows --------
    # flat[n, l*16+c] = h[n*32+l, c]; wf1 rows were permuted at parameter-setup time so this
    # matches PyTorch's Flatten order (c*32+l).  32 batched strided-read + store pairs after the
    # conv stack (vs. 64 per-sample 16-lane stores interleaved with compute previously).
    z3_s[...] = h
    for l in range(FEAT_L):
        flat_s[:, l * FEAT_C:(l + 1) * FEAT_C] = z3_s[pl.ds(l, n, stride=FEAT_L), :]

    # -------- classifier (Dropout(0.3) -> identity at inference) --------
    f = flat_s[...]                                                   # (n, 512) f32
    z = _leaky(jnp.dot(f.astype(wf1_ref.dtype), wf1_ref[...],
                       preferred_element_type=jnp.float32) + bf1_ref[...])
    z = _leaky(jnp.dot(z.astype(wf2_ref.dtype), wf2_ref[...],
                       preferred_element_type=jnp.float32) + bf2_ref[...])
    o_ref[...] = jnp.dot(z.astype(wf3_ref.dtype), wf3_ref[...],
                         preferred_element_type=jnp.float32) + bf3_ref[...]


# ---------------- plain-JAX glue: parameter setup & wrapper ----------------

def init_torch_params(key):
    """Random parameters in PyTorch layouts (Conv1d: (Cout,Cin,K); Linear: (out,in); BN1d stats)."""
    ks = jax.random.split(key, 20)

    def nrm(k, shape, scale=0.1):
        return jax.random.normal(k, shape, jnp.float32) * scale

    return dict(
        conv1_w=nrm(ks[0], (64, 2, 3)),   conv1_b=nrm(ks[1], (64,)),
        bn1_g=1.0 + nrm(ks[2], (64,)),    bn1_b=nrm(ks[3], (64,)),
        bn1_m=nrm(ks[4], (64,)),
        bn1_v=1.0 + 0.5 * jax.random.uniform(ks[5], (64,), dtype=jnp.float32),
        conv2_w=nrm(ks[6], (32, 64, 3)),  conv2_b=nrm(ks[7], (32,)),
        bn2_g=1.0 + nrm(ks[8], (32,)),    bn2_b=nrm(ks[9], (32,)),
        bn2_m=nrm(ks[10], (32,)),
        bn2_v=1.0 + 0.5 * jax.random.uniform(ks[11], (32,), dtype=jnp.float32),
        conv3_w=nrm(ks[12], (16, 32, 3)), conv3_b=nrm(ks[13], (16,)),
        fc1_w=nrm(ks[14], (256, 512)),    fc1_b=nrm(ks[15], (256,)),
        fc2_w=nrm(ks[16], (128, 256)),    fc2_b=nrm(ks[17], (128,)),
        fc3_w=nrm(ks[18], (NUM_CLASSES, 128)), fc3_b=nrm(ks[19], (NUM_CLASSES,)),
    )


def pack_params(p, eps=1e-5):
    """One-time layout glue: fold eval-mode BN into the convs, convert to kernel layouts, permute
    fc1 rows from PyTorch Flatten order (c*32+l) to the kernel's lane-dense order (l*16+c), and
    cast the big FC weights to MXU-operand precision (accumulation stays f32 in the kernel)."""
    def conv_taps(w):                                  # (Cout, Cin, K) -> (K, Cin, Cout)
        return jnp.transpose(w, (2, 1, 0))

    s1 = p["bn1_g"] / jnp.sqrt(p["bn1_v"] + eps)
    s2 = p["bn2_g"] / jnp.sqrt(p["bn2_v"] + eps)

    w1 = (conv_taps(p["conv1_w"]) * s1[None, None, :]).reshape(3 * IN_CH, 64)   # rows k*2+ci
    b1 = (p["conv1_b"] - p["bn1_m"]) * s1 + p["bn1_b"]
    w2 = conv_taps(p["conv2_w"]) * s2[None, None, :]                            # (3, 64, 32)
    b2 = (p["conv2_b"] - p["bn2_m"]) * s2 + p["bn2_b"]
    w3 = conv_taps(p["conv3_w"])                                                # (3, 32, 16)
    b3 = p["conv3_b"]

    nf1 = p["fc1_w"].shape[0]
    wf1 = jnp.transpose(p["fc1_w"])                                             # (512, 256), rows c*32+l
    wf1 = wf1.reshape(FEAT_C, FEAT_L, nf1).transpose(1, 0, 2).reshape(FLAT, nf1)  # rows l*16+c
    wf2 = jnp.transpose(p["fc2_w"])
    wf3 = jnp.transpose(p["fc3_w"])

    return (w1, b1.reshape(1, -1), w2, b2.reshape(1, -1), w3, b3.reshape(1, -1),
            wf1.astype(FC_MXU_DTYPE), p["fc1_b"].reshape(1, -1),
            wf2.astype(FC_MXU_DTYPE), p["fc2_b"].reshape(1, -1),
            wf3.astype(FC_MXU_DTYPE), p["fc3_b"].reshape(1, -1))


def legacy_1dcnn_forward(x_ncl, params):
    """x_ncl: (N, 2, 128) float32 in PyTorch NCL layout.  Returns (N, NUM_CLASSES) float32."""
    n = x_ncl.shape[0]
    (w1, b1, w2, b2, w3, b3, wf1, bf1, wf2, bf2, wf3, bf3) = params
    # NCL -> channels-last (N*L, Cin) slab: the whole batch runs in one kernel invocation.
    x = jnp.transpose(x_ncl, (0, 2, 1)).reshape(n * SEQ_LEN, IN_CH).astype(jnp.float32)

    return pl.pallas_call(
        legacy_cnn_kernel,
        out_shape=jax.ShapeDtypeStruct((n, NUM_CLASSES), jnp.float32),
        scratch_shapes=[
            pltpu.VMEM((n * SEQ_LEN, 64), jnp.float32),        # maxpool-1 staging
            pltpu.VMEM((n * SEQ_LEN // 2, 32), jnp.float32),   # maxpool-2 staging
            pltpu.VMEM((n * FEAT_L, FEAT_C), jnp.float32),     # conv3 output slab
            pltpu.VMEM((n, FLAT), jnp.float32),                # lane-dense flattened features
        ],
    )(x, w1, b1, w2, b2, w3, b3, wf1, bf1, wf2, bf2, wf3, bf3)


if __name__ == "__main__":
    key = jax.random.PRNGKey(0)
    kx, kp = jax.random.split(key)
    # layout: NCL (N, C=2, L=128), exactly what the PyTorch module expects.
    x = jax.random.normal(kx, (N_BATCH, IN_CH, SEQ_LEN), dtype=jnp.float32)
    params = pack_params(init_torch_params(kp))

    out = jax.block_until_ready(legacy_1dcnn_forward(x, params))
    assert out.shape == (N_BATCH, NUM_CLASSES)
    assert bool(jnp.all(jnp.isfinite(out)))
    print("KERNEL_OK")
</pallas_src>

<mosaic_0001>
module attributes {stable_mosaic.version = 11 : i64} {
  func.func @legacy_cnn_kernel(%arg0: memref<256x2xf32, #tpu.memory_space<vmem>>, %arg1: memref<6x64xf32, #tpu.memory_space<vmem>>, %arg2: memref<1x64xf32, #tpu.memory_space<vmem>>, %arg3: memref<3x64x32xf32, #tpu.memory_space<vmem>>, %arg4: memref<1x32xf32, #tpu.memory_space<vmem>>, %arg5: memref<3x32x16xf32, #tpu.memory_space<vmem>>, %arg6: memref<1x16xf32, #tpu.memory_space<vmem>>, %arg7: memref<512x256xbf16, #tpu.memory_space<vmem>>, %arg8: memref<1x256xf32, #tpu.memory_space<vmem>>, %arg9: memref<256x128xbf16, #tpu.memory_space<vmem>>, %arg10: memref<1x128xf32, #tpu.memory_space<vmem>>, %arg11: memref<128x10xbf16, #tpu.memory_space<vmem>>, %arg12: memref<1x10xf32, #tpu.memory_space<vmem>>, %arg13: memref<2x10xf32, #tpu.memory_space<vmem>>, %arg14: memref<256x64xf32, #tpu.memory_space<vmem>>, %arg15: memref<128x32xf32, #tpu.memory_space<vmem>>, %arg16: memref<64x16xf32, #tpu.memory_space<vmem>>, %arg17: memref<2x512xf32, #tpu.memory_space<vmem>>) attributes {dimension_semantics = [], scalar_prefetch = 0 : i64, scratch_operands = 4 : i64, tpu.core_type = #tpu.core_type<tc>} {
    %c0 = arith.constant 0 : index
    %c0_0 = arith.constant 0 : index
    %0 = vector.load %arg0[%c0, %c0_0] : memref<256x2xf32, #tpu.memory_space<vmem>>, vector<256x2xf32>
    %1 = tpu.iota {dimensions = array<i32: 0>} : vector<256x2xi32>
    %c127_i32 = arith.constant 127 : i32
    %2 = vector.broadcast %c127_i32 : i32 to vector<256x2xi32>
    %3 = arith.andi %1, %2 : vector<256x2xi32>
    %c0_i32 = arith.constant 0 : i32
    %4 = vector.broadcast %c0_i32 : i32 to vector<256x2xi32>
    %5 = arith.cmpi eq, %3, %4 : vector<256x2xi32>
    %c1_i32 = arith.constant 1 : i32
    %6 = tpu.dynamic_rotate %0 by %c1_i32 dim 0 : vector<256x2xf32>, i32 -> vector<256x2xf32>
    %cst = arith.constant 0.000000e+00 : f32
    %7 = vector.broadcast %cst : f32 to vector<256x2xf32>
    %8 = arith.select %5, %7, %6 : vector<256x2xi1>, vector<256x2xf32>
    %c127_i32_1 = arith.constant 127 : i32
    %9 = vector.broadcast %c127_i32_1 : i32 to vector<256x2xi32>
    %10 = arith.cmpi eq, %3, %9 : vector<256x2xi32>
    %c255_i32 = arith.constant 255 : i32
    %11 = tpu.dynamic_rotate %0 by %c255_i32 dim 0 : vector<256x2xf32>, i32 -> vector<256x2xf32>
    %cst_2 = arith.constant 0.000000e+00 : f32
    %12 = vector.broadcast %cst_2 : f32 to vector<256x2xf32>
    %13 = arith.select %10, %12, %11 : vector<256x2xi1>, vector<256x2xf32>
    %14 = vector.extract_strided_slice %8 {offsets = [0, 0], sizes = [256, 1], strides = [1, 1]} : vector<256x2xf32> to vector<256x1xf32>
    %c0_3 = arith.constant 0 : index
    %c0_4 = arith.constant 0 : index
    %15 = vector.load %arg1[%c0_3, %c0_4] : memref<6x64xf32, #tpu.memory_space<vmem>>, vector<1x64xf32>
    %16 = vector.broadcast %14 : vector<256x1xf32> to vector<256x64xf32>
    %17 = vector.broadcast %15 : vector<1x64xf32> to vector<256x64xf32>
    %18 = arith.mulf %16, %17 : vector<256x64xf32>
    %19 = vector.extract_strided_slice %8 {offsets = [0, 1], sizes = [256, 1], strides = [1, 1]} : vector<256x2xf32> to vector<256x1xf32>
    %c1 = arith.constant 1 : index
    %c0_5 = arith.constant 0 : index
    %20 = vector.load %arg1[%c1, %c0_5] : memref<6x64xf32, #tpu.memory_space<vmem>>, vector<1x64xf32>
    %21 = vector.broadcast %19 : vector<256x1xf32> to vector<256x64xf32>
    %22 = vector.broadcast %20 : vector<1x64xf32> to vector<256x64xf32>
    %23 = arith.mulf %21, %22 : vector<256x64xf32>
    %24 = arith.addf %18, %23 : vector<256x64xf32>
    %25 = vector.extract_strided_slice %0 {offsets = [0, 0], sizes = [256, 1], strides = [1, 1]} : vector<256x2xf32> to vector<256x1xf32>
    %c2 = arith.constant 2 : index
    %c0_6 = arith.constant 0 : index
    %26 = vector.load %arg1[%c2, %c0_6] : memref<6x64xf32, #tpu.memory_space<vmem>>, vector<1x64xf32>
    %27 = vector.broadcast %25 : vector<256x1xf32> to vector<256x64xf32>
    %28 = vector.broadcast %26 : vector<1x64xf32> to vector<256x64xf32>
    %29 = arith.mulf %27, %28 : vector<256x64xf32>
    %30 = arith.addf %24, %29 : vector<256x64xf32>
    %31 = vector.extract_strided_slice %0 {offsets = [0, 1], sizes = [256, 1], strides = [1, 1]} : vector<256x2xf32> to vector<256x1xf32>
    %c3 = arith.constant 3 : index
    %c0_7 = arith.constant 0 : index
    %32 = vector.load %arg1[%c3, %c0_7] : memref<6x64xf32, #tpu.memory_space<vmem>>, vector<1x64xf32>
    %33 = vector.broadcast %31 : vector<256x1xf32> to vector<256x64xf32>
    %34 = vector.broadcast %32 : vector<1x64xf32> to vector<256x64xf32>
    %35 = arith.mulf %33, %34 : vector<256x64xf32>
    %36 = arith.addf %30, %35 : vector<256x64xf32>
    %37 = vector.extract_strided_slice %13 {offsets = [0, 0], sizes = [256, 1], strides = [1, 1]} : vector<256x2xf32> to vector<256x1xf32>
    %c4 = arith.constant 4 : index
    %c0_8 = arith.constant 0 : index
    %38 = vector.load %arg1[%c4, %c0_8] : memref<6x64xf32, #tpu.memory_space<vmem>>, vector<1x64xf32>
    %39 = vector.broadcast %37 : vector<256x1xf32> to vector<256x64xf32>
    %40 = vector.broadcast %38 : vector<1x64xf32> to vector<256x64xf32>
    %41 = arith.mulf %39, %40 : vector<256x64xf32>
    %42 = arith.addf %36, %41 : vector<256x64xf32>
    %43 = vector.extract_strided_slice %13 {offsets = [0, 1], sizes = [256, 1], strides = [1, 1]} : vector<256x2xf32> to vector<256x1xf32>
    %c5 = arith.constant 5 : index
    %c0_9 = arith.constant 0 : index
    %44 = vector.load %arg1[%c5, %c0_9] : memref<6x64xf32, #tpu.memory_space<vmem>>, vector<1x64xf32>
    %45 = vector.broadcast %43 : vector<256x1xf32> to vector<256x64xf32>
    %46 = vector.broadcast %44 : vector<1x64xf32> to vector<256x64xf32>
    %47 = arith.mulf %45, %46 : vector<256x64xf32>
    %48 = arith.addf %42, %47 : vector<256x64xf32>
    %c0_10 = arith.constant 0 : index
    %c0_11 = arith.constant 0 : index
    %49 = vector.load %arg2[%c0_10, %c0_11] : memref<1x64xf32, #tpu.memory_space<vmem>>, vector<1x64xf32>
    %50 = vector.broadcast %49 : vector<1x64xf32> to vector<256x64xf32>
    %51 = arith.addf %48, %50 : vector<256x64xf32>
    %cst_12 = arith.constant 0.000000e+00 : f32
    %52 = vector.broadcast %cst_12 : f32 to vector<256x64xf32>
    %53 = arith.cmpf ogt, %51, %52 : vector<256x64xf32>
    %cst_13 = arith.constant 0.00999999977 : f32
    %54 = vector.broadcast %cst_13 : f32 to vector<256x64xf32>
    %55 = arith.mulf %54, %51 : vector<256x64xf32>
    %56 = arith.select %53, %51, %55 : vector<256x64xi1>, vector<256x64xf32>
    %c255_i32_14 = arith.constant 255 : i32
    %57 = tpu.dynamic_rotate %56 by %c255_i32_14 dim 0 : vector<256x64xf32>, i32 -> vector<256x64xf32>
    %58 = arith.maximumf %56, %57 : vector<256x64xf32>
    %c0_15 = arith.constant 0 : index
    %c0_16 = arith.constant 0 : index
    %59 = vector.load %arg14[%c0_15, %c0_16] : memref<256x64xf32, #tpu.memory_space<vmem>>, vector<256x64xf32>
    tpu.vector_store %arg14[%c0_15, %c0_16], %58 {strides = array<i32>} : memref<256x64xf32, #tpu.memory_space<vmem>>, vector<256x64xf32>,
    %c0_17 = arith.constant 0 : index
    %c0_18 = arith.constant 0 : index
    %60 = tpu.strided_load %arg14[%c0_17, %c0_18] {strides = array<i32: 2, 1>} : memref<256x64xf32, #tpu.memory_space<vmem>>, vector<128x64xf32>
    %61 = tpu.iota {dimensions = array<i32: 0>} : vector<128x64xi32>
    %c63_i32 = arith.constant 63 : i32
    %62 = vector.broadcast %c63_i32 : i32 to vector<128x64xi32>
    %63 = arith.andi %61, %62 : vector<128x64xi32>
    %c0_i32_19 = arith.constant 0 : i32
    %64 = vector.broadcast %c0_i32_19 : i32 to vector<128x64xi32>
    %65 = arith.cmpi eq, %63, %64 : vector<128x64xi32>
    %c1_i32_20 = arith.constant 1 : i32
    %66 = tpu.dynamic_rotate %60 by %c1_i32_20 dim 0 : vector<128x64xf32>, i32 -> vector<128x64xf32>
    %cst_21 = arith.constant 0.000000e+00 : f32
    %67 = vector.broadcast %cst_21 : f32 to vector<128x64xf32>
    %68 = arith.select %65, %67, %66 : vector<128x64xi1>, vector<128x64xf32>
    %c63_i32_22 = arith.constant 63 : i32
    %69 = vector.broadcast %c63_i32_22 : i32 to vector<128x64xi32>
    %70 = arith.cmpi eq, %63, %69 : vector<128x64xi32>
    %c127_i32_23 = arith.constant 127 : i32
    %71 = tpu.dynamic_rotate %60 by %c127_i32_23 dim 0 : vector<128x64xf32>, i32 -> vector<128x64xf32>
    %cst_24 = arith.constant 0.000000e+00 : f32
    %72 = vector.broadcast %cst_24 : f32 to vector<128x64xf32>
    %73 = arith.select %70, %72, %71 : vector<128x64xi1>, vector<128x64xf32>
    %c0_25 = arith.constant 0 : index
    %c0_26 = arith.constant 0 : index
    %c0_27 = arith.constant 0 : index
    %74 = vector.load %arg3[%c0_25, %c0_26, %c0_27] : memref<3x64x32xf32, #tpu.memory_space<vmem>>, vector<1x64x32xf32>
    %75 = vector.shape_cast %74 : vector<1x64x32xf32> to vector<64x32xf32>
    %cst_28 = arith.constant dense<0.000000e+00> : vector<128x32xf32>
    %76 = tpu.matmul %68, %75, %cst_28 {dimension_numbers = #tpu.dot_dimension_numbers<[1], [0], [0], [1], [0, 0, 1, 1], [], []>} : vector<128x64xf32>, vector<64x32xf32>, vector<128x32xf32> -> vector<128x32xf32>
    %c1_29 = arith.constant 1 : index
    %c0_30 = arith.constant 0 : index
    %c0_31 = arith.constant 0 : index
    %77 = vector.load %arg3[%c1_29, %c0_30, %c0_31] : memref<3x64x32xf32, #tpu.memory_space<vmem>>, vector<1x64x32xf32>
    %78 = vector.shape_cast %77 : vector<1x64x32xf32> to vector<64x32xf32>
    %cst_32 = arith.constant dense<0.000000e+00> : vector<128x32xf32>
    %79 = tpu.matmul %60, %78, %cst_32 {dimension_numbers = #tpu.dot_dimension_numbers<[1], [0], [0], [1], [0, 0, 1, 1], [], []>} : vector<128x64xf32>, vector<64x32xf32>, vector<128x32xf32> -> vector<128x32xf32>
    %80 = arith.addf %76, %79 : vector<128x32xf32>
    %c2_33 = arith.constant 2 : index
    %c0_34 = arith.constant 0 : index
    %c0_35 = arith.constant 0 : index
    %81 = vector.load %arg3[%c2_33, %c0_34, %c0_35] : memref<3x64x32xf32, #tpu.memory_space<vmem>>, vector<1x64x32xf32>
    %82 = vector.shape_cast %81 : vector<1x64x32xf32> to vector<64x32xf32>
    %cst_36 = arith.constant dense<0.000000e+00> : vector<128x32xf32>
    %83 = tpu.matmul %73, %82, %cst_36 {dimension_numbers = #tpu.dot_dimension_numbers<[1], [0], [0], [1], [0, 0, 1, 1], [], []>} : vector<128x64xf32>, vector<64x32xf32>, vector<128x32xf32> -> vector<128x32xf32>
    %84 = arith.addf %80, %83 : vector<128x32xf32>
    %c0_37 = arith.constant 0 : index
    %c0_38 = arith.constant 0 : index
    %85 = vector.load %arg4[%c0_37, %c0_38] : memref<1x32xf32, #tpu.memory_space<vmem>>, vector<1x32xf32>
    %86 = vector.broadcast %85 : vector<1x32xf32> to vector<128x32xf32>
    %87 = arith.addf %84, %86 : vector<128x32xf32>
    %cst_39 = arith.constant 0.000000e+00 : f32
    %88 = vector.broadcast %cst_39 : f32 to vector<128x32xf32>
    %89 = arith.cmpf ogt, %87, %88 : vector<128x32xf32>
    %cst_40 = arith.constant 0.00999999977 : f32
    %90 = vector.broadcast %cst_40 : f32 to vector<128x32xf32>
    %91 = arith.mulf %90, %87 : vector<128x32xf32>
    %92 = arith.select %89, %87, %91 : vector<128x32xi1>, vector<128x32xf32>
    %c127_i32_41 = arith.constant 127 : i32
    %93 = tpu.dynamic_rotate %92 by %c127_i32_41 dim 0 : vector<128x32xf32>, i32 -> vector<128x32xf32>
    %94 = arith.maximumf %92, %93 : vector<128x32xf32>
    %c0_42 = arith.constant 0 : index
    %c0_43 = arith.constant 0 : index
    %95 = vector.load %arg15[%c0_42, %c0_43] : memref<128x32xf32, #tpu.memory_space<vmem>>, vector<128x32xf32>
    tpu.vector_store %arg15[%c0_42, %c0_43], %94 {strides = array<i32>} : memref<128x32xf32, #tpu.memory_space<vmem>>, vector<128x32xf32>,
    %c0_44 = arith.constant 0 : index
    %c0_45 = arith.constant 0 : index
    %96 = tpu.strided_load %arg15[%c0_44, %c0_45] {strides = array<i32: 2, 1>} : memref<128x32xf32, #tpu.memory_space<vmem>>, vector<64x32xf32>
    %97 = tpu.iota {dimensions = array<i32: 0>} : vector<64x32xi32>
    %c31_i32 = arith.constant 31 : i32
    %98 = vector.broadcast %c31_i32 : i32 to vector<64x32xi32>
    %99 = arith.andi %97, %98 : vector<64x32xi32>
    %c0_i32_46 = arith.constant 0 : i32
    %100 = vector.broadcast %c0_i32_46 : i32 to vector<64x32xi32>
    %101 = arith.cmpi eq, %99, %100 : vector<64x32xi32>
    %c1_i32_47 = arith.constant 1 : i32
    %102 = tpu.dynamic_rotate %96 by %c1_i32_47 dim 0 : vector<64x32xf32>, i32 -> vector<64x32xf32>
    %cst_48 = arith.constant 0.000000e+00 : f32
    %103 = vector.broadcast %cst_48 : f32 to vector<64x32xf32>
    %104 = arith.select %101, %103, %102 : vector<64x32xi1>, vector<64x32xf32>
    %c31_i32_49 = arith.constant 31 : i32
    %105 = vector.broadcast %c31_i32_49 : i32 to vector<64x32xi32>
    %106 = arith.cmpi eq, %99, %105 : vector<64x32xi32>
    %c63_i32_50 = arith.constant 63 : i32
    %107 = tpu.dynamic_rotate %96 by %c63_i32_50 dim 0 : vector<64x32xf32>, i32 -> vector<64x32xf32>
    %cst_51 = arith.constant 0.000000e+00 : f32
    %108 = vector.broadcast %cst_51 : f32 to vector<64x32xf32>
    %109 = arith.select %106, %108, %107 : vector<64x32xi1>, vector<64x32xf32>
    %c0_52 = arith.constant 0 : index
    %c0_53 = arith.constant 0 : index
    %c0_54 = arith.constant 0 : index
    %110 = vector.load %arg5[%c0_52, %c0_53, %c0_54] : memref<3x32x16xf32, #tpu.memory_space<vmem>>, vector<1x32x16xf32>
    %111 = vector.shape_cast %110 : vector<1x32x16xf32> to vector<32x16xf32>
    %cst_55 = arith.constant dense<0.000000e+00> : vector<64x16xf32>
    %112 = tpu.matmul %104, %111, %cst_55 {dimension_numbers = #tpu.dot_dimension_numbers<[1], [0], [0], [1], [0, 0, 1, 1], [], []>} : vector<64x32xf32>, vector<32x16xf32>, vector<64x16xf32> -> vector<64x16xf32>
    %c1_56 = arith.constant 1 : index
    %c0_57 = arith.constant 0 : index
    %c0_58 = arith.constant 0 : index
    %113 = vector.load %arg5[%c1_56, %c0_57, %c0_58] : memref<3x32x16xf32, #tpu.memory_space<vmem>>, vector<1x32x16xf32>
    %114 = vector.shape_cast %113 : vector<1x32x16xf32> to vector<32x16xf32>
    %cst_59 = arith.constant dense<0.000000e+00> : vector<64x16xf32>
    %115 = tpu.matmul %96, %114, %cst_59 {dimension_numbers = #tpu.dot_dimension_numbers<[1], [0], [0], [1], [0, 0, 1, 1], [], []>} : vector<64x32xf32>, vector<32x16xf32>, vector<64x16xf32> -> vector<64x16xf32>
    %116 = arith.addf %112, %115 : vector<64x16xf32>
    %c2_60 = arith.constant 2 : index
    %c0_61 = arith.constant 0 : index
    %c0_62 = arith.constant 0 : index
    %117 = vector.load %arg5[%c2_60, %c0_61, %c0_62] : memref<3x32x16xf32, #tpu.memory_space<vmem>>, vector<1x32x16xf32>
    %118 = vector.shape_cast %117 : vector<1x32x16xf32> to vector<32x16xf32>
    %cst_63 = arith.constant dense<0.000000e+00> : vector<64x16xf32>
    %119 = tpu.matmul %109, %118, %cst_63 {dimension_numbers = #tpu.dot_dimension_numbers<[1], [0], [0], [1], [0, 0, 1, 1], [], []>} : vector<64x32xf32>, vector<32x16xf32>, vector<64x16xf32> -> vector<64x16xf32>
    %120 = arith.addf %116, %119 : vector<64x16xf32>
    %c0_64 = arith.constant 0 : index
    %c0_65 = arith.constant 0 : index
    %121 = vector.load %arg6[%c0_64, %c0_65] : memref<1x16xf32, #tpu.memory_space<vmem>>, vector<1x16xf32>
    %122 = vector.broadcast %121 : vector<1x16xf32> to vector<64x16xf32>
    %123 = arith.addf %120, %122 : vector<64x16xf32>
    %cst_66 = arith.constant 0.000000e+00 : f32
    %124 = vector.broadcast %cst_66 : f32 to vector<64x16xf32>
    %125 = arith.cmpf ogt, %123, %124 : vector<64x16xf32>
    %cst_67 = arith.constant 0.00999999977 : f32
    %126 = vector.broadcast %cst_67 : f32 to vector<64x16xf32>
    %127 = arith.mulf %126, %123 : vector<64x16xf32>
    %128 = arith.select %125, %123, %127 : vector<64x16xi1>, vector<64x16xf32>
    %c0_68 = arith.constant 0 : index
    %c0_69 = arith.constant 0 : index
    %129 = vector.load %arg16[%c0_68, %c0_69] : memref<64x16xf32, #tpu.memory_space<vmem>>, vector<64x16xf32>
    tpu.vector_store %arg16[%c0_68, %c0_69], %128 {strides = array<i32>} : memref<64x16xf32, #tpu.memory_space<vmem>>, vector<64x16xf32>,
    %c0_70 = arith.constant 0 : index
    %c0_71 = arith.constant 0 : index
    %130 = tpu.strided_load %arg16[%c0_70, %c0_71] {strides = array<i32: 32, 1>} : memref<64x16xf32, #tpu.memory_space<vmem>>, vector<2x16xf32>
    %c0_72 = arith.constant 0 : index
    %c0_73 = arith.constant 0 : index
    %131 = vector.load %arg17[%c0_72, %c0_73] : memref<2x512xf32, #tpu.memory_space<vmem>>, vector<2x16xf32>
    tpu.vector_store %arg17[%c0_72, %c0_73], %130 {strides = array<i32>} : memref<2x512xf32, #tpu.memory_space<vmem>>, vector<2x16xf32>,
    %c1_74 = arith.constant 1 : index
    %c0_75 = arith.constant 0 : index
    %132 = tpu.strided_load %arg16[%c1_74, %c0_75] {strides = array<i32: 32, 1>} : memref<64x16xf32, #tpu.memory_space<vmem>>, vector<2x16xf32>
    %c0_76 = arith.constant 0 : index
    %c16 = arith.constant 16 : index
    %133 = vector.load %arg17[%c0_76, %c16] : memref<2x512xf32, #tpu.memory_space<vmem>>, vector<2x16xf32>
    tpu.vector_store %arg17[%c0_76, %c16], %132 {strides = array<i32>} : memref<2x512xf32, #tpu.memory_space<vmem>>, vector<2x16xf32>,
    %c2_77 = arith.constant 2 : index
    %c0_78 = arith.constant 0 : index
    %134 = tpu.strided_load %arg16[%c2_77, %c0_78] {strides = array<i32: 32, 1>} : memref<64x16xf32, #tpu.memory_space<vmem>>, vector<2x16xf32>
    %c0_79 = arith.constant 0 : index
    %c32 = arith.constant 32 : index
    %135 = vector.load %arg17[%c0_79, %c32] : memref<2x512xf32, #tpu.memory_space<vmem>>, vector<2x16xf32>
    tpu.vector_store %arg17[%c0_79, %c32], %134 {strides = array<i32>} : memref<2x512xf32, #tpu.memory_space<vmem>>, vector<2x16xf32>,
    %c3_80 = arith.constant 3 : index
    %c0_81 = arith.constant 0 : index
    %136 = tpu.strided_load %arg16[%c3_80, %c0_81] {strides = array<i32: 32, 1>} : memref<64x16xf32, #tpu.memory_space<vmem>>, vector<2x16xf32>
    %c0_82 = arith.constant 0 : index
    %c48 = arith.constant 48 : index
    %137 = vector.load %arg17[%c0_82, %c48] : memref<2x512xf32, #tpu.memory_space<vmem>>, vector<2x16xf32>
    tpu.vector_store %arg17[%c0_82, %c48], %136 {strides = array<i32>} : memref<2x512xf32, #tpu.memory_space<vmem>>, vector<2x16xf32>,
    %c4_83 = arith.constant 4 : index
    %c0_84 = arith.constant 0 : index
    %138 = tpu.strided_load %arg16[%c4_83, %c0_84] {strides = array<i32: 32, 1>} : memref<64x16xf32, #tpu.memory_space<vmem>>, vector<2x16xf32>
    %c0_85 = arith.constant 0 : index
    %c64 = arith.constant 64 : index
    %139 = vector.load %arg17[%c0_85, %c64] : memref<2x512xf32, #tpu.memory_space<vmem>>, vector<2x16xf32>
    tpu.vector_store %arg17[%c0_85, %c64], %138 {strides = array<i32>} : memref<2x512xf32, #tpu.memory_space<vmem>>, vector<2x16xf32>,
    %c5_86 = arith.constant 5 : index
    %c0_87 = arith.constant 0 : index
    %140 = tpu.strided_load %arg16[%c5_86, %c0_87] {strides = array<i32: 32, 1>} : memref<64x16xf32, #tpu.memory_space<vmem>>, vector<2x16xf32>
    %c0_88 = arith.constant 0 : index
    %c80 = arith.constant 80 : index
    %141 = vector.load %arg17[%c0_88, %c80] : memref<2x512xf32, #tpu.memory_space<vmem>>, vector<2x16xf32>
    tpu.vector_store %arg17[%c0_88, %c80], %140 {strides = array<i32>} : memref<2x512xf32, #tpu.memory_space<vmem>>, vector<2x16xf32>,
    %c6 = arith.constant 6 : index
    %c0_89 = arith.constant 0 : index
    %142 = tpu.strided_load %arg16[%c6, %c0_89] {strides = array<i32: 32, 1>} : memref<64x16xf32, #tpu.memory_space<vmem>>, vector<2x16xf32>
    %c0_90 = arith.constant 0 : index
    %c96 = arith.constant 96 : index
    %143 = vector.load %arg17[%c0_90, %c96] : memref<2x512xf32, #tpu.memory_space<vmem>>, vector<2x16xf32>
    tpu.vector_store %arg17[%c0_90, %c96], %142 {strides = array<i32>} : memref<2x512xf32, #tpu.memory_space<vmem>>, vector<2x16xf32>,
    %c7 = arith.constant 7 : index
    %c0_91 = arith.constant 0 : index
    %144 = tpu.strided_load %arg16[%c7, %c0_91] {strides = array<i32: 32, 1>} : memref<64x16xf32, #tpu.memory_space<vmem>>, vector<2x16xf32>
    %c0_92 = arith.constant 0 : index
    %c112 = arith.constant 112 : index
    %145 = vector.load %arg17[%c0_92, %c112] : memref<2x512xf32, #tpu.memory_space<vmem>>, vector<2x16xf32>
    tpu.vector_store %arg17[%c0_92, %c112], %144 {strides = array<i32>} : memref<2x512xf32, #tpu.memory_space<vmem>>, vector<2x16xf32>,
    %c8 = arith.constant 8 : index
    %c0_93 = arith.constant 0 : index
    %146 = tpu.strided_load %arg16[%c8, %c0_93] {strides = array<i32: 32, 1>} : memref<64x16xf32, #tpu.memory_space<vmem>>, vector<2x16xf32>
    %c0_94 = arith.constant 0 : index
    %c128 = arith.constant 128 : index
    %147 = vector.load %arg17[%c0_94, %c128] : memref<2x512xf32, #tpu.memory_space<vmem>>, vector<2x16xf32>
    tpu.vector_store %arg17[%c0_94, %c128], %146 {strides = array<i32>} : memref<2x512xf32, #tpu.memory_space<vmem>>, vector<2x16xf32>,
    %c9 = arith.constant 9 : index
    %c0_95 = arith.constant 0 : index
    %148 = tpu.strided_load %arg16[%c9, %c0_95] {strides = array<i32: 32, 1>} : memref<64x16xf32, #tpu.memory_space<vmem>>, vector<2x16xf32>
    %c0_96 = arith.constant 0 : index
    %c144 = arith.constant 144 : index
    %149 = vector.load %arg17[%c0_96, %c144] : memref<2x512xf32, #tpu.memory_space<vmem>>, vector<2x16xf32>
    tpu.vector_store %arg17[%c0_96, %c144], %148 {strides = array<i32>} : memref<2x512xf32, #tpu.memory_space<vmem>>, vector<2x16xf32>,
    %c10 = arith.constant 10 : index
    %c0_97 = arith.constant 0 : index
    %150 = tpu.strided_load %arg16[%c10, %c0_97] {strides = array<i32: 32, 1>} : memref<64x16xf32, #tpu.memory_space<vmem>>, vector<2x16xf32>
    %c0_98 = arith.constant 0 : index
    %c160 = arith.constant 160 : index
    %151 = vector.load %arg17[%c0_98, %c160] : memref<2x512xf32, #tpu.memory_space<vmem>>, vector<2x16xf32>
    tpu.vector_store %arg17[%c0_98, %c160], %150 {strides = array<i32>} : memref<2x512xf32, #tpu.memory_space<vmem>>, vector<2x16xf32>,
    %c11 = arith.constant 11 : index
    %c0_99 = arith.constant 0 : index
    %152 = tpu.strided_load %arg16[%c11, %c0_99] {strides = array<i32: 32, 1>} : memref<64x16xf32, #tpu.memory_space<vmem>>, vector<2x16xf32>
    %c0_100 = arith.constant 0 : index
    %c176 = arith.constant 176 : index
    %153 = vector.load %arg17[%c0_100, %c176] : memref<2x512xf32, #tpu.memory_space<vmem>>, vector<2x16xf32>
    tpu.vector_store %arg17[%c0_100, %c176], %152 {strides = array<i32>} : memref<2x512xf32, #tpu.memory_space<vmem>>, vector<2x16xf32>,
    %c12 = arith.constant 12 : index
    %c0_101 = arith.constant 0 : index
    %154 = tpu.strided_load %arg16[%c12, %c0_101] {strides = array<i32: 32, 1>} : memref<64x16xf32, #tpu.memory_space<vmem>>, vector<2x16xf32>
    %c0_102 = arith.constant 0 : index
    %c192 = arith.constant 192 : index
    %155 = vector.load %arg17[%c0_102, %c192] : memref<2x512xf32, #tpu.memory_space<vmem>>, vector<2x16xf32>
    tpu.vector_store %arg17[%c0_102, %c192], %154 {strides = array<i32>} : memref<2x512xf32, #tpu.memory_space<vmem>>, vector<2x16xf32>,
    %c13 = arith.constant 13 : index
    %c0_103 = arith.constant 0 : index
    %156 = tpu.strided_load %arg16[%c13, %c0_103] {strides = array<i32: 32, 1>} : memref<64x16xf32, #tpu.memory_space<vmem>>, vector<2x16xf32>
    %c0_104 = arith.constant 0 : index
    %c208 = arith.constant 208 : index
    %157 = vector.load %arg17[%c0_104, %c208] : memref<2x512xf32, #tpu.memory_space<vmem>>, vector<2x16xf32>
    tpu.vector_store %arg17[%c0_104, %c208], %156 {strides = array<i32>} : memref<2x512xf32, #tpu.memory_space<vmem>>, vector<2x16xf32>,
    %c14 = arith.constant 14 : index
    %c0_105 = arith.constant 0 : index
    %158 = tpu.strided_load %arg16[%c14, %c0_105] {strides = array<i32: 32, 1>} : memref<64x16xf32, #tpu.memory_space<vmem>>, vector<2x16xf32>
    %c0_106 = arith.constant 0 : index
    %c224 = arith.constant 224 : index
    %159 = vector.load %arg17[%c0_106, %c224] : memref<2x512xf32, #tpu.memory_space<vmem>>, vector<2x16xf32>
    tpu.vector_store %arg17[%c0_106, %c224], %158 {strides = array<i32>} : memref<2x512xf32, #tpu.memory_space<vmem>>, vector<2x16xf32>,
    %c15 = arith.constant 15 : index
    %c0_107 = arith.constant 0 : index
    %160 = tpu.strided_load %arg16[%c15, %c0_107] {strides = array<i32: 32, 1>} : memref<64x16xf32, #tpu.memory_space<vmem>>, vector<2x16xf32>
    %c0_108 = arith.constant 0 : index
    %c240 = arith.constant 240 : index
    %161 = vector.load %arg17[%c0_108, %c240] : memref<2x512xf32, #tpu.memory_space<vmem>>, vector<2x16xf32>
    tpu.vector_store %arg17[%c0_108, %c240], %160 {strides = array<i32>} : memref<2x512xf32, #tpu.memory_space<vmem>>, vector<2x16xf32>,
    %c16_109 = arith.constant 16 : index
    %c0_110 = arith.constant 0 : index
    %162 = tpu.strided_load %arg16[%c16_109, %c0_110] {strides = array<i32: 32, 1>} : memref<64x16xf32, #tpu.memory_space<vmem>>, vector<2x16xf32>
    %c0_111 = arith.constant 0 : index
    %c256 = arith.constant 256 : index
    %163 = vector.load %arg17[%c0_111, %c256] : memref<2x512xf32, #tpu.memory_space<vmem>>, vector<2x16xf32>
    tpu.vector_store %arg17[%c0_111, %c256], %162 {strides = array<i32>} : memref<2x512xf32, #tpu.memory_space<vmem>>, vector<2x16xf32>,
    %c17 = arith.constant 17 : index
    %c0_112 = arith.constant 0 : index
    %164 = tpu.strided_load %arg16[%c17, %c0_112] {strides = array<i32: 32, 1>} : memref<64x16xf32, #tpu.memory_space<vmem>>, vector<2x16xf32>
    %c0_113 = arith.constant 0 : index
    %c272 = arith.constant 272 : index
    %165 = vector.load %arg17[%c0_113, %c272] : memref<2x512xf32, #tpu.memory_space<vmem>>, vector<2x16xf32>
    tpu.vector_store %arg17[%c0_113, %c272], %164 {strides = array<i32>} : memref<2x512xf32, #tpu.memory_space<vmem>>, vector<2x16xf32>,
    %c18 = arith.constant 18 : index
    %c0_114 = arith.constant 0 : index
    %166 = tpu.strided_load %arg16[%c18, %c0_114] {strides = array<i32: 32, 1>} : memref<64x16xf32, #tpu.memory_space<vmem>>, vector<2x16xf32>
    %c0_115 = arith.constant 0 : index
    %c288 = arith.constant 288 : index
    %167 = vector.load %arg17[%c0_115, %c288] : memref<2x512xf32, #tpu.memory_space<vmem>>, vector<2x16xf32>
    tpu.vector_store %arg17[%c0_115, %c288], %166 {strides = array<i32>} : memref<2x512xf32, #tpu.memory_space<vmem>>, vector<2x16xf32>,
    %c19 = arith.constant 19 : index
    %c0_116 = arith.constant 0 : index
    %168 = tpu.strided_load %arg16[%c19, %c0_116] {strides = array<i32: 32, 1>} : memref<64x16xf32, #tpu.memory_space<vmem>>, vector<2x16xf32>
    %c0_117 = arith.constant 0 : index
    %c304 = arith.constant 304 : index
    %169 = vector.load %arg17[%c0_117, %c304] : memref<2x512xf32, #tpu.memory_space<vmem>>, vector<2x16xf32>
    tpu.vector_store %arg17[%c0_117, %c304], %168 {strides = array<i32>} : memref<2x512xf32, #tpu.memory_space<vmem>>, vector<2x16xf32>,
    %c20 = arith.constant 20 : index
    %c0_118 = arith.constant 0 : index
    %170 = tpu.strided_load %arg16[%c20, %c0_118] {strides = array<i32: 32, 1>} : memref<64x16xf32, #tpu.memory_space<vmem>>, vector<2x16xf32>
    %c0_119 = arith.constant 0 : index
    %c320 = arith.constant 320 : index
    %171 = vector.load %arg17[%c0_119, %c320] : memref<2x512xf32, #tpu.memory_space<vmem>>, vector<2x16xf32>
    tpu.vector_store %arg17[%c0_119, %c320], %170 {strides = array<i32>} : memref<2x512xf32, #tpu.memory_space<vmem>>, vector<2x16xf32>,
    %c21 = arith.constant 21 : index
    %c0_120 = arith.constant 0 : index
    %172 = tpu.strided_load %arg16[%c21, %c0_120] {strides = array<i32: 32, 1>} : memref<64x16xf32, #tpu.memory_space<vmem>>, vector<2x16xf32>
    %c0_121 = arith.constant 0 : index
    %c336 = arith.constant 336 : index
    %173 = vector.load %arg17[%c0_121, %c336] : memref<2x512xf32, #tpu.memory_space<vmem>>, vector<2x16xf32>
    tpu.vector_store %arg17[%c0_121, %c336], %172 {strides = array<i32>} : memref<2x512xf32, #tpu.memory_space<vmem>>, vector<2x16xf32>,
    %c22 = arith.constant 22 : index
    %c0_122 = arith.constant 0 : index
    %174 = tpu.strided_load %arg16[%c22, %c0_122] {strides = array<i32: 32, 1>} : memref<64x16xf32, #tpu.memory_space<vmem>>, vector<2x16xf32>
    %c0_123 = arith.constant 0 : index
    %c352 = arith.constant 352 : index
    %175 = vector.load %arg17[%c0_123, %c352] : memref<2x512xf32, #tpu.memory_space<vmem>>, vector<2x16xf32>
    tpu.vector_store %arg17[%c0_123, %c352], %174 {strides = array<i32>} : memref<2x512xf32, #tpu.memory_space<vmem>>, vector<2x16xf32>,
    %c23 = arith.constant 23 : index
    %c0_124 = arith.constant 0 : index
    %176 = tpu.strided_load %arg16[%c23, %c0_124] {strides = array<i32: 32, 1>} : memref<64x16xf32, #tpu.memory_space<vmem>>, vector<2x16xf32>
    %c0_125 = arith.constant 0 : index
    %c368 = arith.constant 368 : index
    %177 = vector.load %arg17[%c0_125, %c368] : memref<2x512xf32, #tpu.memory_space<vmem>>, vector<2x16xf32>
    tpu.vector_store %arg17[%c0_125, %c368], %176 {strides = array<i32>} : memref<2x512xf32, #tpu.memory_space<vmem>>, vector<2x16xf32>,
    %c24 = arith.constant 24 : index
    %c0_126 = arith.constant 0 : index
    %178 = tpu.strided_load %arg16[%c24, %c0_126] {strides = array<i32: 32, 1>} : memref<64x16xf32, #tpu.memory_space<vmem>>, vector<2x16xf32>
    %c0_127 = arith.constant 0 : index
    %c384 = arith.constant 384 : index
    %179 = vector.load %arg17[%c0_127, %c384] : memref<2x512xf32, #tpu.memory_space<vmem>>, vector<2x16xf32>
    tpu.vector_store %arg17[%c0_127, %c384], %178 {strides = array<i32>} : memref<2x512xf32, #tpu.memory_space<vmem>>, vector<2x16xf32>,
    %c25 = arith.constant 25 : index
    %c0_128 = arith.constant 0 : index
    %180 = tpu.strided_load %arg16[%c25, %c0_128] {strides = array<i32: 32, 1>} : memref<64x16xf32, #tpu.memory_space<vmem>>, vector<2x16xf32>
    %c0_129 = arith.constant 0 : index
    %c400 = arith.constant 400 : index
    %181 = vector.load %arg17[%c0_129, %c400] : memref<2x512xf32, #tpu.memory_space<vmem>>, vector<2x16xf32>
    tpu.vector_store %arg17[%c0_129, %c400], %180 {strides = array<i32>} : memref<2x512xf32, #tpu.memory_space<vmem>>, vector<2x16xf32>,
    %c26 = arith.constant 26 : index
    %c0_130 = arith.constant 0 : index
    %182 = tpu.strided_load %arg16[%c26, %c0_130] {strides = array<i32: 32, 1>} : memref<64x16xf32, #tpu.memory_space<vmem>>, vector<2x16xf32>
    %c0_131 = arith.constant 0 : index
    %c416 = arith.constant 416 : index
    %183 = vector.load %arg17[%c0_131, %c416] : memref<2x512xf32, #tpu.memory_space<vmem>>, vector<2x16xf32>
    tpu.vector_store %arg17[%c0_131, %c416], %182 {strides = array<i32>} : memref<2x512xf32, #tpu.memory_space<vmem>>, vector<2x16xf32>,
    %c27 = arith.constant 27 : index
    %c0_132 = arith.constant 0 : index
    %184 = tpu.strided_load %arg16[%c27, %c0_132] {strides = array<i32: 32, 1>} : memref<64x16xf32, #tpu.memory_space<vmem>>, vector<2x16xf32>
    %c0_133 = arith.constant 0 : index
    %c432 = arith.constant 432 : index
    %185 = vector.load %arg17[%c0_133, %c432] : memref<2x512xf32, #tpu.memory_space<vmem>>, vector<2x16xf32>
    tpu.vector_store %arg17[%c0_133, %c432], %184 {strides = array<i32>} : memref<2x512xf32, #tpu.memory_space<vmem>>, vector<2x16xf32>,
    %c28 = arith.constant 28 : index
    %c0_134 = arith.constant 0 : index
    %186 = tpu.strided_load %arg16[%c28, %c0_134] {strides = array<i32: 32, 1>} : memref<64x16xf32, #tpu.memory_space<vmem>>, vector<2x16xf32>
    %c0_135 = arith.constant 0 : index
    %c448 = arith.constant 448 : index
    %187 = vector.load %arg17[%c0_135, %c448] : memref<2x512xf32, #tpu.memory_space<vmem>>, vector<2x16xf32>
    tpu.vector_store %arg17[%c0_135, %c448], %186 {strides = array<i32>} : memref<2x512xf32, #tpu.memory_space<vmem>>, vector<2x16xf32>,
    %c29 = arith.constant 29 : index
    %c0_136 = arith.constant 0 : index
    %188 = tpu.strided_load %arg16[%c29, %c0_136] {strides = array<i32: 32, 1>} : memref<64x16xf32, #tpu.memory_space<vmem>>, vector<2x16xf32>
    %c0_137 = arith.constant 0 : index
    %c464 = arith.constant 464 : index
    %189 = vector.load %arg17[%c0_137, %c464] : memref<2x512xf32, #tpu.memory_space<vmem>>, vector<2x16xf32>
    tpu.vector_store %arg17[%c0_137, %c464], %188 {strides = array<i32>} : memref<2x512xf32, #tpu.memory_space<vmem>>, vector<2x16xf32>,
    %c30 = arith.constant 30 : index
    %c0_138 = arith.constant 0 : index
    %190 = tpu.strided_load %arg16[%c30, %c0_138] {strides = array<i32: 32, 1>} : memref<64x16xf32, #tpu.memory_space<vmem>>, vector<2x16xf32>
    %c0_139 = arith.constant 0 : index
    %c480 = arith.constant 480 : index
    %191 = vector.load %arg17[%c0_139, %c480] : memref<2x512xf32, #tpu.memory_space<vmem>>, vector<2x16xf32>
    tpu.vector_store %arg17[%c0_139, %c480], %190 {strides = array<i32>} : memref<2x512xf32, #tpu.memory_space<vmem>>, vector<2x16xf32>,
    %c31 = arith.constant 31 : index
    %c0_140 = arith.constant 0 : index
    %192 = tpu.strided_load %arg16[%c31, %c0_140] {strides = array<i32: 32, 1>} : memref<64x16xf32, #tpu.memory_space<vmem>>, vector<2x16xf32>
    %c0_141 = arith.constant 0 : index
    %c496 = arith.constant 496 : index
    %193 = vector.load %arg17[%c0_141, %c496] : memref<2x512xf32, #tpu.memory_space<vmem>>, vector<2x16xf32>
    tpu.vector_store %arg17[%c0_141, %c496], %192 {strides = array<i32>} : memref<2x512xf32, #tpu.memory_space<vmem>>, vector<2x16xf32>,
    %c0_142 = arith.constant 0 : index
    %c0_143 = arith.constant 0 : index
    %194 = vector.load %arg17[%c0_142, %c0_143] : memref<2x512xf32, #tpu.memory_space<vmem>>, vector<2x512xf32>
    %195 = arith.truncf %194 : vector<2x512xf32> to vector<2x512xbf16>
    %c0_144 = arith.constant 0 : index
    %c0_145 = arith.constant 0 : index
    %196 = vector.load %arg7[%c0_144, %c0_145] : memref<512x256xbf16, #tpu.memory_space<vmem>>, vector<512x256xbf16>
    %cst_146 = arith.constant dense<0.000000e+00> : vector<2x256xf32>
    %197 = tpu.matmul %195, %196, %cst_146 {dimension_numbers = #tpu.dot_dimension_numbers<[1], [0], [0], [1], [0, 0, 1, 1], [], []>} : vector<2x512xbf16>, vector<512x256xbf16>, vector<2x256xf32> -> vector<2x256xf32>
    %c0_147 = arith.constant 0 : index
    %c0_148 = arith.constant 0 : index
    %198 = vector.load %arg8[%c0_147, %c0_148] : memref<1x256xf32, #tpu.memory_space<vmem>>, vector<1x256xf32>
    %199 = vector.broadcast %198 : vector<1x256xf32> to vector<2x256xf32>
    %200 = arith.addf %197, %199 : vector<2x256xf32>
    %cst_149 = arith.constant 0.000000e+00 : f32
    %201 = vector.broadcast %cst_149 : f32 to vector<2x256xf32>
    %202 = arith.cmpf ogt, %200, %201 : vector<2x256xf32>
    %cst_150 = arith.constant 0.00999999977 : f32
    %203 = vector.broadcast %cst_150 : f32 to vector<2x256xf32>
    %204 = arith.mulf %203, %200 : vector<2x256xf32>
    %205 = arith.select %202, %200, %204 : vector<2x256xi1>, vector<2x256xf32>
    %206 = arith.truncf %205 : vector<2x256xf32> to vector<2x256xbf16>
    %c0_151 = arith.constant 0 : index
    %c0_152 = arith.constant 0 : index
    %207 = vector.load %arg9[%c0_151, %c0_152] : memref<256x128xbf16, #tpu.memory_space<vmem>>, vector<256x128xbf16>
    %cst_153 = arith.constant dense<0.000000e+00> : vector<2x128xf32>
    %208 = tpu.matmul %206, %207, %cst_153 {dimension_numbers = #tpu.dot_dimension_numbers<[1], [0], [0], [1], [0, 0, 1, 1], [], []>} : vector<2x256xbf16>, vector<256x128xbf16>, vector<2x128xf32> -> vector<2x128xf32>
    %c0_154 = arith.constant 0 : index
    %c0_155 = arith.constant 0 : index
    %209 = vector.load %arg10[%c0_154, %c0_155] : memref<1x128xf32, #tpu.memory_space<vmem>>, vector<1x128xf32>
    %210 = vector.broadcast %209 : vector<1x128xf32> to vector<2x128xf32>
    %211 = arith.addf %208, %210 : vector<2x128xf32>
    %cst_156 = arith.constant 0.000000e+00 : f32
    %212 = vector.broadcast %cst_156 : f32 to vector<2x128xf32>
    %213 = arith.cmpf ogt, %211, %212 : vector<2x128xf32>
    %cst_157 = arith.constant 0.00999999977 : f32
    %214 = vector.broadcast %cst_157 : f32 to vector<2x128xf32>
    %215 = arith.mulf %214, %211 : vector<2x128xf32>
    %216 = arith.select %213, %211, %215 : vector<2x128xi1>, vector<2x128xf32>
    %217 = arith.truncf %216 : vector<2x128xf32> to vector<2x128xbf16>
    %c0_158 = arith.constant 0 : index
    %c0_159 = arith.constant 0 : index
    %218 = vector.load %arg11[%c0_158, %c0_159] : memref<128x10xbf16, #tpu.memory_space<vmem>>, vector<128x10xbf16>
    %cst_160 = arith.constant dense<0.000000e+00> : vector<2x10xf32>
    %219 = tpu.matmul %217, %218, %cst_160 {dimension_numbers = #tpu.dot_dimension_numbers<[1], [0], [0], [1], [0, 0, 1, 1], [], []>} : vector<2x128xbf16>, vector<128x10xbf16>, vector<2x10xf32> -> vector<2x10xf32>
    %c0_161 = arith.constant 0 : index
    %c0_162 = arith.constant 0 : index
    %220 = vector.load %arg12[%c0_161, %c0_162] : memref<1x10xf32, #tpu.memory_space<vmem>>, vector<1x10xf32>
    %221 = vector.broadcast %220 : vector<1x10xf32> to vector<2x10xf32>
    %222 = arith.addf %219, %221 : vector<2x10xf32>
    %c0_163 = arith.constant 0 : index
    %c0_164 = arith.constant 0 : index
    %223 = vector.load %arg13[%c0_163, %c0_164] : memref<2x10xf32, #tpu.memory_space<vmem>>, vector<2x10xf32>
    tpu.vector_store %arg13[%c0_163, %c0_164], %222 {strides = array<i32>} : memref<2x10xf32, #tpu.memory_space<vmem>>, vector<2x10xf32>,
    return
  }
}

</mosaic_0001>

<llo_original>
// kernel: tpu_custom_call.1
$region0: #{tpu_custom_call.1}
  #allocation0 [shape = 'u32[]', space=smem, size = 0x4, offset = 0x4, fixed_abs, tag = 'smem constant byte address 0x4 - core index']
  #allocation1 [shape = 'u32[144,128]{1,0:T(1,128)}', space=vmem, size = 0x12000, scoped, tag = 'internal scratch']
  #allocation2 [shape = 'f32[256,64]{1,0:T(8,128)}', space=vmem, size = 0x20000, scoped, tag = 'scratch operand']
  #allocation3 [shape = 'f32[128,32]{1,0:T(8,128)}', space=vmem, size = 0x10000, scoped, tag = 'scratch operand']
  #allocation4 [shape = 'f32[64,16]{1,0:T(8,128)}', space=vmem, size = 0x8000, scoped, tag = 'scratch operand']
  #allocation5 [shape = 'f32[2,512]{1,0:T(2,128)}', space=vmem, size = 0x1000, scoped, tag = 'scratch operand']
  %s0 = inlined_call_operand.vmem [shape: f32[256,2], index: 0, kind: input, shape index: {}]
  %s1 = inlined_call_operand.vmem [shape: f32[6,64], index: 1, kind: input, shape index: {}]
  %s2 = inlined_call_operand.vmem [shape: f32[1,64], index: 2, kind: input, shape index: {}]
  %s3 = inlined_call_operand.vmem [shape: f32[3,64,32], index: 3, kind: input, shape index: {}]
  %s4 = inlined_call_operand.vmem [shape: f32[1,32], index: 4, kind: input, shape index: {}]
  %s5 = inlined_call_operand.vmem [shape: f32[3,32,16], index: 5, kind: input, shape index: {}]
  %s6 = inlined_call_operand.vmem [shape: f32[1,16], index: 6, kind: input, shape index: {}]
  %s7 = inlined_call_operand.vmem [shape: bf16[512,256], index: 7, kind: input, shape index: {}]
  %s8 = inlined_call_operand.vmem [shape: f32[1,256], index: 8, kind: input, shape index: {}]
  %s9 = inlined_call_operand.vmem [shape: bf16[256,128], index: 9, kind: input, shape index: {}]
  %s10 = inlined_call_operand.vmem [shape: f32[1,128], index: 10, kind: input, shape index: {}]
  %s11 = inlined_call_operand.vmem [shape: bf16[128,10], index: 11, kind: input, shape index: {}]
  %s12 = inlined_call_operand.vmem [shape: f32[1,10], index: 12, kind: input, shape index: {}]
  %s13 = inlined_call_operand.hbm [shape: f32[2,10], index: 13, kind: output, shape index: {}]
  %s14 = sld [smem:[#allocation0]]
  $region62: #{tpu_custom_call.1} parent=0
    _
  %s16 = ssub.s32 1, %s14
  %s17 = scalar_select 0, %s16, %s14
  $region1: #{tpu_custom_call.1} parent=0
    #allocation6 [shape = 'u8[1024]{0}', space=vmem, size = 0x400, scoped, tag = 'output window, operand 0, single buffered']
    #allocation7 [shape = 's32[1]{0}', space=sflag, size = 0x4, scoped, tag = 'scoped memory for tpu_custom_call.1']
    %18 = vsyncpa [#allocation7], 0
    // Predicated region
    $region2: #{tpu_custom_call.1} parent=1 // pred_check
      _
    $region3: #{tpu_custom_call.1} parent=1 // pred_check_branch
      %20 = sbr.rel (0) target = $region5
    $region4: #{tpu_custom_call.1} parent=1 // pred_region
      _
    $region5: #{tpu_custom_call.1} parent=1 // pred_fallthru
      _
    // Predicated region
    $region6: #{tpu_custom_call.1} parent=1 // pred_check
      _
    $region7: #{tpu_custom_call.1} parent=1 // pred_check_branch
      %22 = sbr.rel (0) target = $region9
    $region8: #{tpu_custom_call.1} parent=1 // pred_region
      _
    $region9: #{tpu_custom_call.1} parent=1 // pred_fallthru
      _
    // Predicated region
    $region10: #{tpu_custom_call.1} parent=1 // pred_check
      _
    $region11: #{tpu_custom_call.1} parent=1 // pred_check_branch
      %24 = sbr.rel (0) target = $region13
    $region12: #{tpu_custom_call.1} parent=1 // pred_region
      _
    $region13: #{tpu_custom_call.1} parent=1 // pred_fallthru
      _
    // Predicated region
    $region14: #{tpu_custom_call.1} parent=1 // pred_check
      _
    $region15: #{tpu_custom_call.1} parent=1 // pred_check_branch
      %26 = sbr.rel (0) target = $region17
    $region16: #{tpu_custom_call.1} parent=1 // pred_region
      _
    $region17: #{tpu_custom_call.1} parent=1 // pred_fallthru
      _
    // Predicated region
    $region18: #{tpu_custom_call.1} parent=1 // pred_check
      _
    $region19: #{tpu_custom_call.1} parent=1 // pred_check_branch
      %28 = sbr.rel (0) target = $region21
    $region20: #{tpu_custom_call.1} parent=1 // pred_region
      _
    $region21: #{tpu_custom_call.1} parent=1 // pred_fallthru
      _
    // Predicated region
    $region22: #{tpu_custom_call.1} parent=1 // pred_check
      _
    $region23: #{tpu_custom_call.1} parent=1 // pred_check_branch
      %30 = sbr.rel (0) target = $region25
    $region24: #{tpu_custom_call.1} parent=1 // pred_region
      _
    $region25: #{tpu_custom_call.1} parent=1 // pred_fallthru
      _
    // Predicated region
    $region26: #{tpu_custom_call.1} parent=1 // pred_check
      _
    $region27: #{tpu_custom_call.1} parent=1 // pred_check_branch
      %32 = sbr.rel (0) target = $region29
    $region28: #{tpu_custom_call.1} parent=1 // pred_region
      _
    $region29: #{tpu_custom_call.1} parent=1 // pred_fallthru
      _
    // Predicated region
    $region30: #{tpu_custom_call.1} parent=1 // pred_check
      _
    $region31: #{tpu_custom_call.1} parent=1 // pred_check_branch
      %34 = sbr.rel (0) target = $region33
    $region32: #{tpu_custom_call.1} parent=1 // pred_region
      _
    $region33: #{tpu_custom_call.1} parent=1 // pred_fallthru
      _
    // Predicated region
    $region34: #{tpu_custom_call.1} parent=1 // pred_check
      _
    $region35: #{tpu_custom_call.1} parent=1 // pred_check_branch
      %36 = sbr.rel (0) target = $region37
    $region36: #{tpu_custom_call.1} parent=1 // pred_region
      _
    $region37: #{tpu_custom_call.1} parent=1 // pred_fallthru
      _
    // Predicated region
    $region38: #{tpu_custom_call.1} parent=1 // pred_check
      _
    $region39: #{tpu_custom_call.1} parent=1 // pred_check_branch
      %38 = sbr.rel (0) target = $region41
    $region40: #{tpu_custom_call.1} parent=1 // pred_region
      _
    $region41: #{tpu_custom_call.1} parent=1 // pred_fallthru
      _
    // Predicated region
    $region42: #{tpu_custom_call.1} parent=1 // pred_check
      _
    $region43: #{tpu_custom_call.1} parent=1 // pred_check_branch
      %40 = sbr.rel (0) target = $region45
    $region44: #{tpu_custom_call.1} parent=1 // pred_region
      _
    $region45: #{tpu_custom_call.1} parent=1 // pred_fallthru
      _
    // Predicated region
    $region46: #{tpu_custom_call.1} parent=1 // pred_check
      _
    $region47: #{tpu_custom_call.1} parent=1 // pred_check_branch
      %42 = sbr.rel (0) target = $region49
    $region48: #{tpu_custom_call.1} parent=1 // pred_region
      _
    $region49: #{tpu_custom_call.1} parent=1 // pred_fallthru
      _
    // Predicated region
    $region50: #{tpu_custom_call.1} parent=1 // pred_check
      _
    $region51: #{tpu_custom_call.1} parent=1 // pred_check_branch
      %44 = sbr.rel (0) target = $region53
    $region52: #{tpu_custom_call.1} parent=1 // pred_region
      _
    $region53: #{tpu_custom_call.1} parent=1 // pred_fallthru
      _
    %v46 = vld [vmem:[%s0] sm:$0xff]
    %v47 = vld [vmem:[%s0 + $0x8] sm:$0xff]
    %v48 = vld [vmem:[%s0 + $0x10] sm:$0xff]
    %v49 = vld [vmem:[%s0 + $0x18] sm:$0xff]
    %v50 = vld [vmem:[%s0 + $0x20] sm:$0xff]
    %v51 = vld [vmem:[%s0 + $0x28] sm:$0xff]
    %v52 = vld [vmem:[%s0 + $0x30] sm:$0xff]
    %v53 = vld [vmem:[%s0 + $0x38] sm:$0xff]
    %v54 = vld [vmem:[%s0 + $0x40] sm:$0xff]
    %v55 = vld [vmem:[%s0 + $0x48] sm:$0xff]
    %v56 = vld [vmem:[%s0 + $0x50] sm:$0xff]
    %v57 = vld [vmem:[%s0 + $0x58] sm:$0xff]
    %v58 = vld [vmem:[%s0 + $0x60] sm:$0xff]
    %v59 = vld [vmem:[%s0 + $0x68] sm:$0xff]
    %v60 = vld [vmem:[%s0 + $0x70] sm:$0xff]
    %v61 = vld [vmem:[%s0 + $0x78] sm:$0xff]
    %v62 = vld [vmem:[%s0 + $0x80] sm:$0xff]
    %v63 = vld [vmem:[%s0 + $0x88] sm:$0xff]
    %v64 = vld [vmem:[%s0 + $0x90] sm:$0xff]
    %v65 = vld [vmem:[%s0 + $0x98] sm:$0xff]
    %v66 = vld [vmem:[%s0 + $0xa0] sm:$0xff]
    %v67 = vld [vmem:[%s0 + $0xa8] sm:$0xff]
    %v68 = vld [vmem:[%s0 + $0xb0] sm:$0xff]
    %v69 = vld [vmem:[%s0 + $0xb8] sm:$0xff]
    %v70 = vld [vmem:[%s0 + $0xc0] sm:$0xff]
    %v71 = vld [vmem:[%s0 + $0xc8] sm:$0xff]
    %v72 = vld [vmem:[%s0 + $0xd0] sm:$0xff]
    %v73 = vld [vmem:[%s0 + $0xd8] sm:$0xff]
    %v74 = vld [vmem:[%s0 + $0xe0] sm:$0xff]
    %v75 = vld [vmem:[%s0 + $0xe8] sm:$0xff]
    %v76 = vld [vmem:[%s0 + $0xf0] sm:$0xff]
    %v77 = vld [vmem:[%s0 + $0xf8] sm:$0xff]
    %v78 = vlaneseq
    %v79 = vshrl.u32 %v78, 7
    %v80 = vadd.s32 %v79, 8
    %v81 = vadd.s32 %v79, 16
    %v82 = vadd.s32 %v79, 24
    %v83 = vadd.s32 %v79, 32
    %v84 = vadd.s32 %v79, 40
    %v85 = vadd.s32 %v79, 48
    %v86 = vadd.s32 %v79, 56
    %v87 = vadd.s32 %v79, 64
    %v88 = vadd.s32 %v79, 72
    %v89 = vadd.s32 %v79, 80
    %v90 = vadd.s32 %v79, 88
    %v91 = vadd.s32 %v79, 96
    %v92 = vadd.s32 %v79, 104
    %v93 = vadd.s32 %v79, 112
    %v94 = vadd.s32 %v79, 120
    %v95 = vadd.s32 %v79, 128
    %v96 = vadd.s32 %v79, 136
    %v97 = vadd.s32 %v79, 144
    %v98 = vadd.s32 %v79, 152
    %v99 = vadd.s32 %v79, 160
    %v100 = vadd.s32 %v79, 168
    %v101 = vadd.s32 %v79, 176
    %v102 = vadd.s32 %v79, 184
    %v103 = vadd.s32 %v79, 192
    %v104 = vadd.s32 %v79, 200
    %v105 = vadd.s32 %v79, 208
    %v106 = vadd.s32 %v79, 216
    %v107 = vadd.s32 %v79, 224
    %v108 = vadd.s32 %v79, 232
    %v109 = vadd.s32 %v79, 240
    %v110 = vadd.s32 %v79, 248
    %v111 = vand.u32 %v79, 127
    %v112 = vand.u32 %v80, 127
    %v113 = vand.u32 %v81, 127
    %v114 = vand.u32 %v82, 127
    %v115 = vand.u32 %v83, 127
    %v116 = vand.u32 %v84, 127
    %v117 = vand.u32 %v85, 127
    %v118 = vand.u32 %v86, 127
    %v119 = vand.u32 %v87, 127
    %v120 = vand.u32 %v88, 127
    %v121 = vand.u32 %v89, 127
    %v122 = vand.u32 %v90, 127
    %v123 = vand.u32 %v91, 127
    %v124 = vand.u32 %v92, 127
    %v125 = vand.u32 %v93, 127
    %v126 = vand.u32 %v94, 127
    %v127 = vand.u32 %v95, 127
    %v128 = vand.u32 %v96, 127
    %v129 = vand.u32 %v97, 127
    %v130 = vand.u32 %v98, 127
    %v131 = vand.u32 %v99, 127
    %v132 = vand.u32 %v100, 127
    %v133 = vand.u32 %v101, 127
    %v134 = vand.u32 %v102, 127
    %v135 = vand.u32 %v103, 127
    %v136 = vand.u32 %v104, 127
    %v137 = vand.u32 %v105, 127
    %v138 = vand.u32 %v106, 127
    %v139 = vand.u32 %v107, 127
    %v140 = vand.u32 %v108, 127
    %v141 = vand.u32 %v109, 127
    %v142 = vand.u32 %v110, 127
    %vm143 = vcmp.eq.s32.totalorder %v111, 0
    %vm144 = vcmp.eq.s32.totalorder %v112, 0
    %vm145 = vcmp.eq.s32.totalorder %v113, 0
    %vm146 = vcmp.eq.s32.totalorder %v114, 0
    %vm147 = vcmp.eq.s32.totalorder %v115, 0
    %vm148 = vcmp.eq.s32.totalorder %v116, 0
    %vm149 = vcmp.eq.s32.totalorder %v117, 0
    %vm150 = vcmp.eq.s32.totalorder %v118, 0
    %vm151 = vcmp.eq.s32.totalorder %v119, 0
    %vm152 = vcmp.eq.s32.totalorder %v120, 0
    %vm153 = vcmp.eq.s32.totalorder %v121, 0
    %vm154 = vcmp.eq.s32.totalorder %v122, 0
    %vm155 = vcmp.eq.s32.totalorder %v123, 0
    %vm156 = vcmp.eq.s32.totalorder %v124, 0
    %vm157 = vcmp.eq.s32.totalorder %v125, 0
    %vm158 = vcmp.eq.s32.totalorder %v126, 0
    %vm159 = vcmp.eq.s32.totalorder %v127, 0
    %vm160 = vcmp.eq.s32.totalorder %v128, 0
    %vm161 = vcmp.eq.s32.totalorder %v129, 0
    %vm162 = vcmp.eq.s32.totalorder %v130, 0
    %vm163 = vcmp.eq.s32.totalorder %v131, 0
    %vm164 = vcmp.eq.s32.totalorder %v132, 0
    %vm165 = vcmp.eq.s32.totalorder %v133, 0
    %vm166 = vcmp.eq.s32.totalorder %v134, 0
    %vm167 = vcmp.eq.s32.totalorder %v135, 0
    %vm168 = vcmp.eq.s32.totalorder %v136, 0
    %vm169 = vcmp.eq.s32.totalorder %v137, 0
    %vm170 = vcmp.eq.s32.totalorder %v138, 0
    %vm171 = vcmp.eq.s32.totalorder %v139, 0
    %vm172 = vcmp.eq.s32.totalorder %v140, 0
    %vm173 = vcmp.eq.s32.totalorder %v141, 0
    %vm174 = vcmp.eq.s32.totalorder %v142, 0
    %v175 = vrot.slane %v46, 7
    %v176 = vrot.slane %v47, 7
    %v177 = vrot.slane %v48, 7
    %v178 = vrot.slane %v49, 7
    %v179 = vrot.slane %v50, 7
    %v180 = vrot.slane %v51, 7
    %v181 = vrot.slane %v52, 7
    %v182 = vrot.slane %v53, 7
    %v183 = vrot.slane %v54, 7
    %v184 = vrot.slane %v55, 7
    %v185 = vrot.slane %v56, 7
    %v186 = vrot.slane %v57, 7
    %v187 = vrot.slane %v58, 7
    %v188 = vrot.slane %v59, 7
    %v189 = vrot.slane %v60, 7
    %v190 = vrot.slane %v61, 7
    %v191 = vrot.slane %v62, 7
    %v192 = vrot.slane %v63, 7
    %v193 = vrot.slane %v64, 7
    %v194 = vrot.slane %v65, 7
    %v195 = vrot.slane %v66, 7
    %v196 = vrot.slane %v67, 7
    %v197 = vrot.slane %v68, 7
    %v198 = vrot.slane %v69, 7
    %v199 = vrot.slane %v70, 7
    %v200 = vrot.slane %v71, 7
    %v201 = vrot.slane %v72, 7
    %v202 = vrot.slane %v73, 7
    %v203 = vrot.slane %v74, 7
    %v204 = vrot.slane %v75, 7
    %v205 = vrot.slane %v76, 7
    %v206 = vrot.slane %v77, 7
    %vm207 = vcmp.lt.s32.totalorder %v79, 1
    %v208 = vsel %vm207, %v205, %v206
    %v209 = vsel %vm207, %v204, %v205
    %v210 = vsel %vm207, %v203, %v204
    %v211 = vsel %vm207, %v202, %v203
    %v212 = vsel %vm207, %v201, %v202
    %v213 = vsel %vm207, %v200, %v201
    %v214 = vsel %vm207, %v199, %v200
    %v215 = vsel %vm207, %v198, %v199
    %v216 = vsel %vm207, %v197, %v198
    %v217 = vsel %vm207, %v196, %v197
    %v218 = vsel %vm207, %v195, %v196
    %v219 = vsel %vm207, %v194, %v195
    %v220 = vsel %vm207, %v193, %v194
    %v221 = vsel %vm207, %v192, %v193
    %v222 = vsel %vm207, %v191, %v192
    %v223 = vsel %vm207, %v190, %v191
    %v224 = vsel %vm207, %v189, %v190
    %v225 = vsel %vm207, %v188, %v189
    %v226 = vsel %vm207, %v187, %v188
    %v227 = vsel %vm207, %v186, %v187
    %v228 = vsel %vm207, %v185, %v186
    %v229 = vsel %vm207, %v184, %v185
    %v230 = vsel %vm207, %v183, %v184
    %v231 = vsel %vm207, %v182, %v183
    %v232 = vsel %vm207, %v181, %v182
    %v233 = vsel %vm207, %v180, %v181
    %v234 = vsel %vm207, %v179, %v180
    %v235 = vsel %vm207, %v178, %v179
    %v236 = vsel %vm207, %v177, %v178
    %v237 = vsel %vm207, %v176, %v177
    %v238 = vsel %vm207, %v175, %v176
    %v239 = vsel %vm207, %v206, %v175
    %v240 = vsel %vm143, 0.0, %v239
    %v241 = vsel %vm144, 0.0, %v238
    %v242 = vsel %vm145, 0.0, %v237
    %v243 = vsel %vm146, 0.0, %v236
    %v244 = vsel %vm147, 0.0, %v235
    %v245 = vsel %vm148, 0.0, %v234
    %v246 = vsel %vm149, 0.0, %v233
    %v247 = vsel %vm150, 0.0, %v232
    %v248 = vsel %vm151, 0.0, %v231
    %v249 = vsel %vm152, 0.0, %v230
    %v250 = vsel %vm153, 0.0, %v229
    %v251 = vsel %vm154, 0.0, %v228
    %v252 = vsel %vm155, 0.0, %v227
    %v253 = vsel %vm156, 0.0, %v226
    %v254 = vsel %vm157, 0.0, %v225
    %v255 = vsel %vm158, 0.0, %v224
    %v256 = vsel %vm159, 0.0, %v223
    %v257 = vsel %vm160, 0.0, %v222
    %v258 = vsel %vm161, 0.0, %v221
    %v259 = vsel %vm162, 0.0, %v220
    %v260 = vsel %vm163, 0.0, %v219
    %v261 = vsel %vm164, 0.0, %v218
    %v262 = vsel %vm165, 0.0, %v217
    %v263 = vsel %vm166, 0.0, %v216
    %v264 = vsel %vm167, 0.0, %v215
    %v265 = vsel %vm168, 0.0, %v214
    %v266 = vsel %vm169, 0.0, %v213
    %v267 = vsel %vm170, 0.0, %v212
    %v268 = vsel %vm171, 0.0, %v211
    %v269 = vsel %vm172, 0.0, %v210
    %v270 = vsel %vm173, 0.0, %v209
    %v271 = vsel %vm174, 0.0, %v208
    %vm272 = vcmp.eq.s32.totalorder %v111, 127
    %vm273 = vcmp.eq.s32.totalorder %v112, 127
    %vm274 = vcmp.eq.s32.totalorder %v113, 127
    %vm275 = vcmp.eq.s32.totalorder %v114, 127
    %vm276 = vcmp.eq.s32.totalorder %v115, 127
    %vm277 = vcmp.eq.s32.totalorder %v116, 127
    %vm278 = vcmp.eq.s32.totalorder %v117, 127
    %vm279 = vcmp.eq.s32.totalorder %v118, 127
    %vm280 = vcmp.eq.s32.totalorder %v119, 127
    %vm281 = vcmp.eq.s32.totalorder %v120, 127
    %vm282 = vcmp.eq.s32.totalorder %v121, 127
    %vm283 = vcmp.eq.s32.totalorder %v122, 127
    %vm284 = vcmp.eq.s32.totalorder %v123, 127
    %vm285 = vcmp.eq.s32.totalorder %v124, 127
    %vm286 = vcmp.eq.s32.totalorder %v125, 127
    %vm287 = vcmp.eq.s32.totalorder %v126, 127
    %vm288 = vcmp.eq.s32.totalorder %v127, 127
    %vm289 = vcmp.eq.s32.totalorder %v128, 127
    %vm290 = vcmp.eq.s32.totalorder %v129, 127
    %vm291 = vcmp.eq.s32.totalorder %v130, 127
    %vm292 = vcmp.eq.s32.totalorder %v131, 127
    %vm293 = vcmp.eq.s32.totalorder %v132, 127
    %vm294 = vcmp.eq.s32.totalorder %v133, 127
    %vm295 = vcmp.eq.s32.totalorder %v134, 127
    %vm296 = vcmp.eq.s32.totalorder %v135, 127
    %vm297 = vcmp.eq.s32.totalorder %v136, 127
    %vm298 = vcmp.eq.s32.totalorder %v137, 127
    %vm299 = vcmp.eq.s32.totalorder %v138, 127
    %vm300 = vcmp.eq.s32.totalorder %v139, 127
    %vm301 = vcmp.eq.s32.totalorder %v140, 127
    %vm302 = vcmp.eq.s32.totalorder %v141, 127
    %vm303 = vcmp.eq.s32.totalorder %v142, 127
    %v304 = vrot.slane %v46, 1
    %v305 = vrot.slane %v47, 1
    %v306 = vrot.slane %v48, 1
    %v307 = vrot.slane %v49, 1
    %v308 = vrot.slane %v50, 1
    %v309 = vrot.slane %v51, 1
    %v310 = vrot.slane %v52, 1
    %v311 = vrot.slane %v53, 1
    %v312 = vrot.slane %v54, 1
    %v313 = vrot.slane %v55, 1
    %v314 = vrot.slane %v56, 1
    %v315 = vrot.slane %v57, 1
    %v316 = vrot.slane %v58, 1
    %v317 = vrot.slane %v59, 1
    %v318 = vrot.slane %v60, 1
    %v319 = vrot.slane %v61, 1
    %v320 = vrot.slane %v62, 1
    %v321 = vrot.slane %v63, 1
    %v322 = vrot.slane %v64, 1
    %v323 = vrot.slane %v65, 1
    %v324 = vrot.slane %v66, 1
    %v325 = vrot.slane %v67, 1
    %v326 = vrot.slane %v68, 1
    %v327 = vrot.slane %v69, 1
    %v328 = vrot.slane %v70, 1
    %v329 = vrot.slane %v71, 1
    %v330 = vrot.slane %v72, 1
    %v331 = vrot.slane %v73, 1
    %v332 = vrot.slane %v74, 1
    %v333 = vrot.slane %v75, 1
    %v334 = vrot.slane %v76, 1
    %v335 = vrot.slane %v77, 1
    %vm336 = vcmp.lt.s32.totalorder %v79, 7
    %v337 = vsel %vm336, %v334, %v335
    %v338 = vsel %vm336, %v333, %v334
    %v339 = vsel %vm336, %v332, %v333
    %v340 = vsel %vm336, %v331, %v332
    %v341 = vsel %vm336, %v330, %v331
    %v342 = vsel %vm336, %v329, %v330
    %v343 = vsel %vm336, %v328, %v329
    %v344 = vsel %vm336, %v327, %v328
    %v345 = vsel %vm336, %v326, %v327
    %v346 = vsel %vm336, %v325, %v326
    %v347 = vsel %vm336, %v324, %v325
    %v348 = vsel %vm336, %v323, %v324
    %v349 = vsel %vm336, %v322, %v323
    %v350 = vsel %vm336, %v321, %v322
    %v351 = vsel %vm336, %v320, %v321
    %v352 = vsel %vm336, %v319, %v320
    %v353 = vsel %vm336, %v318, %v319
    %v354 = vsel %vm336, %v317, %v318
    %v355 = vsel %vm336, %v316, %v317
    %v356 = vsel %vm336, %v315, %v316
    %v357 = vsel %vm336, %v314, %v315
    %v358 = vsel %vm336, %v313, %v314
    %v359 = vsel %vm336, %v312, %v313
    %v360 = vsel %vm336, %v311, %v312
    %v361 = vsel %vm336, %v310, %v311
    %v362 = vsel %vm336, %v309, %v310
    %v363 = vsel %vm336, %v308, %v309
    %v364 = vsel %vm336, %v307, %v308
    %v365 = vsel %vm336, %v306, %v307
    %v366 = vsel %vm336, %v305, %v306
    %v367 = vsel %vm336, %v304, %v305
    %v368 = vsel %vm336, %v335, %v304
    %v369 = vsel %vm272, 0.0, %v367
    %v370 = vsel %vm273, 0.0, %v366
    %v371 = vsel %vm274, 0.0, %v365
    %v372 = vsel %vm275, 0.0, %v364
    %v373 = vsel %vm276, 0.0, %v363
    %v374 = vsel %vm277, 0.0, %v362
    %v375 = vsel %vm278, 0.0, %v361
    %v376 = vsel %vm279, 0.0, %v360
    %v377 = vsel %vm280, 0.0, %v359
    %v378 = vsel %vm281, 0.0, %v358
    %v379 = vsel %vm282, 0.0, %v357
    %v380 = vsel %vm283, 0.0, %v356
    %v381 = vsel %vm284, 0.0, %v355
    %v382 = vsel %vm285, 0.0, %v354
    %v383 = vsel %vm286, 0.0, %v353
    %v384 = vsel %vm287, 0.0, %v352
    %v385 = vsel %vm288, 0.0, %v351
    %v386 = vsel %vm289, 0.0, %v350
    %v387 = vsel %vm290, 0.0, %v349
    %v388 = vsel %vm291, 0.0, %v348
    %v389 = vsel %vm292, 0.0, %v347
    %v390 = vsel %vm293, 0.0, %v346
    %v391 = vsel %vm294, 0.0, %v345
    %v392 = vsel %vm295, 0.0, %v344
    %v393 = vsel %vm296, 0.0, %v343
    %v394 = vsel %vm297, 0.0, %v342
    %v395 = vsel %vm298, 0.0, %v341
    %v396 = vsel %vm299, 0.0, %v340
    %v397 = vsel %vm300, 0.0, %v339
    %v398 = vsel %vm301, 0.0, %v338
    %v399 = vsel %vm302, 0.0, %v337
    %v400 = vsel %vm303, 0.0, %v368
    %v401 = vld [vmem:[%s1] sm:$0x1]
    %403 = vset.pattern.permute.xlu0 0
    %404 = vperm.xlu0 %403, %v240
    %v405 = vpop.permute.xlu0 %404
    %408 = vset.pattern.permute.xlu0 0
    %409 = vperm.xlu0 %408, %v241
    %v410 = vpop.permute.xlu0 %409
    %413 = vset.pattern.permute.xlu0 0
    %414 = vperm.xlu0 %413, %v242
    %v415 = vpop.permute.xlu0 %414
    %418 = vset.pattern.permute.xlu0 0
    %419 = vperm.xlu0 %418, %v243
    %v420 = vpop.permute.xlu0 %419
    %423 = vset.pattern.permute.xlu0 0
    %424 = vperm.xlu0 %423, %v244
    %v425 = vpop.permute.xlu0 %424
    %428 = vset.pattern.permute.xlu0 0
    %429 = vperm.xlu0 %428, %v245
    %v430 = vpop.permute.xlu0 %429
    %433 = vset.pattern.permute.xlu0 0
    %434 = vperm.xlu0 %433, %v246
    %v435 = vpop.permute.xlu0 %434
    %438 = vset.pattern.permute.xlu0 0
    %439 = vperm.xlu0 %438, %v247
    %v440 = vpop.permute.xlu0 %439
    %443 = vset.pattern.permute.xlu0 0
    %444 = vperm.xlu0 %443, %v248
    %v445 = vpop.permute.xlu0 %444
    %448 = vset.pattern.permute.xlu0 0
    %449 = vperm.xlu0 %448, %v249
    %v450 = vpop.permute.xlu0 %449
    %453 = vset.pattern.permute.xlu0 0
    %454 = vperm.xlu0 %453, %v250
    %v455 = vpop.permute.xlu0 %454
    %458 = vset.pattern.permute.xlu0 0
    %459 = vperm.xlu0 %458, %v251
    %v460 = vpop.permute.xlu0 %459
    %463 = vset.pattern.permute.xlu0 0
    %464 = vperm.xlu0 %463, %v252
    %v465 = vpop.permute.xlu0 %464
    %468 = vset.pattern.permute.xlu0 0
    %469 = vperm.xlu0 %468, %v253
    %v470 = vpop.permute.xlu0 %469
    %473 = vset.pattern.permute.xlu0 0
    %474 = vperm.xlu0 %473, %v254
    %v475 = vpop.permute.xlu0 %474
    %478 = vset.pattern.permute.xlu0 0
    %479 = vperm.xlu0 %478, %v255
    %v480 = vpop.permute.xlu0 %479
    %483 = vset.pattern.permute.xlu0 0
    %484 = vperm.xlu0 %483, %v256
    %v485 = vpop.permute.xlu0 %484
    %488 = vset.pattern.permute.xlu0 0
    %489 = vperm.xlu0 %488, %v257
    %v490 = vpop.permute.xlu0 %489
    %493 = vset.pattern.permute.xlu0 0
    %494 = vperm.xlu0 %493, %v258
    %v495 = vpop.permute.xlu0 %494
    %498 = vset.pattern.permute.xlu0 0
    %499 = vperm.xlu0 %498, %v259
    %v500 = vpop.permute.xlu0 %499
    %503 = vset.pattern.permute.xlu0 0
    %504 = vperm.xlu0 %503, %v260
    %v505 = vpop.permute.xlu0 %504
    %508 = vset.pattern.permute.xlu0 0
    %509 = vperm.xlu0 %508, %v261
    %v510 = vpop.permute.xlu0 %509
    %513 = vset.pattern.permute.xlu0 0
    %514 = vperm.xlu0 %513, %v262
    %v515 = vpop.permute.xlu0 %514
    %518 = vset.pattern.permute.xlu0 0
    %519 = vperm.xlu0 %518, %v263
    %v520 = vpop.permute.xlu0 %519
    %523 = vset.pattern.permute.xlu0 0
    %524 = vperm.xlu0 %523, %v264
    %v525 = vpop.permute.xlu0 %524
    %528 = vset.pattern.permute.xlu0 0
    %529 = vperm.xlu0 %528, %v265
    %v530 = vpop.permute.xlu0 %529
    %533 = vset.pattern.permute.xlu0 0
    %534 = vperm.xlu0 %533, %v266
    %v535 = vpop.permute.xlu0 %534
    %538 = vset.pattern.permute.xlu0 0
    %539 = vperm.xlu0 %538, %v267
    %v540 = vpop.permute.xlu0 %539
    %543 = vset.pattern.permute.xlu0 0
    %544 = vperm.xlu0 %543, %v268
    %v545 = vpop.permute.xlu0 %544
    %548 = vset.pattern.permute.xlu0 0
    %549 = vperm.xlu0 %548, %v269
    %v550 = vpop.permute.xlu0 %549
    %553 = vset.pattern.permute.xlu0 0
    %554 = vperm.xlu0 %553, %v270
    %v555 = vpop.permute.xlu0 %554
    %558 = vset.pattern.permute.xlu0 0
    %559 = vperm.xlu0 %558, %v271
    %v560 = vpop.permute.xlu0 %559
    %v562 = vlaneseq
    %v563 = vshrl.u32 %v562, 7
    %v564 = vsub.s32 0, %v563
    %v565 = vrot.slane %v401, %v564
    %v566 = vmul.f32 %v405, %v565
    %v567 = vmul.f32 %v410, %v565
    %v568 = vmul.f32 %v415, %v565
    %v569 = vmul.f32 %v420, %v565
    %v570 = vmul.f32 %v425, %v565
    %v571 = vmul.f32 %v430, %v565
    %v572 = vmul.f32 %v435, %v565
    %v573 = vmul.f32 %v440, %v565
    %v574 = vmul.f32 %v445, %v565
    %v575 = vmul.f32 %v450, %v565
    %v576 = vmul.f32 %v455, %v565
    %v577 = vmul.f32 %v460, %v565
    %v578 = vmul.f32 %v465, %v565
    %v579 = vmul.f32 %v470, %v565
    %v580 = vmul.f32 %v475, %v565
    %v581 = vmul.f32 %v480, %v565
    %v582 = vmul.f32 %v485, %v565
    %v583 = vmul.f32 %v490, %v565
    %v584 = vmul.f32 %v495, %v565
    %v585 = vmul.f32 %v500, %v565
    %v586 = vmul.f32 %v505, %v565
    %v587 = vmul.f32 %v510, %v565
    %v588 = vmul.f32 %v515, %v565
    %v589 = vmul.f32 %v520, %v565
    %v590 = vmul.f32 %v525, %v565
    %v591 = vmul.f32 %v530, %v565
    %v592 = vmul.f32 %v535, %v565
    %v593 = vmul.f32 %v540, %v565
    %v594 = vmul.f32 %v545, %v565
    %v595 = vmul.f32 %v550, %v565
    %v596 = vmul.f32 %v555, %v565
    %v597 = vmul.f32 %v560, %v565
    %v598 = vld [vmem:[%s1 + $0x1] sm:$0x1]
    %599 = vset.pattern.permute.xlu0 1
    %600 = vperm.xlu0 %599, %v240
    %v601 = vpop.permute.xlu0 %600
    %603 = vset.pattern.permute.xlu0 1
    %604 = vperm.xlu0 %603, %v241
    %v605 = vpop.permute.xlu0 %604
    %607 = vset.pattern.permute.xlu0 1
    %608 = vperm.xlu0 %607, %v242
    %v609 = vpop.permute.xlu0 %608
    %611 = vset.pattern.permute.xlu0 1
    %612 = vperm.xlu0 %611, %v243
    %v613 = vpop.permute.xlu0 %612
    %615 = vset.pattern.permute.xlu0 1
    %616 = vperm.xlu0 %615, %v244
    %v617 = vpop.permute.xlu0 %616
    %619 = vset.pattern.permute.xlu0 1
    %620 = vperm.xlu0 %619, %v245
    %v621 = vpop.permute.xlu0 %620
    %623 = vset.pattern.permute.xlu0 1
    %624 = vperm.xlu0 %623, %v246
    %v625 = vpop.permute.xlu0 %624
    %627 = vset.pattern.permute.xlu0 1
    %628 = vperm.xlu0 %627, %v247
    %v629 = vpop.permute.xlu0 %628
    %631 = vset.pattern.permute.xlu0 1
    %632 = vperm.xlu0 %631, %v248
    %v633 = vpop.permute.xlu0 %632
    %635 = vset.pattern.permute.xlu0 1
    %636 = vperm.xlu0 %635, %v249
    %v637 = vpop.permute.xlu0 %636
    %639 = vset.pattern.permute.xlu0 1
    %640 = vperm.xlu0 %639, %v250
    %v641 = vpop.permute.xlu0 %640
    %643 = vset.pattern.permute.xlu0 1
    %644 = vperm.xlu0 %643, %v251
    %v645 = vpop.permute.xlu0 %644
    %647 = vset.pattern.permute.xlu0 1
    %648 = vperm.xlu0 %647, %v252
    %v649 = vpop.permute.xlu0 %648
    %651 = vset.pattern.permute.xlu0 1
    %652 = vperm.xlu0 %651, %v253
    %v653 = vpop.permute.xlu0 %652
    %655 = vset.pattern.permute.xlu0 1
    %656 = vperm.xlu0 %655, %v254
    %v657 = vpop.permute.xlu0 %656
    %659 = vset.pattern.permute.xlu0 1
    %660 = vperm.xlu0 %659, %v255
    %v661 = vpop.permute.xlu0 %660
    %663 = vset.pattern.permute.xlu0 1
    %664 = vperm.xlu0 %663, %v256
    %v665 = vpop.permute.xlu0 %664
    %667 = vset.pattern.permute.xlu0 1
    %668 = vperm.xlu0 %667, %v257
    %v669 = vpop.permute.xlu0 %668
    %671 = vset.pattern.permute.xlu0 1
    %672 = vperm.xlu0 %671, %v258
    %v673 = vpop.permute.xlu0 %672
    %675 = vset.pattern.permute.xlu0 1
    %676 = vperm.xlu0 %675, %v259
    %v677 = vpop.permute.xlu0 %676
    %679 = vset.pattern.permute.xlu0 1
    %680 = vperm.xlu0 %679, %v260
    %v681 = vpop.permute.xlu0 %680
    %683 = vset.pattern.permute.xlu0 1
    %684 = vperm.xlu0 %683, %v261
    %v685 = vpop.permute.xlu0 %684
    %687 = vset.pattern.permute.xlu0 1
    %688 = vperm.xlu0 %687, %v262
    %v689 = vpop.permute.xlu0 %688
    %691 = vset.pattern.permute.xlu0 1
    %692 = vperm.xlu0 %691, %v263
    %v693 = vpop.permute.xlu0 %692
    %695 = vset.pattern.permute.xlu0 1
    %696 = vperm.xlu0 %695, %v264
    %v697 = vpop.permute.xlu0 %696
    %699 = vset.pattern.permute.xlu0 1
    %700 = vperm.xlu0 %699, %v265
    %v701 = vpop.permute.xlu0 %700
    %703 = vset.pattern.permute.xlu0 1
    %704 = vperm.xlu0 %703, %v266
    %v705 = vpop.permute.xlu0 %704
    %707 = vset.pattern.permute.xlu0 1
    %708 = vperm.xlu0 %707, %v267
    %v709 = vpop.permute.xlu0 %708
    %711 = vset.pattern.permute.xlu0 1
    %712 = vperm.xlu0 %711, %v268
    %v713 = vpop.permute.xlu0 %712
    %715 = vset.pattern.permute.xlu0 1
    %716 = vperm.xlu0 %715, %v269
    %v717 = vpop.permute.xlu0 %716
    %719 = vset.pattern.permute.xlu0 1
    %720 = vperm.xlu0 %719, %v270
    %v721 = vpop.permute.xlu0 %720
    %723 = vset.pattern.permute.xlu0 1
    %724 = vperm.xlu0 %723, %v271
    %v725 = vpop.permute.xlu0 %724
    %v727 = vlaneseq
    %v728 = vshrl.u32 %v727, 7
    %v729 = vsub.s32 0, %v728
    %v730 = vrot.slane %v598, %v729
    %v731 = vmul.f32 %v601, %v730
    %v732 = vmul.f32 %v605, %v730
    %v733 = vmul.f32 %v609, %v730
    %v734 = vmul.f32 %v613, %v730
    %v735 = vmul.f32 %v617, %v730
    %v736 = vmul.f32 %v621, %v730
    %v737 = vmul.f32 %v625, %v730
    %v738 = vmul.f32 %v629, %v730
    %v739 = vmul.f32 %v633, %v730
    %v740 = vmul.f32 %v637, %v730
    %v741 = vmul.f32 %v641, %v730
    %v742 = vmul.f32 %v645, %v730
    %v743 = vmul.f32 %v649, %v730
    %v744 = vmul.f32 %v653, %v730
    %v745 = vmul.f32 %v657, %v730
    %v746 = vmul.f32 %v661, %v730
    %v747 = vmul.f32 %v665, %v730
    %v748 = vmul.f32 %v669, %v730
    %v749 = vmul.f32 %v673, %v730
    %v750 = vmul.f32 %v677, %v730
    %v751 = vmul.f32 %v681, %v730
    %v752 = vmul.f32 %v685, %v730
    %v753 = vmul.f32 %v689, %v730
    %v754 = vmul.f32 %v693, %v730
    %v755 = vmul.f32 %v697, %v730
    %v756 = vmul.f32 %v701, %v730
    %v757 = vmul.f32 %v705, %v730
    %v758 = vmul.f32 %v709, %v730
    %v759 = vmul.f32 %v713, %v730
    %v760 = vmul.f32 %v717, %v730
    %v761 = vmul.f32 %v721, %v730
    %v762 = vmul.f32 %v725, %v730
    %v763 = vadd.f32 %v566, %v731
    %v764 = vadd.f32 %v567, %v732
    %v765 = vadd.f32 %v568, %v733
    %v766 = vadd.f32 %v569, %v734
    %v767 = vadd.f32 %v570, %v735
    %v768 = vadd.f32 %v571, %v736
    %v769 = vadd.f32 %v572, %v737
    %v770 = vadd.f32 %v573, %v738
    %v771 = vadd.f32 %v574, %v739
    %v772 = vadd.f32 %v575, %v740
    %v773 = vadd.f32 %v576, %v741
    %v774 = vadd.f32 %v577, %v742
    %v775 = vadd.f32 %v578, %v743
    %v776 = vadd.f32 %v579, %v744
    %v777 = vadd.f32 %v580, %v745
    %v778 = vadd.f32 %v581, %v746
    %v779 = vadd.f32 %v582, %v747
    %v780 = vadd.f32 %v583, %v748
    %v781 = vadd.f32 %v584, %v749
    %v782 = vadd.f32 %v585, %v750
    %v783 = vadd.f32 %v586, %v751
    %v784 = vadd.f32 %v587, %v752
    %v785 = vadd.f32 %v588, %v753
    %v786 = vadd.f32 %v589, %v754
    %v787 = vadd.f32 %v590, %v755
    %v788 = vadd.f32 %v591, %v756
    %v789 = vadd.f32 %v592, %v757
    %v790 = vadd.f32 %v593, %v758
    %v791 = vadd.f32 %v594, %v759
    %v792 = vadd.f32 %v595, %v760
    %v793 = vadd.f32 %v596, %v761
    %v794 = vadd.f32 %v597, %v762
    %v795 = vld [vmem:[%s1 + $0x2] sm:$0x1]
    %797 = vset.pattern.permute.xlu0 0
    %798 = vperm.xlu0 %797, %v46
    %v799 = vpop.permute.xlu0 %798
    %802 = vset.pattern.permute.xlu0 0
    %803 = vperm.xlu0 %802, %v47
    %v804 = vpop.permute.xlu0 %803
    %807 = vset.pattern.permute.xlu0 0
    %808 = vperm.xlu0 %807, %v48
    %v809 = vpop.permute.xlu0 %808
    %812 = vset.pattern.permute.xlu0 0
    %813 = vperm.xlu0 %812, %v49
    %v814 = vpop.permute.xlu0 %813
    %817 = vset.pattern.permute.xlu0 0
    %818 = vperm.xlu0 %817, %v50
    %v819 = vpop.permute.xlu0 %818
    %822 = vset.pattern.permute.xlu0 0
    %823 = vperm.xlu0 %822, %v51
    %v824 = vpop.permute.xlu0 %823
    %827 = vset.pattern.permute.xlu0 0
    %828 = vperm.xlu0 %827, %v52
    %v829 = vpop.permute.xlu0 %828
    %832 = vset.pattern.permute.xlu0 0
    %833 = vperm.xlu0 %832, %v53
    %v834 = vpop.permute.xlu0 %833
    %837 = vset.pattern.permute.xlu0 0
    %838 = vperm.xlu0 %837, %v54
    %v839 = vpop.permute.xlu0 %838
    %842 = vset.pattern.permute.xlu0 0
    %843 = vperm.xlu0 %842, %v55
    %v844 = vpop.permute.xlu0 %843
    %847 = vset.pattern.permute.xlu0 0
    %848 = vperm.xlu0 %847, %v56
    %v849 = vpop.permute.xlu0 %848
    %852 = vset.pattern.permute.xlu0 0
    %853 = vperm.xlu0 %852, %v57
    %v854 = vpop.permute.xlu0 %853
    %857 = vset.pattern.permute.xlu0 0
    %858 = vperm.xlu0 %857, %v58
    %v859 = vpop.permute.xlu0 %858
    %862 = vset.pattern.permute.xlu0 0
    %863 = vperm.xlu0 %862, %v59
    %v864 = vpop.permute.xlu0 %863
    %867 = vset.pattern.permute.xlu0 0
    %868 = vperm.xlu0 %867, %v60
    %v869 = vpop.permute.xlu0 %868
    %872 = vset.pattern.permute.xlu0 0
    %873 = vperm.xlu0 %872, %v61
    %v874 = vpop.permute.xlu0 %873
    %877 = vset.pattern.permute.xlu0 0
    %878 = vperm.xlu0 %877, %v62
    %v879 = vpop.permute.xlu0 %878
    %882 = vset.pattern.permute.xlu0 0
    %883 = vperm.xlu0 %882, %v63
    %v884 = vpop.permute.xlu0 %883
    %887 = vset.pattern.permute.xlu0 0
    %888 = vperm.xlu0 %887, %v64
    %v889 = vpop.permute.xlu0 %888
    %892 = vset.pattern.permute.xlu0 0
    %893 = vperm.xlu0 %892, %v65
    %v894 = vpop.permute.xlu0 %893
    %897 = vset.pattern.permute.xlu0 0
    %898 = vperm.xlu0 %897, %v66
    %v899 = vpop.permute.xlu0 %898
    %902 = vset.pattern.permute.xlu0 0
    %903 = vperm.xlu0 %902, %v67
    %v904 = vpop.permute.xlu0 %903
    %907 = vset.pattern.permute.xlu0 0
    %908 = vperm.xlu0 %907, %v68
    %v909 = vpop.permute.xlu0 %908
    %912 = vset.pattern.permute.xlu0 0
    %913 = vperm.xlu0 %912, %v69
    %v914 = vpop.permute.xlu0 %913
    %917 = vset.pattern.permute.xlu0 0
    %918 = vperm.xlu0 %917, %v70
    %v919 = vpop.permute.xlu0 %918
    %922 = vset.pattern.permute.xlu0 0
    %923 = vperm.xlu0 %922, %v71
    %v924 = vpop.permute.xlu0 %923
    %927 = vset.pattern.permute.xlu0 0
    %928 = vperm.xlu0 %927, %v72
    %v929 = vpop.permute.xlu0 %928
    %932 = vset.pattern.permute.xlu0 0
    %933 = vperm.xlu0 %932, %v73
    %v934 = vpop.permute.xlu0 %933
    %937 = vset.pattern.permute.xlu0 0
    %938 = vperm.xlu0 %937, %v74
    %v939 = vpop.permute.xlu0 %938
    %942 = vset.pattern.permute.xlu0 0
    %943 = vperm.xlu0 %942, %v75
    %v944 = vpop.permute.xlu0 %943
    %947 = vset.pattern.permute.xlu0 0
    %948 = vperm.xlu0 %947, %v76
    %v949 = vpop.permute.xlu0 %948
    %952 = vset.pattern.permute.xlu0 0
    %953 = vperm.xlu0 %952, %v77
    %v954 = vpop.permute.xlu0 %953
    %v956 = vlaneseq
    %v957 = vshrl.u32 %v956, 7
    %v958 = vsub.s32 0, %v957
    %v959 = vrot.slane %v795, %v958
    %v960 = vmul.f32 %v799, %v959
    %v961 = vmul.f32 %v804, %v959
    %v962 = vmul.f32 %v809, %v959
    %v963 = vmul.f32 %v814, %v959
    %v964 = vmul.f32 %v819, %v959
    %v965 = vmul.f32 %v824, %v959
    %v966 = vmul.f32 %v829, %v959
    %v967 = vmul.f32 %v834, %v959
    %v968 = vmul.f32 %v839, %v959
    %v969 = vmul.f32 %v844, %v959
    %v970 = vmul.f32 %v849, %v959
    %v971 = vmul.f32 %v854, %v959
    %v972 = vmul.f32 %v859, %v959
    %v973 = vmul.f32 %v864, %v959
    %v974 = vmul.f32 %v869, %v959
    %v975 = vmul.f32 %v874, %v959
    %v976 = vmul.f32 %v879, %v959
    %v977 = vmul.f32 %v884, %v959
    %v978 = vmul.f32 %v889, %v959
    %v979 = vmul.f32 %v894, %v959
    %v980 = vmul.f32 %v899, %v959
    %v981 = vmul.f32 %v904, %v959
    %v982 = vmul.f32 %v909, %v959
    %v983 = vmul.f32 %v914, %v959
    %v984 = vmul.f32 %v919, %v959
    %v985 = vmul.f32 %v924, %v959
    %v986 = vmul.f32 %v929, %v959
    %v987 = vmul.f32 %v934, %v959
    %v988 = vmul.f32 %v939, %v959
    %v989 = vmul.f32 %v944, %v959
    %v990 = vmul.f32 %v949, %v959
    %v991 = vmul.f32 %v954, %v959
    %v992 = vadd.f32 %v763, %v960
    %v993 = vadd.f32 %v764, %v961
    %v994 = vadd.f32 %v765, %v962
    %v995 = vadd.f32 %v766, %v963
    %v996 = vadd.f32 %v767, %v964
    %v997 = vadd.f32 %v768, %v965
    %v998 = vadd.f32 %v769, %v966
    %v999 = vadd.f32 %v770, %v967
    %v1000 = vadd.f32 %v771, %v968
    %v1001 = vadd.f32 %v772, %v969
    %v1002 = vadd.f32 %v773, %v970
    %v1003 = vadd.f32 %v774, %v971
    %v1004 = vadd.f32 %v775, %v972
    %v1005 = vadd.f32 %v776, %v973
    %v1006 = vadd.f32 %v777, %v974
    %v1007 = vadd.f32 %v778, %v975
    %v1008 = vadd.f32 %v779, %v976
    %v1009 = vadd.f32 %v780, %v977
    %v1010 = vadd.f32 %v781, %v978
    %v1011 = vadd.f32 %v782, %v979
    %v1012 = vadd.f32 %v783, %v980
    %v1013 = vadd.f32 %v784, %v981
    %v1014 = vadd.f32 %v785, %v982
    %v1015 = vadd.f32 %v786, %v983
    %v1016 = vadd.f32 %v787, %v984
    %v1017 = vadd.f32 %v788, %v985
    %v1018 = vadd.f32 %v789, %v986
    %v1019 = vadd.f32 %v790, %v987
    %v1020 = vadd.f32 %v791, %v988
    %v1021 = vadd.f32 %v792, %v989
    %v1022 = vadd.f32 %v793, %v990
    %v1023 = vadd.f32 %v794, %v991
    %v1024 = vld [vmem:[%s1 + $0x3] sm:$0x1]
    %1025 = vset.pattern.permute.xlu0 1
    %1026 = vperm.xlu0 %1025, %v46
    %v1027 = vpop.permute.xlu0 %1026
    %1029 = vset.pattern.permute.xlu0 1
    %1030 = vperm.xlu0 %1029, %v47
    %v1031 = vpop.permute.xlu0 %1030
    %1033 = vset.pattern.permute.xlu0 1
    %1034 = vperm.xlu0 %1033, %v48
    %v1035 = vpop.permute.xlu0 %1034
    %1037 = vset.pattern.permute.xlu0 1
    %1038 = vperm.xlu0 %1037, %v49
    %v1039 = vpop.permute.xlu0 %1038
    %1041 = vset.pattern.permute.xlu0 1
    %1042 = vperm.xlu0 %1041, %v50
    %v1043 = vpop.permute.xlu0 %1042
    %1045 = vset.pattern.permute.xlu0 1
    %1046 = vperm.xlu0 %1045, %v51
    %v1047 = vpop.permute.xlu0 %1046
    %1049 = vset.pattern.permute.xlu0 1
    %1050 = vperm.xlu0 %1049, %v52
    %v1051 = vpop.permute.xlu0 %1050
    %1053 = vset.pattern.permute.xlu0 1
    %1054 = vperm.xlu0 %1053, %v53
    %v1055 = vpop.permute.xlu0 %1054
    %1057 = vset.pattern.permute.xlu0 1
    %1058 = vperm.xlu0 %1057, %v54
    %v1059 = vpop.permute.xlu0 %1058
    %1061 = vset.pattern.permute.xlu0 1
    %1062 = vperm.xlu0 %1061, %v55
    %v1063 = vpop.permute.xlu0 %1062
    %1065 = vset.pattern.permute.xlu0 1
    %1066 = vperm.xlu0 %1065, %v56
    %v1067 = vpop.permute.xlu0 %1066
    %1069 = vset.pattern.permute.xlu0 1
    %1070 = vperm.xlu0 %1069, %v57
    %v1071 = vpop.permute.xlu0 %1070
    %1073 = vset.pattern.permute.xlu0 1
    %1074 = vperm.xlu0 %1073, %v58
    %v1075 = vpop.permute.xlu0 %1074
    %1077 = vset.pattern.permute.xlu0 1
    %1078 = vperm.xlu0 %1077, %v59
    %v1079 = vpop.permute.xlu0 %1078
    %1081 = vset.pattern.permute.xlu0 1
    %1082 = vperm.xlu0 %1081, %v60
    %v1083 = vpop.permute.xlu0 %1082
    %1085 = vset.pattern.permute.xlu0 1
    %1086 = vperm.xlu0 %1085, %v61
    %v1087 = vpop.permute.xlu0 %1086
    %1089 = vset.pattern.permute.xlu0 1
    %1090 = vperm.xlu0 %1089, %v62
    %v1091 = vpop.permute.xlu0 %1090
    %1093 = vset.pattern.permute.xlu0 1
    %1094 = vperm.xlu0 %1093, %v63
    %v1095 = vpop.permute.xlu0 %1094
    %1097 = vset.pattern.permute.xlu0 1
    %1098 = vperm.xlu0 %1097, %v64
    %v1099 = vpop.permute.xlu0 %1098
    %1101 = vset.pattern.permute.xlu0 1
    %1102 = vperm.xlu0 %1101, %v65
    %v1103 = vpop.permute.xlu0 %1102
    %1105 = vset.pattern.permute.xlu0 1
    %1106 = vperm.xlu0 %1105, %v66
    %v1107 = vpop.permute.xlu0 %1106
    %1109 = vset.pattern.permute.xlu0 1
    %1110 = vperm.xlu0 %1109, %v67
    %v1111 = vpop.permute.xlu0 %1110
    %1113 = vset.pattern.permute.xlu0 1
    %1114 = vperm.xlu0 %1113, %v68
    %v1115 = vpop.permute.xlu0 %1114
    %1117 = vset.pattern.permute.xlu0 1
    %1118 = vperm.xlu0 %1117, %v69
    %v1119 = vpop.permute.xlu0 %1118
    %1121 = vset.pattern.permute.xlu0 1
    %1122 = vperm.xlu0 %1121, %v70
    %v1123 = vpop.permute.xlu0 %1122
    %1125 = vset.pattern.permute.xlu0 1
    %1126 = vperm.xlu0 %1125, %v71
    %v1127 = vpop.permute.xlu0 %1126
    %1129 = vset.pattern.permute.xlu0 1
    %1130 = vperm.xlu0 %1129, %v72
    %v1131 = vpop.permute.xlu0 %1130
    %1133 = vset.pattern.permute.xlu0 1
    %1134 = vperm.xlu0 %1133, %v73
    %v1135 = vpop.permute.xlu0 %1134
    %1137 = vset.pattern.permute.xlu0 1
    %1138 = vperm.xlu0 %1137, %v74
    %v1139 = vpop.permute.xlu0 %1138
    %1141 = vset.pattern.permute.xlu0 1
    %1142 = vperm.xlu0 %1141, %v75
    %v1143 = vpop.permute.xlu0 %1142
    %1145 = vset.pattern.permute.xlu0 1
    %1146 = vperm.xlu0 %1145, %v76
    %v1147 = vpop.permute.xlu0 %1146
    %1149 = vset.pattern.permute.xlu0 1
    %1150 = vperm.xlu0 %1149, %v77
    %v1151 = vpop.permute.xlu0 %1150
    %v1153 = vlaneseq
    %v1154 = vshrl.u32 %v1153, 7
    %v1155 = vsub.s32 0, %v1154
    %v1156 = vrot.slane %v1024, %v1155
    %v1157 = vmul.f32 %v1027, %v1156
    %v1158 = vmul.f32 %v1031, %v1156
    %v1159 = vmul.f32 %v1035, %v1156
    %v1160 = vmul.f32 %v1039, %v1156
    %v1161 = vmul.f32 %v1043, %v1156
    %v1162 = vmul.f32 %v1047, %v1156
    %v1163 = vmul.f32 %v1051, %v1156
    %v1164 = vmul.f32 %v1055, %v1156
    %v1165 = vmul.f32 %v1059, %v1156
    %v1166 = vmul.f32 %v1063, %v1156
    %v1167 = vmul.f32 %v1067, %v1156
    %v1168 = vmul.f32 %v1071, %v1156
    %v1169 = vmul.f32 %v1075, %v1156
    %v1170 = vmul.f32 %v1079, %v1156
    %v1171 = vmul.f32 %v1083, %v1156
    %v1172 = vmul.f32 %v1087, %v1156
    %v1173 = vmul.f32 %v1091, %v1156
    %v1174 = vmul.f32 %v1095, %v1156
    %v1175 = vmul.f32 %v1099, %v1156
    %v1176 = vmul.f32 %v1103, %v1156
    %v1177 = vmul.f32 %v1107, %v1156
    %v1178 = vmul.f32 %v1111, %v1156
    %v1179 = vmul.f32 %v1115, %v1156
    %v1180 = vmul.f32 %v1119, %v1156
    %v1181 = vmul.f32 %v1123, %v1156
    %v1182 = vmul.f32 %v1127, %v1156
    %v1183 = vmul.f32 %v1131, %v1156
    %v1184 = vmul.f32 %v1135, %v1156
    %v1185 = vmul.f32 %v1139, %v1156
    %v1186 = vmul.f32 %v1143, %v1156
    %v1187 = vmul.f32 %v1147, %v1156
    %v1188 = vmul.f32 %v1151, %v1156
    %v1189 = vadd.f32 %v992, %v1157
    %v1190 = vadd.f32 %v993, %v1158
    %v1191 = vadd.f32 %v994, %v1159
    %v1192 = vadd.f32 %v995, %v1160
    %v1193 = vadd.f32 %v996, %v1161
    %v1194 = vadd.f32 %v997, %v1162
    %v1195 = vadd.f32 %v998, %v1163
    %v1196 = vadd.f32 %v999, %v1164
    %v1197 = vadd.f32 %v1000, %v1165
    %v1198 = vadd.f32 %v1001, %v1166
    %v1199 = vadd.f32 %v1002, %v1167
    %v1200 = vadd.f32 %v1003, %v1168
    %v1201 = vadd.f32 %v1004, %v1169
    %v1202 = vadd.f32 %v1005, %v1170
    %v1203 = vadd.f32 %v1006, %v1171
    %v1204 = vadd.f32 %v1007, %v1172
    %v1205 = vadd.f32 %v1008, %v1173
    %v1206 = vadd.f32 %v1009, %v1174
    %v1207 = vadd.f32 %v1010, %v1175
    %v1208 = vadd.f32 %v1011, %v1176
    %v1209 = vadd.f32 %v1012, %v1177
    %v1210 = vadd.f32 %v1013, %v1178
    %v1211 = vadd.f32 %v1014, %v1179
    %v1212 = vadd.f32 %v1015, %v1180
    %v1213 = vadd.f32 %v1016, %v1181
    %v1214 = vadd.f32 %v1017, %v1182
    %v1215 = vadd.f32 %v1018, %v1183
    %v1216 = vadd.f32 %v1019, %v1184
    %v1217 = vadd.f32 %v1020, %v1185
    %v1218 = vadd.f32 %v1021, %v1186
    %v1219 = vadd.f32 %v1022, %v1187
    %v1220 = vadd.f32 %v1023, %v1188
    %v1221 = vld [vmem:[%s1 + $0x4] sm:$0x1]
    %1223 = vset.pattern.permute.xlu0 0
    %1224 = vperm.xlu0 %1223, %v369
    %v1225 = vpop.permute.xlu0 %1224
    %1228 = vset.pattern.permute.xlu0 0
    %1229 = vperm.xlu0 %1228, %v370
    %v1230 = vpop.permute.xlu0 %1229
    %1233 = vset.pattern.permute.xlu0 0
    %1234 = vperm.xlu0 %1233, %v371
    %v1235 = vpop.permute.xlu0 %1234
    %1238 = vset.pattern.permute.xlu0 0
    %1239 = vperm.xlu0 %1238, %v372
    %v1240 = vpop.permute.xlu0 %1239
    %1243 = vset.pattern.permute.xlu0 0
    %1244 = vperm.xlu0 %1243, %v373
    %v1245 = vpop.permute.xlu0 %1244
    %1248 = vset.pattern.permute.xlu0 0
    %1249 = vperm.xlu0 %1248, %v374
    %v1250 = vpop.permute.xlu0 %1249
    %1253 = vset.pattern.permute.xlu0 0
    %1254 = vperm.xlu0 %1253, %v375
    %v1255 = vpop.permute.xlu0 %1254
    %1258 = vset.pattern.permute.xlu0 0
    %1259 = vperm.xlu0 %1258, %v376
    %v1260 = vpop.permute.xlu0 %1259
    %1263 = vset.pattern.permute.xlu0 0
    %1264 = vperm.xlu0 %1263, %v377
    %v1265 = vpop.permute.xlu0 %1264
    %1268 = vset.pattern.permute.xlu0 0
    %1269 = vperm.xlu0 %1268, %v378
    %v1270 = vpop.permute.xlu0 %1269
    %1273 = vset.pattern.permute.xlu0 0
    %1274 = vperm.xlu0 %1273, %v379
    %v1275 = vpop.permute.xlu0 %1274
    %1278 = vset.pattern.permute.xlu0 0
    %1279 = vperm.xlu0 %1278, %v380
    %v1280 = vpop.permute.xlu0 %1279
    %1283 = vset.pattern.permute.xlu0 0
    %1284 = vperm.xlu0 %1283, %v381
    %v1285 = vpop.permute.xlu0 %1284
    %1288 = vset.pattern.permute.xlu0 0
    %1289 = vperm.xlu0 %1288, %v382
    %v1290 = vpop.permute.xlu0 %1289
    %1293 = vset.pattern.permute.xlu0 0
    %1294 = vperm.xlu0 %1293, %v383
    %v1295 = vpop.permute.xlu0 %1294
    %1298 = vset.pattern.permute.xlu0 0
    %1299 = vperm.xlu0 %1298, %v384
    %v1300 = vpop.permute.xlu0 %1299
    %1303 = vset.pattern.permute.xlu0 0
    %1304 = vperm.xlu0 %1303, %v385
    %v1305 = vpop.permute.xlu0 %1304
    %1308 = vset.pattern.permute.xlu0 0
    %1309 = vperm.xlu0 %1308, %v386
    %v1310 = vpop.permute.xlu0 %1309
    %1313 = vset.pattern.permute.xlu0 0
    %1314 = vperm.xlu0 %1313, %v387
    %v1315 = vpop.permute.xlu0 %1314
    %1318 = vset.pattern.permute.xlu0 0
    %1319 = vperm.xlu0 %1318, %v388
    %v1320 = vpop.permute.xlu0 %1319
    %1323 = vset.pattern.permute.xlu0 0
    %1324 = vperm.xlu0 %1323, %v389
    %v1325 = vpop.permute.xlu0 %1324
    %1328 = vset.pattern.permute.xlu0 0
    %1329 = vperm.xlu0 %1328, %v390
    %v1330 = vpop.permute.xlu0 %1329
    %1333 = vset.pattern.permute.xlu0 0
    %1334 = vperm.xlu0 %1333, %v391
    %v1335 = vpop.permute.xlu0 %1334
    %1338 = vset.pattern.permute.xlu0 0
    %1339 = vperm.xlu0 %1338, %v392
    %v1340 = vpop.permute.xlu0 %1339
    %1343 = vset.pattern.permute.xlu0 0
    %1344 = vperm.xlu0 %1343, %v393
    %v1345 = vpop.permute.xlu0 %1344
    %1348 = vset.pattern.permute.xlu0 0
    %1349 = vperm.xlu0 %1348, %v394
    %v1350 = vpop.permute.xlu0 %1349
    %1353 = vset.pattern.permute.xlu0 0
    %1354 = vperm.xlu0 %1353, %v395
    %v1355 = vpop.permute.xlu0 %1354
    %1358 = vset.pattern.permute.xlu0 0
    %1359 = vperm.xlu0 %1358, %v396
    %v1360 = vpop.permute.xlu0 %1359
    %1363 = vset.pattern.permute.xlu0 0
    %1364 = vperm.xlu0 %1363, %v397
    %v1365 = vpop.permute.xlu0 %1364
    %1368 = vset.pattern.permute.xlu0 0
    %1369 = vperm.xlu0 %1368, %v398
    %v1370 = vpop.permute.xlu0 %1369
    %1373 = vset.pattern.permute.xlu0 0
    %1374 = vperm.xlu0 %1373, %v399
    %v1375 = vpop.permute.xlu0 %1374
    %1378 = vset.pattern.permute.xlu0 0
    %1379 = vperm.xlu0 %1378, %v400
    %v1380 = vpop.permute.xlu0 %1379
    %v1382 = vlaneseq
    %v1383 = vshrl.u32 %v1382, 7
    %v1384 = vsub.s32 0, %v1383
    %v1385 = vrot.slane %v1221, %v1384
    %v1386 = vmul.f32 %v1225, %v1385
    %v1387 = vmul.f32 %v1230, %v1385
    %v1388 = vmul.f32 %v1235, %v1385
    %v1389 = vmul.f32 %v1240, %v1385
    %v1390 = vmul.f32 %v1245, %v1385
    %v1391 = vmul.f32 %v1250, %v1385
    %v1392 = vmul.f32 %v1255, %v1385
    %v1393 = vmul.f32 %v1260, %v1385
    %v1394 = vmul.f32 %v1265, %v1385
    %v1395 = vmul.f32 %v1270, %v1385
    %v1396 = vmul.f32 %v1275, %v1385
    %v1397 = vmul.f32 %v1280, %v1385
    %v1398 = vmul.f32 %v1285, %v1385
    %v1399 = vmul.f32 %v1290, %v1385
    %v1400 = vmul.f32 %v1295, %v1385
    %v1401 = vmul.f32 %v1300, %v1385
    %v1402 = vmul.f32 %v1305, %v1385
    %v1403 = vmul.f32 %v1310, %v1385
    %v1404 = vmul.f32 %v1315, %v1385
    %v1405 = vmul.f32 %v1320, %v1385
    %v1406 = vmul.f32 %v1325, %v1385
    %v1407 = vmul.f32 %v1330, %v1385
    %v1408 = vmul.f32 %v1335, %v1385
    %v1409 = vmul.f32 %v1340, %v1385
    %v1410 = vmul.f32 %v1345, %v1385
    %v1411 = vmul.f32 %v1350, %v1385
    %v1412 = vmul.f32 %v1355, %v1385
    %v1413 = vmul.f32 %v1360, %v1385
    %v1414 = vmul.f32 %v1365, %v1385
    %v1415 = vmul.f32 %v1370, %v1385
    %v1416 = vmul.f32 %v1375, %v1385
    %v1417 = vmul.f32 %v1380, %v1385
    %v1418 = vadd.f32 %v1189, %v1386
    %v1419 = vadd.f32 %v1190, %v1387
    %v1420 = vadd.f32 %v1191, %v1388
    %v1421 = vadd.f32 %v1192, %v1389
    %v1422 = vadd.f32 %v1193, %v1390
    %v1423 = vadd.f32 %v1194, %v1391
    %v1424 = vadd.f32 %v1195, %v1392
    %v1425 = vadd.f32 %v1196, %v1393
    %v1426 = vadd.f32 %v1197, %v1394
    %v1427 = vadd.f32 %v1198, %v1395
    %v1428 = vadd.f32 %v1199, %v1396
    %v1429 = vadd.f32 %v1200, %v1397
    %v1430 = vadd.f32 %v1201, %v1398
    %v1431 = vadd.f32 %v1202, %v1399
    %v1432 = vadd.f32 %v1203, %v1400
    %v1433 = vadd.f32 %v1204, %v1401
    %v1434 = vadd.f32 %v1205, %v1402
    %v1435 = vadd.f32 %v1206, %v1403
    %v1436 = vadd.f32 %v1207, %v1404
    %v1437 = vadd.f32 %v1208, %v1405
    %v1438 = vadd.f32 %v1209, %v1406
    %v1439 = vadd.f32 %v1210, %v1407
    %v1440 = vadd.f32 %v1211, %v1408
    %v1441 = vadd.f32 %v1212, %v1409
    %v1442 = vadd.f32 %v1213, %v1410
    %v1443 = vadd.f32 %v1214, %v1411
    %v1444 = vadd.f32 %v1215, %v1412
    %v1445 = vadd.f32 %v1216, %v1413
    %v1446 = vadd.f32 %v1217, %v1414
    %v1447 = vadd.f32 %v1218, %v1415
    %v1448 = vadd.f32 %v1219, %v1416
    %v1449 = vadd.f32 %v1220, %v1417
    %v1450 = vld [vmem:[%s1 + $0x5] sm:$0x1]
    %1451 = vset.pattern.permute.xlu0 1
    %1452 = vperm.xlu0 %1451, %v369
    %v1453 = vpop.permute.xlu0 %1452
    %1455 = vset.pattern.permute.xlu0 1
    %1456 = vperm.xlu0 %1455, %v370
    %v1457 = vpop.permute.xlu0 %1456
    %1459 = vset.pattern.permute.xlu0 1
    %1460 = vperm.xlu0 %1459, %v371
    %v1461 = vpop.permute.xlu0 %1460
    %1463 = vset.pattern.permute.xlu0 1
    %1464 = vperm.xlu0 %1463, %v372
    %v1465 = vpop.permute.xlu0 %1464
    %1467 = vset.pattern.permute.xlu0 1
    %1468 = vperm.xlu0 %1467, %v373
    %v1469 = vpop.permute.xlu0 %1468
    %1471 = vset.pattern.permute.xlu0 1
    %1472 = vperm.xlu0 %1471, %v374
    %v1473 = vpop.permute.xlu0 %1472
    %1475 = vset.pattern.permute.xlu0 1
    %1476 = vperm.xlu0 %1475, %v375
    %v1477 = vpop.permute.xlu0 %1476
    %1479 = vset.pattern.permute.xlu0 1
    %1480 = vperm.xlu0 %1479, %v376
    %v1481 = vpop.permute.xlu0 %1480
    %1483 = vset.pattern.permute.xlu0 1
    %1484 = vperm.xlu0 %1483, %v377
    %v1485 = vpop.permute.xlu0 %1484
    %1487 = vset.pattern.permute.xlu0 1
    %1488 = vperm.xlu0 %1487, %v378
    %v1489 = vpop.permute.xlu0 %1488
    %1491 = vset.pattern.permute.xlu0 1
    %1492 = vperm.xlu0 %1491, %v379
    %v1493 = vpop.permute.xlu0 %1492
    %1495 = vset.pattern.permute.xlu0 1
    %1496 = vperm.xlu0 %1495, %v380
    %v1497 = vpop.permute.xlu0 %1496
    %1499 = vset.pattern.permute.xlu0 1
    %1500 = vperm.xlu0 %1499, %v381
    %v1501 = vpop.permute.xlu0 %1500
    %1503 = vset.pattern.permute.xlu0 1
    %1504 = vperm.xlu0 %1503, %v382
    %v1505 = vpop.permute.xlu0 %1504
    %1507 = vset.pattern.permute.xlu0 1
    %1508 = vperm.xlu0 %1507, %v383
    %v1509 = vpop.permute.xlu0 %1508
    %1511 = vset.pattern.permute.xlu0 1
    %1512 = vperm.xlu0 %1511, %v384
    %v1513 = vpop.permute.xlu0 %1512
    %1515 = vset.pattern.permute.xlu0 1
    %1516 = vperm.xlu0 %1515, %v385
    %v1517 = vpop.permute.xlu0 %1516
    %1519 = vset.pattern.permute.xlu0 1
    %1520 = vperm.xlu0 %1519, %v386
    %v1521 = vpop.permute.xlu0 %1520
    %1523 = vset.pattern.permute.xlu0 1
    %1524 = vperm.xlu0 %1523, %v387
    %v1525 = vpop.permute.xlu0 %1524
    %1527 = vset.pattern.permute.xlu0 1
    %1528 = vperm.xlu0 %1527, %v388
    %v1529 = vpop.permute.xlu0 %1528
    %1531 = vset.pattern.permute.xlu0 1
    %1532 = vperm.xlu0 %1531, %v389
    %v1533 = vpop.permute.xlu0 %1532
    %1535 = vset.pattern.permute.xlu0 1
    %1536 = vperm.xlu0 %1535, %v390
    %v1537 = vpop.permute.xlu0 %1536
    %1539 = vset.pattern.permute.xlu0 1
    %1540 = vperm.xlu0 %1539, %v391
    %v1541 = vpop.permute.xlu0 %1540
    %1543 = vset.pattern.permute.xlu0 1
    %1544 = vperm.xlu0 %1543, %v392
    %v1545 = vpop.permute.xlu0 %1544
    %1547 = vset.pattern.permute.xlu0 1
    %1548 = vperm.xlu0 %1547, %v393
    %v1549 = vpop.permute.xlu0 %1548
    %1551 = vset.pattern.permute.xlu0 1
    %1552 = vperm.xlu0 %1551, %v394
    %v1553 = vpop.permute.xlu0 %1552
    %1555 = vset.pattern.permute.xlu0 1
    %1556 = vperm.xlu0 %1555, %v395
    %v1557 = vpop.permute.xlu0 %1556
    %1559 = vset.pattern.permute.xlu0 1
    %1560 = vperm.xlu0 %1559, %v396
    %v1561 = vpop.permute.xlu0 %1560
    %1563 = vset.pattern.permute.xlu0 1
    %1564 = vperm.xlu0 %1563, %v397
    %v1565 = vpop.permute.xlu0 %1564
    %1567 = vset.pattern.permute.xlu0 1
    %1568 = vperm.xlu0 %1567, %v398
    %v1569 = vpop.permute.xlu0 %1568
    %1571 = vset.pattern.permute.xlu0 1
    %1572 = vperm.xlu0 %1571, %v399
    %v1573 = vpop.permute.xlu0 %1572
    %1575 = vset.pattern.permute.xlu0 1
    %1576 = vperm.xlu0 %1575, %v400
    %v1577 = vpop.permute.xlu0 %1576
    %v1579 = vlaneseq
    %v1580 = vshrl.u32 %v1579, 7
    %v1581 = vsub.s32 0, %v1580
    %v1582 = vrot.slane %v1450, %v1581
    %v1583 = vmul.f32 %v1453, %v1582
    %v1584 = vmul.f32 %v1457, %v1582
    %v1585 = vmul.f32 %v1461, %v1582
    %v1586 = vmul.f32 %v1465, %v1582
    %v1587 = vmul.f32 %v1469, %v1582
    %v1588 = vmul.f32 %v1473, %v1582
    %v1589 = vmul.f32 %v1477, %v1582
    %v1590 = vmul.f32 %v1481, %v1582
    %v1591 = vmul.f32 %v1485, %v1582
    %v1592 = vmul.f32 %v1489, %v1582
    %v1593 = vmul.f32 %v1493, %v1582
    %v1594 = vmul.f32 %v1497, %v1582
    %v1595 = vmul.f32 %v1501, %v1582
    %v1596 = vmul.f32 %v1505, %v1582
    %v1597 = vmul.f32 %v1509, %v1582
    %v1598 = vmul.f32 %v1513, %v1582
    %v1599 = vmul.f32 %v1517, %v1582
    %v1600 = vmul.f32 %v1521, %v1582
    %v1601 = vmul.f32 %v1525, %v1582
    %v1602 = vmul.f32 %v1529, %v1582
    %v1603 = vmul.f32 %v1533, %v1582
    %v1604 = vmul.f32 %v1537, %v1582
    %v1605 = vmul.f32 %v1541, %v1582
    %v1606 = vmul.f32 %v1545, %v1582
    %v1607 = vmul.f32 %v1549, %v1582
    %v1608 = vmul.f32 %v1553, %v1582
    %v1609 = vmul.f32 %v1557, %v1582
    %v1610 = vmul.f32 %v1561, %v1582
    %v1611 = vmul.f32 %v1565, %v1582
    %v1612 = vmul.f32 %v1569, %v1582
    %v1613 = vmul.f32 %v1573, %v1582
    %v1614 = vmul.f32 %v1577, %v1582
    %v1615 = vadd.f32 %v1418, %v1583
    %v1616 = vadd.f32 %v1419, %v1584
    %v1617 = vadd.f32 %v1420, %v1585
    %v1618 = vadd.f32 %v1421, %v1586
    %v1619 = vadd.f32 %v1422, %v1587
    %v1620 = vadd.f32 %v1423, %v1588
    %v1621 = vadd.f32 %v1424, %v1589
    %v1622 = vadd.f32 %v1425, %v1590
    %v1623 = vadd.f32 %v1426, %v1591
    %v1624 = vadd.f32 %v1427, %v1592
    %v1625 = vadd.f32 %v1428, %v1593
    %v1626 = vadd.f32 %v1429, %v1594
    %v1627 = vadd.f32 %v1430, %v1595
    %v1628 = vadd.f32 %v1431, %v1596
    %v1629 = vadd.f32 %v1432, %v1597
    %v1630 = vadd.f32 %v1433, %v1598
    %v1631 = vadd.f32 %v1434, %v1599
    %v1632 = vadd.f32 %v1435, %v1600
    %v1633 = vadd.f32 %v1436, %v1601
    %v1634 = vadd.f32 %v1437, %v1602
    %v1635 = vadd.f32 %v1438, %v1603
    %v1636 = vadd.f32 %v1439, %v1604
    %v1637 = vadd.f32 %v1440, %v1605
    %v1638 = vadd.f32 %v1441, %v1606
    %v1639 = vadd.f32 %v1442, %v1607
    %v1640 = vadd.f32 %v1443, %v1608
    %v1641 = vadd.f32 %v1444, %v1609
    %v1642 = vadd.f32 %v1445, %v1610
    %v1643 = vadd.f32 %v1446, %v1611
    %v1644 = vadd.f32 %v1447, %v1612
    %v1645 = vadd.f32 %v1448, %v1613
    %v1646 = vadd.f32 %v1449, %v1614
    %v1647 = vld [vmem:[%s2] sm:$0x1]
    %v1649 = vlaneseq
    %v1650 = vshrl.u32 %v1649, 7
    %v1651 = vsub.s32 0, %v1650
    %v1652 = vrot.slane %v1647, %v1651
    %v1654 = vadd.f32 %v1615, %v1652
    %v1655 = vadd.f32 %v1616, %v1652
    %v1656 = vadd.f32 %v1617, %v1652
    %v1657 = vadd.f32 %v1618, %v1652
    %v1658 = vadd.f32 %v1619, %v1652
    %v1659 = vadd.f32 %v1620, %v1652
    %v1660 = vadd.f32 %v1621, %v1652
    %v1661 = vadd.f32 %v1622, %v1652
    %v1662 = vadd.f32 %v1623, %v1652
    %v1663 = vadd.f32 %v1624, %v1652
    %v1664 = vadd.f32 %v1625, %v1652
    %v1665 = vadd.f32 %v1626, %v1652
    %v1666 = vadd.f32 %v1627, %v1652
    %v1667 = vadd.f32 %v1628, %v1652
    %v1668 = vadd.f32 %v1629, %v1652
    %v1669 = vadd.f32 %v1630, %v1652
    %v1670 = vadd.f32 %v1631, %v1652
    %v1671 = vadd.f32 %v1632, %v1652
    %v1672 = vadd.f32 %v1633, %v1652
    %v1673 = vadd.f32 %v1634, %v1652
    %v1674 = vadd.f32 %v1635, %v1652
    %v1675 = vadd.f32 %v1636, %v1652
    %v1676 = vadd.f32 %v1637, %v1652
    %v1677 = vadd.f32 %v1638, %v1652
    %v1678 = vadd.f32 %v1639, %v1652
    %v1679 = vadd.f32 %v1640, %v1652
    %v1680 = vadd.f32 %v1641, %v1652
    %v1681 = vadd.f32 %v1642, %v1652
    %v1682 = vadd.f32 %v1643, %v1652
    %v1683 = vadd.f32 %v1644, %v1652
    %v1684 = vadd.f32 %v1645, %v1652
    %v1685 = vadd.f32 %v1646, %v1652
    %vm1686 = vcmp.gt.f32.partialorder %v1654, 0.0
    %vm1687 = vcmp.gt.f32.partialorder %v1655, 0.0
    %vm1688 = vcmp.gt.f32.partialorder %v1656, 0.0
    %vm1689 = vcmp.gt.f32.partialorder %v1657, 0.0
    %vm1690 = vcmp.gt.f32.partialorder %v1658, 0.0
    %vm1691 = vcmp.gt.f32.partialorder %v1659, 0.0
    %vm1692 = vcmp.gt.f32.partialorder %v1660, 0.0
    %vm1693 = vcmp.gt.f32.partialorder %v1661, 0.0
    %vm1694 = vcmp.gt.f32.partialorder %v1662, 0.0
    %vm1695 = vcmp.gt.f32.partialorder %v1663, 0.0
    %vm1696 = vcmp.gt.f32.partialorder %v1664, 0.0
    %vm1697 = vcmp.gt.f32.partialorder %v1665, 0.0
    %vm1698 = vcmp.gt.f32.partialorder %v1666, 0.0
    %vm1699 = vcmp.gt.f32.partialorder %v1667, 0.0
    %vm1700 = vcmp.gt.f32.partialorder %v1668, 0.0
    %vm1701 = vcmp.gt.f32.partialorder %v1669, 0.0
    %vm1702 = vcmp.gt.f32.partialorder %v1670, 0.0
    %vm1703 = vcmp.gt.f32.partialorder %v1671, 0.0
    %vm1704 = vcmp.gt.f32.partialorder %v1672, 0.0
    %vm1705 = vcmp.gt.f32.partialorder %v1673, 0.0
    %vm1706 = vcmp.gt.f32.partialorder %v1674, 0.0
    %vm1707 = vcmp.gt.f32.partialorder %v1675, 0.0
    %vm1708 = vcmp.gt.f32.partialorder %v1676, 0.0
    %vm1709 = vcmp.gt.f32.partialorder %v1677, 0.0
    %vm1710 = vcmp.gt.f32.partialorder %v1678, 0.0
    %vm1711 = vcmp.gt.f32.partialorder %v1679, 0.0
    %vm1712 = vcmp.gt.f32.partialorder %v1680, 0.0
    %vm1713 = vcmp.gt.f32.partialorder %v1681, 0.0
    %vm1714 = vcmp.gt.f32.partialorder %v1682, 0.0
    %vm1715 = vcmp.gt.f32.partialorder %v1683, 0.0
    %vm1716 = vcmp.gt.f32.partialorder %v1684, 0.0
    %vm1717 = vcmp.gt.f32.partialorder %v1685, 0.0
    %v1718 = vmul.f32 %v1654, 0.01
    %v1719 = vmul.f32 %v1655, 0.01
    %v1720 = vmul.f32 %v1656, 0.01
    %v1721 = vmul.f32 %v1657, 0.01
    %v1722 = vmul.f32 %v1658, 0.01
    %v1723 = vmul.f32 %v1659, 0.01
    %v1724 = vmul.f32 %v1660, 0.01
    %v1725 = vmul.f32 %v1661, 0.01
    %v1726 = vmul.f32 %v1662, 0.01
    %v1727 = vmul.f32 %v1663, 0.01
    %v1728 = vmul.f32 %v1664, 0.01
    %v1729 = vmul.f32 %v1665, 0.01
    %v1730 = vmul.f32 %v1666, 0.01
    %v1731 = vmul.f32 %v1667, 0.01
    %v1732 = vmul.f32 %v1668, 0.01
    %v1733 = vmul.f32 %v1669, 0.01
    %v1734 = vmul.f32 %v1670, 0.01
    %v1735 = vmul.f32 %v1671, 0.01
    %v1736 = vmul.f32 %v1672, 0.01
    %v1737 = vmul.f32 %v1673, 0.01
    %v1738 = vmul.f32 %v1674, 0.01
    %v1739 = vmul.f32 %v1675, 0.01
    %v1740 = vmul.f32 %v1676, 0.01
    %v1741 = vmul.f32 %v1677, 0.01
    %v1742 = vmul.f32 %v1678, 0.01
    %v1743 = vmul.f32 %v1679, 0.01
    %v1744 = vmul.f32 %v1680, 0.01
    %v1745 = vmul.f32 %v1681, 0.01
    %v1746 = vmul.f32 %v1682, 0.01
    %v1747 = vmul.f32 %v1683, 0.01
    %v1748 = vmul.f32 %v1684, 0.01
    %v1749 = vmul.f32 %v1685, 0.01
    %v1750 = vsel %vm1686, %v1654, %v1718
    %v1751 = vsel %vm1687, %v1655, %v1719
    %v1752 = vsel %vm1688, %v1656, %v1720
    %v1753 = vsel %vm1689, %v1657, %v1721
    %v1754 = vsel %vm1690, %v1658, %v1722
    %v1755 = vsel %vm1691, %v1659, %v1723
    %v1756 = vsel %vm1692, %v1660, %v1724
    %v1757 = vsel %vm1693, %v1661, %v1725
    %v1758 = vsel %vm1694, %v1662, %v1726
    %v1759 = vsel %vm1695, %v1663, %v1727
    %v1760 = vsel %vm1696, %v1664, %v1728
    %v1761 = vsel %vm1697, %v1665, %v1729
    %v1762 = vsel %vm1698, %v1666, %v1730
    %v1763 = vsel %vm1699, %v1667, %v1731
    %v1764 = vsel %vm1700, %v1668, %v1732
    %v1765 = vsel %vm1701, %v1669, %v1733
    %v1766 = vsel %vm1702, %v1670, %v1734
    %v1767 = vsel %vm1703, %v1671, %v1735
    %v1768 = vsel %vm1704, %v1672, %v1736
    %v1769 = vsel %vm1705, %v1673, %v1737
    %v1770 = vsel %vm1706, %v1674, %v1738
    %v1771 = vsel %vm1707, %v1675, %v1739
    %v1772 = vsel %vm1708, %v1676, %v1740
    %v1773 = vsel %vm1709, %v1677, %v1741
    %v1774 = vsel %vm1710, %v1678, %v1742
    %v1775 = vsel %vm1711, %v1679, %v1743
    %v1776 = vsel %vm1712, %v1680, %v1744
    %v1777 = vsel %vm1713, %v1681, %v1745
    %v1778 = vsel %vm1714, %v1682, %v1746
    %v1779 = vsel %vm1715, %v1683, %v1747
    %v1780 = vsel %vm1716, %v1684, %v1748
    %v1781 = vsel %vm1717, %v1685, %v1749
    %v1782 = vrot.slane %v1750, 1
    %v1783 = vrot.slane %v1751, 1
    %v1784 = vrot.slane %v1752, 1
    %v1785 = vrot.slane %v1753, 1
    %v1786 = vrot.slane %v1754, 1
    %v1787 = vrot.slane %v1755, 1
    %v1788 = vrot.slane %v1756, 1
    %v1789 = vrot.slane %v1757, 1
    %v1790 = vrot.slane %v1758, 1
    %v1791 = vrot.slane %v1759, 1
    %v1792 = vrot.slane %v1760, 1
    %v1793 = vrot.slane %v1761, 1
    %v1794 = vrot.slane %v1762, 1
    %v1795 = vrot.slane %v1763, 1
    %v1796 = vrot.slane %v1764, 1
    %v1797 = vrot.slane %v1765, 1
    %v1798 = vrot.slane %v1766, 1
    %v1799 = vrot.slane %v1767, 1
    %v1800 = vrot.slane %v1768, 1
    %v1801 = vrot.slane %v1769, 1
    %v1802 = vrot.slane %v1770, 1
    %v1803 = vrot.slane %v1771, 1
    %v1804 = vrot.slane %v1772, 1
    %v1805 = vrot.slane %v1773, 1
    %v1806 = vrot.slane %v1774, 1
    %v1807 = vrot.slane %v1775, 1
    %v1808 = vrot.slane %v1776, 1
    %v1809 = vrot.slane %v1777, 1
    %v1810 = vrot.slane %v1778, 1
    %v1811 = vrot.slane %v1779, 1
    %v1812 = vrot.slane %v1780, 1
    %v1813 = vrot.slane %v1781, 1
    %v1814 = vsel %vm336, %v1812, %v1813
    %v1815 = vsel %vm336, %v1811, %v1812
    %v1816 = vsel %vm336, %v1810, %v1811
    %v1817 = vsel %vm336, %v1809, %v1810
    %v1818 = vsel %vm336, %v1808, %v1809
    %v1819 = vsel %vm336, %v1807, %v1808
    %v1820 = vsel %vm336, %v1806, %v1807
    %v1821 = vsel %vm336, %v1805, %v1806
    %v1822 = vsel %vm336, %v1804, %v1805
    %v1823 = vsel %vm336, %v1803, %v1804
    %v1824 = vsel %vm336, %v1802, %v1803
    %v1825 = vsel %vm336, %v1801, %v1802
    %v1826 = vsel %vm336, %v1800, %v1801
    %v1827 = vsel %vm336, %v1799, %v1800
    %v1828 = vsel %vm336, %v1798, %v1799
    %v1829 = vsel %vm336, %v1797, %v1798
    %v1830 = vsel %vm336, %v1796, %v1797
    %v1831 = vsel %vm336, %v1795, %v1796
    %v1832 = vsel %vm336, %v1794, %v1795
    %v1833 = vsel %vm336, %v1793, %v1794
    %v1834 = vsel %vm336, %v1792, %v1793
    %v1835 = vsel %vm336, %v1791, %v1792
    %v1836 = vsel %vm336, %v1790, %v1791
    %v1837 = vsel %vm336, %v1789, %v1790
    %v1838 = vsel %vm336, %v1788, %v1789
    %v1839 = vsel %vm336, %v1787, %v1788
    %v1840 = vsel %vm336, %v1786, %v1787
    %v1841 = vsel %vm336, %v1785, %v1786
    %v1842 = vsel %vm336, %v1784, %v1785
    %v1843 = vsel %vm336, %v1783, %v1784
    %v1844 = vsel %vm336, %v1782, %v1783
    %v1845 = vsel %vm336, %v1813, %v1782
    %v1846 = vmax.f32 %v1750, %v1844
    %v1847 = vmax.f32 %v1751, %v1843
    %v1848 = vmax.f32 %v1752, %v1842
    %v1849 = vmax.f32 %v1753, %v1841
    %v1850 = vmax.f32 %v1754, %v1840
    %v1851 = vmax.f32 %v1755, %v1839
    %v1852 = vmax.f32 %v1756, %v1838
    %v1853 = vmax.f32 %v1757, %v1837
    %v1854 = vmax.f32 %v1758, %v1836
    %v1855 = vmax.f32 %v1759, %v1835
    %v1856 = vmax.f32 %v1760, %v1834
    %v1857 = vmax.f32 %v1761, %v1833
    %v1858 = vmax.f32 %v1762, %v1832
    %v1859 = vmax.f32 %v1763, %v1831
    %v1860 = vmax.f32 %v1764, %v1830
    %v1861 = vmax.f32 %v1765, %v1829
    %v1862 = vmax.f32 %v1766, %v1828
    %v1863 = vmax.f32 %v1767, %v1827
    %v1864 = vmax.f32 %v1768, %v1826
    %v1865 = vmax.f32 %v1769, %v1825
    %v1866 = vmax.f32 %v1770, %v1824
    %v1867 = vmax.f32 %v1771, %v1823
    %v1868 = vmax.f32 %v1772, %v1822
    %v1869 = vmax.f32 %v1773, %v1821
    %v1870 = vmax.f32 %v1774, %v1820
    %v1871 = vmax.f32 %v1775, %v1819
    %v1872 = vmax.f32 %v1776, %v1818
    %v1873 = vmax.f32 %v1777, %v1817
    %v1874 = vmax.f32 %v1778, %v1816
    %v1875 = vmax.f32 %v1779, %v1815
    %v1876 = vmax.f32 %v1780, %v1814
    %v1877 = vmax.f32 %v1781, %v1845
    %vm1878 = vcmask 523264
    %1879 = vst.msk [vmem:[#allocation2] sm:$0xff] %vm1878, %v1846
    %1880 = vst.msk [vmem:[#allocation2 + $0x8] sm:$0xff] %vm1878, %v1847
    %1881 = vst.msk [vmem:[#allocation2 + $0x10] sm:$0xff] %vm1878, %v1848
    %1882 = vst.msk [vmem:[#allocation2 + $0x18] sm:$0xff] %vm1878, %v1849
    %1883 = vst.msk [vmem:[#allocation2 + $0x20] sm:$0xff] %vm1878, %v1850
    %1884 = vst.msk [vmem:[#allocation2 + $0x28] sm:$0xff] %vm1878, %v1851
    %1885 = vst.msk [vmem:[#allocation2 + $0x30] sm:$0xff] %vm1878, %v1852
    %1886 = vst.msk [vmem:[#allocation2 + $0x38] sm:$0xff] %vm1878, %v1853
    %1887 = vst.msk [vmem:[#allocation2 + $0x40] sm:$0xff] %vm1878, %v1854
    %1888 = vst.msk [vmem:[#allocation2 + $0x48] sm:$0xff] %vm1878, %v1855
    %1889 = vst.msk [vmem:[#allocation2 + $0x50] sm:$0xff] %vm1878, %v1856
    %1890 = vst.msk [vmem:[#allocation2 + $0x58] sm:$0xff] %vm1878, %v1857
    %1891 = vst.msk [vmem:[#allocation2 + $0x60] sm:$0xff] %vm1878, %v1858
    %1892 = vst.msk [vmem:[#allocation2 + $0x68] sm:$0xff] %vm1878, %v1859
    %1893 = vst.msk [vmem:[#allocation2 + $0x70] sm:$0xff] %vm1878, %v1860
    %1894 = vst.msk [vmem:[#allocation2 + $0x78] sm:$0xff] %vm1878, %v1861
    %1895 = vst.msk [vmem:[#allocation2 + $0x80] sm:$0xff] %vm1878, %v1862
    %1896 = vst.msk [vmem:[#allocation2 + $0x88] sm:$0xff] %vm1878, %v1863
    %1897 = vst.msk [vmem:[#allocation2 + $0x90] sm:$0xff] %vm1878, %v1864
    %1898 = vst.msk [vmem:[#allocation2 + $0x98] sm:$0xff] %vm1878, %v1865
    %1899 = vst.msk [vmem:[#allocation2 + $0xa0] sm:$0xff] %vm1878, %v1866
    %1900 = vst.msk [vmem:[#allocation2 + $0xa8] sm:$0xff] %vm1878, %v1867
    %1901 = vst.msk [vmem:[#allocation2 + $0xb0] sm:$0xff] %vm1878, %v1868
    %1902 = vst.msk [vmem:[#allocation2 + $0xb8] sm:$0xff] %vm1878, %v1869
    %1903 = vst.msk [vmem:[#allocation2 + $0xc0] sm:$0xff] %vm1878, %v1870
    %1904 = vst.msk [vmem:[#allocation2 + $0xc8] sm:$0xff] %vm1878, %v1871
    %1905 = vst.msk [vmem:[#allocation2 + $0xd0] sm:$0xff] %vm1878, %v1872
    %1906 = vst.msk [vmem:[#allocation2 + $0xd8] sm:$0xff] %vm1878, %v1873
    %1907 = vst.msk [vmem:[#allocation2 + $0xe0] sm:$0xff] %vm1878, %v1874
    %1908 = vst.msk [vmem:[#allocation2 + $0xe8] sm:$0xff] %vm1878, %v1875
    %1909 = vst.msk [vmem:[#allocation2 + $0xf0] sm:$0xff] %vm1878, %v1876
    %1910 = vst.msk [vmem:[#allocation2 + $0xf8] sm:$0xff] %vm1878, %v1877
    %v1911 = vld [vmem:[#allocation2] ss:$2 sm:$0xff]
    %s1912 = scalar_lea.vmem [#allocation2], 16
    %v1913 = vld [vmem:[%s1912] ss:$2 sm:$0xff]
    %s1914 = scalar_lea.vmem [#allocation2], 32
    %v1915 = vld [vmem:[%s1914] ss:$2 sm:$0xff]
    %s1916 = scalar_lea.vmem [#allocation2], 48
    %v1917 = vld [vmem:[%s1916] ss:$2 sm:$0xff]
    %s1918 = scalar_lea.vmem [#allocation2], 64
    %v1919 = vld [vmem:[%s1918] ss:$2 sm:$0xff]
    %s1920 = scalar_lea.vmem [#allocation2], 80
    %v1921 = vld [vmem:[%s1920] ss:$2 sm:$0xff]
    %s1922 = scalar_lea.vmem [#allocation2], 96
    %v1923 = vld [vmem:[%s1922] ss:$2 sm:$0xff]
    %s1924 = scalar_lea.vmem [#allocation2], 112
    %v1925 = vld [vmem:[%s1924] ss:$2 sm:$0xff]
    %s1926 = scalar_lea.vmem [#allocation2], 128
    %v1927 = vld [vmem:[%s1926] ss:$2 sm:$0xff]
    %s1928 = scalar_lea.vmem [#allocation2], 144
    %v1929 = vld [vmem:[%s1928] ss:$2 sm:$0xff]
    %s1930 = scalar_lea.vmem [#allocation2], 160
    %v1931 = vld [vmem:[%s1930] ss:$2 sm:$0xff]
    %s1932 = scalar_lea.vmem [#allocation2], 176
    %v1933 = vld [vmem:[%s1932] ss:$2 sm:$0xff]
    %s1934 = scalar_lea.vmem [#allocation2], 192
    %v1935 = vld [vmem:[%s1934] ss:$2 sm:$0xff]
    %s1936 = scalar_lea.vmem [#allocation2], 208
    %v1937 = vld [vmem:[%s1936] ss:$2 sm:$0xff]
    %s1938 = scalar_lea.vmem [#allocation2], 224
    %v1939 = vld [vmem:[%s1938] ss:$2 sm:$0xff]
    %s1940 = scalar_lea.vmem [#allocation2], 240
    %v1941 = vld [vmem:[%s1940] ss:$2 sm:$0xff]
    %v1942 = vand.u32 %v79, 63
    %v1943 = vand.u32 %v80, 63
    %v1944 = vand.u32 %v81, 63
    %v1945 = vand.u32 %v82, 63
    %v1946 = vand.u32 %v83, 63
    %v1947 = vand.u32 %v84, 63
    %v1948 = vand.u32 %v85, 63
    %v1949 = vand.u32 %v86, 63
    %v1950 = vand.u32 %v87, 63
    %v1951 = vand.u32 %v88, 63
    %v1952 = vand.u32 %v89, 63
    %v1953 = vand.u32 %v90, 63
    %v1954 = vand.u32 %v91, 63
    %v1955 = vand.u32 %v92, 63
    %v1956 = vand.u32 %v93, 63
    %v1957 = vand.u32 %v94, 63
    %vm1958 = vcmp.eq.s32.totalorder %v1942, 0
    %vm1959 = vcmp.eq.s32.totalorder %v1943, 0
    %vm1960 = vcmp.eq.s32.totalorder %v1944, 0
    %vm1961 = vcmp.eq.s32.totalorder %v1945, 0
    %vm1962 = vcmp.eq.s32.totalorder %v1946, 0
    %vm1963 = vcmp.eq.s32.totalorder %v1947, 0
    %vm1964 = vcmp.eq.s32.totalorder %v1948, 0
    %vm1965 = vcmp.eq.s32.totalorder %v1949, 0
    %vm1966 = vcmp.eq.s32.totalorder %v1950, 0
    %vm1967 = vcmp.eq.s32.totalorder %v1951, 0
    %vm1968 = vcmp.eq.s32.totalorder %v1952, 0
    %vm1969 = vcmp.eq.s32.totalorder %v1953, 0
    %vm1970 = vcmp.eq.s32.totalorder %v1954, 0
    %vm1971 = vcmp.eq.s32.totalorder %v1955, 0
    %vm1972 = vcmp.eq.s32.totalorder %v1956, 0
    %vm1973 = vcmp.eq.s32.totalorder %v1957, 0
    %v1974 = vrot.slane %v1911, 7
    %v1975 = vrot.slane %v1913, 7
    %v1976 = vrot.slane %v1915, 7
    %v1977 = vrot.slane %v1917, 7
    %v1978 = vrot.slane %v1919, 7
    %v1979 = vrot.slane %v1921, 7
    %v1980 = vrot.slane %v1923, 7
    %v1981 = vrot.slane %v1925, 7
    %v1982 = vrot.slane %v1927, 7
    %v1983 = vrot.slane %v1929, 7
    %v1984 = vrot.slane %v1931, 7
    %v1985 = vrot.slane %v1933, 7
    %v1986 = vrot.slane %v1935, 7
    %v1987 = vrot.slane %v1937, 7
    %v1988 = vrot.slane %v1939, 7
    %v1989 = vrot.slane %v1941, 7
    %v1990 = vsel %vm207, %v1988, %v1989
    %v1991 = vsel %vm207, %v1987, %v1988
    %v1992 = vsel %vm207, %v1986, %v1987
    %v1993 = vsel %vm207, %v1985, %v1986
    %v1994 = vsel %vm207, %v1984, %v1985
    %v1995 = vsel %vm207, %v1983, %v1984
    %v1996 = vsel %vm207, %v1982, %v1983
    %v1997 = vsel %vm207, %v1981, %v1982
    %v1998 = vsel %vm207, %v1980, %v1981
    %v1999 = vsel %vm207, %v1979, %v1980
    %v2000 = vsel %vm207, %v1978, %v1979
    %v2001 = vsel %vm207, %v1977, %v1978
    %v2002 = vsel %vm207, %v1976, %v1977
    %v2003 = vsel %vm207, %v1975, %v1976
    %v2004 = vsel %vm207, %v1974, %v1975
    %v2005 = vsel %vm207, %v1989, %v1974
    %v2006 = vsel %vm1958, 0.0, %v2005
    %v2007 = vsel %vm1959, 0.0, %v2004
    %v2008 = vsel %vm1960, 0.0, %v2003
    %v2009 = vsel %vm1961, 0.0, %v2002
    %v2010 = vsel %vm1962, 0.0, %v2001
    %v2011 = vsel %vm1963, 0.0, %v2000
    %v2012 = vsel %vm1964, 0.0, %v1999
    %v2013 = vsel %vm1965, 0.0, %v1998
    %v2014 = vsel %vm1966, 0.0, %v1997
    %v2015 = vsel %vm1967, 0.0, %v1996
    %v2016 = vsel %vm1968, 0.0, %v1995
    %v2017 = vsel %vm1969, 0.0, %v1994
    %v2018 = vsel %vm1970, 0.0, %v1993
    %v2019 = vsel %vm1971, 0.0, %v1992
    %v2020 = vsel %vm1972, 0.0, %v1991
    %v2021 = vsel %vm1973, 0.0, %v1990
    %vm2022 = vcmp.eq.s32.totalorder %v1942, 63
    %vm2023 = vcmp.eq.s32.totalorder %v1943, 63
    %vm2024 = vcmp.eq.s32.totalorder %v1944, 63
    %vm2025 = vcmp.eq.s32.totalorder %v1945, 63
    %vm2026 = vcmp.eq.s32.totalorder %v1946, 63
    %vm2027 = vcmp.eq.s32.totalorder %v1947, 63
    %vm2028 = vcmp.eq.s32.totalorder %v1948, 63
    %vm2029 = vcmp.eq.s32.totalorder %v1949, 63
    %vm2030 = vcmp.eq.s32.totalorder %v1950, 63
    %vm2031 = vcmp.eq.s32.totalorder %v1951, 63
    %vm2032 = vcmp.eq.s32.totalorder %v1952, 63
    %vm2033 = vcmp.eq.s32.totalorder %v1953, 63
    %vm2034 = vcmp.eq.s32.totalorder %v1954, 63
    %vm2035 = vcmp.eq.s32.totalorder %v1955, 63
    %vm2036 = vcmp.eq.s32.totalorder %v1956, 63
    %vm2037 = vcmp.eq.s32.totalorder %v1957, 63
    %v2038 = vrot.slane %v1911, 1
    %v2039 = vrot.slane %v1913, 1
    %v2040 = vrot.slane %v1915, 1
    %v2041 = vrot.slane %v1917, 1
    %v2042 = vrot.slane %v1919, 1
    %v2043 = vrot.slane %v1921, 1
    %v2044 = vrot.slane %v1923, 1
    %v2045 = vrot.slane %v1925, 1
    %v2046 = vrot.slane %v1927, 1
    %v2047 = vrot.slane %v1929, 1
    %v2048 = vrot.slane %v1931, 1
    %v2049 = vrot.slane %v1933, 1
    %v2050 = vrot.slane %v1935, 1
    %v2051 = vrot.slane %v1937, 1
    %v2052 = vrot.slane %v1939, 1
    %v2053 = vrot.slane %v1941, 1
    %v2054 = vsel %vm336, %v2052, %v2053
    %v2055 = vsel %vm336, %v2051, %v2052
    %v2056 = vsel %vm336, %v2050, %v2051
    %v2057 = vsel %vm336, %v2049, %v2050
    %v2058 = vsel %vm336, %v2048, %v2049
    %v2059 = vsel %vm336, %v2047, %v2048
    %v2060 = vsel %vm336, %v2046, %v2047
    %v2061 = vsel %vm336, %v2045, %v2046
    %v2062 = vsel %vm336, %v2044, %v2045
    %v2063 = vsel %vm336, %v2043, %v2044
    %v2064 = vsel %vm336, %v2042, %v2043
    %v2065 = vsel %vm336, %v2041, %v2042
    %v2066 = vsel %vm336, %v2040, %v2041
    %v2067 = vsel %vm336, %v2039, %v2040
    %v2068 = vsel %vm336, %v2038, %v2039
    %v2069 = vsel %vm336, %v2053, %v2038
    %v2070 = vsel %vm2022, 0.0, %v2068
    %v2071 = vsel %vm2023, 0.0, %v2067
    %v2072 = vsel %vm2024, 0.0, %v2066
    %v2073 = vsel %vm2025, 0.0, %v2065
    %v2074 = vsel %vm2026, 0.0, %v2064
    %v2075 = vsel %vm2027, 0.0, %v2063
    %v2076 = vsel %vm2028, 0.0, %v2062
    %v2077 = vsel %vm2029, 0.0, %v2061
    %v2078 = vsel %vm2030, 0.0, %v2060
    %v2079 = vsel %vm2031, 0.0, %v2059
    %v2080 = vsel %vm2032, 0.0, %v2058
    %v2081 = vsel %vm2033, 0.0, %v2057
    %v2082 = vsel %vm2034, 0.0, %v2056
    %v2083 = vsel %vm2035, 0.0, %v2055
    %v2084 = vsel %vm2036, 0.0, %v2054
    %v2085 = vsel %vm2037, 0.0, %v2069
    %v2086 = vld [vmem:[%s3] sm:$0xff]
    %v2087 = vld [vmem:[%s3 + $0x8] sm:$0xff]
    %v2088 = vld [vmem:[%s3 + $0x10] sm:$0xff]
    %v2089 = vld [vmem:[%s3 + $0x18] sm:$0xff]
    %v2090 = vld [vmem:[%s3 + $0x20] sm:$0xff]
    %v2091 = vld [vmem:[%s3 + $0x28] sm:$0xff]
    %v2092 = vld [vmem:[%s3 + $0x30] sm:$0xff]
    %v2093 = vld [vmem:[%s3 + $0x38] sm:$0xff]
    %s2094 = scalar_lea.vmem %s3, 64
    %v2095 = vld [vmem:[%s2094] sm:$0xff]
    %v2096 = vld [vmem:[%s2094 + $0x8] sm:$0xff]
    %v2097 = vld [vmem:[%s2094 + $0x10] sm:$0xff]
    %v2098 = vld [vmem:[%s2094 + $0x18] sm:$0xff]
    %v2099 = vld [vmem:[%s2094 + $0x20] sm:$0xff]
    %v2100 = vld [vmem:[%s2094 + $0x28] sm:$0xff]
    %v2101 = vld [vmem:[%s2094 + $0x30] sm:$0xff]
    %v2102 = vld [vmem:[%s2094 + $0x38] sm:$0xff]
    %v2104 = vsel %vm1878, %v1911, 0
    %v2107 = vsel %vm1878, %v1913, 0
    %v2110 = vsel %vm1878, %v1915, 0
    %v2113 = vsel %vm1878, %v1917, 0
    %v2116 = vsel %vm1878, %v1919, 0
    %v2119 = vsel %vm1878, %v1921, 0
    %v2122 = vsel %vm1878, %v1923, 0
    %v2125 = vsel %vm1878, %v1925, 0
    %v2128 = vsel %vm1878, %v1927, 0
    %v2131 = vsel %vm1878, %v1929, 0
    %v2134 = vsel %vm1878, %v1931, 0
    %v2137 = vsel %vm1878, %v1933, 0
    %v2140 = vsel %vm1878, %v1935, 0
    %v2143 = vsel %vm1878, %v1937, 0
    %v2146 = vsel %vm1878, %v1939, 0
    %v2149 = vsel %vm1878, %v1941, 0
    %2151 = vmatprep.subr.mxu0 0.0
    %2152 = vmatpush1.msra.mxu0 0.0
    %2153 = vmatprep.subr.mxu0 0.0
    %2154 = vmatpush1.msra.mxu0 0.0
    %2155 = vmatprep.subr.mxu0 0.0
    %2156 = vmatpush1.msra.mxu0 0.0
    %2157 = vmatprep.subr.mxu0 0.0
    %2158 = vmatpush1.msra.mxu0 0.0
    %2159 = vmatprep.subr.mxu0 0.0
    %2160 = vmatpush1.msra.mxu0 0.0
    %2161 = vmatprep.subr.mxu0 0.0
    %2162 = vmatpush1.msra.mxu0 0.0
    %2163 = vmatprep.subr.mxu0 0.0
    %2164 = vmatpush1.msra.mxu0 0.0
    %2165 = vmatprep.subr.mxu0 0.0
    %2166 = vmatpush1.msra.mxu0 0.0
    %2167 = vmatprep.subr.mxu0 0.0
    %2168 = vmatpush1.msra.mxu0 %v2102
    %2169 = vmatprep.subr.mxu0 0.0
    %2170 = vmatpush1.msra.mxu0 %v2101
    %2171 = vmatprep.subr.mxu0 0.0
    %2172 = vmatpush1.msra.mxu0 %v2100
    %2173 = vmatprep.subr.mxu0 0.0
    %2174 = vmatpush1.msra.mxu0 %v2099
    %2175 = vmatprep.subr.mxu0 0.0
    %2176 = vmatpush1.msra.mxu0 %v2098
    %2177 = vmatprep.subr.mxu0 0.0
    %2178 = vmatpush1.msra.mxu0 %v2097
    %2179 = vmatprep.subr.mxu0 0.0
    %2180 = vmatpush1.msra.mxu0 %v2096
    %2181 = vmatprep.subr.mxu0 0.0
    %2182 = vmatpush1.msra.mxu0 %v2095
    %2183 = vmatprep.subr.mxu0 0.0
    %2184 = vmatpush2.msra.mxu0 0.0
    %2185 = vmatprep.subr.mxu0 0.0
    %2186 = vmatpush2.msra.mxu0 0.0
    %2187 = vmatprep.subr.mxu0 0.0
    %2188 = vmatpush2.msra.mxu0 0.0
    %2189 = vmatprep.subr.mxu0 0.0
    %2190 = vmatpush2.msra.mxu0 0.0
    %2191 = vmatprep.subr.mxu0 0.0
    %2192 = vmatpush2.msra.mxu0 0.0
    %2193 = vmatprep.subr.mxu0 0.0
    %2194 = vmatpush2.msra.mxu0 0.0
    %2195 = vmatprep.subr.mxu0 0.0
    %2196 = vmatpush2.msra.mxu0 0.0
    %2197 = vmatprep.subr.mxu0 0.0
    %2198 = vmatpush2.msra.mxu0 0.0
    %2199 = vmatprep.subr.mxu0 0.0
    %2200 = vmatpush2.msra.mxu0 0.0
    %2201 = vmatprep.subr.mxu0 0.0
    %2202 = vmatpush2.msra.mxu0 0.0
    %2203 = vmatprep.subr.mxu0 0.0
    %2204 = vmatpush2.msra.mxu0 0.0
    %2205 = vmatprep.subr.mxu0 0.0
    %2206 = vmatpush2.msra.mxu0 0.0
    %2207 = vmatprep.subr.mxu0 0.0
    %2208 = vmatpush2.msra.mxu0 0.0
    %2209 = vmatprep.subr.mxu0 0.0
    %2210 = vmatpush2.msra.mxu0 0.0
    %2211 = vmatprep.subr.mxu0 0.0
    %2212 = vmatpush2.msra.mxu0 0.0
    %2213 = vmatprep.subr.mxu0 0.0
    %2214 = vmatpush2.msra.mxu0 0.0
    %2215 = vmatprep.mubr.f32.mxu0 0.0
    %2216 = vmatmul.mubr.f32.gmra.mxu0 %v2104
    %v2217 = vpop.f32.mrf.mxu0
    %v2218 = vadd.f32 0.0, %v2217
    %v2219 = vpop.f32.mrf.mxu0
    %2220 = vmatprep.mubr.f32.mxu0 0.0
    %2221 = vmatmul.mubr.f32.gmra.mxu0 %v2107
    %v2222 = vpop.f32.mrf.mxu0
    %v2223 = vadd.f32 0.0, %v2222
    %v2224 = vpop.f32.mrf.mxu0
    %2225 = vmatprep.mubr.f32.mxu0 0.0
    %2226 = vmatmul.mubr.f32.gmra.mxu0 %v2110
    %v2227 = vpop.f32.mrf.mxu0
    %v2228 = vadd.f32 0.0, %v2227
    %v2229 = vpop.f32.mrf.mxu0
    %2230 = vmatprep.mubr.f32.mxu0 0.0
    %2231 = vmatmul.mubr.f32.gmra.mxu0 %v2113
    %v2232 = vpop.f32.mrf.mxu0
    %v2233 = vadd.f32 0.0, %v2232
    %v2234 = vpop.f32.mrf.mxu0
    %2235 = vmatprep.mubr.f32.mxu0 0.0
    %2236 = vmatmul.mubr.f32.gmra.mxu0 %v2116
    %v2237 = vpop.f32.mrf.mxu0
    %v2238 = vadd.f32 0.0, %v2237
    %v2239 = vpop.f32.mrf.mxu0
    %2240 = vmatprep.mubr.f32.mxu0 0.0
    %2241 = vmatmul.mubr.f32.gmra.mxu0 %v2119
    %v2242 = vpop.f32.mrf.mxu0
    %v2243 = vadd.f32 0.0, %v2242
    %v2244 = vpop.f32.mrf.mxu0
    %2245 = vmatprep.mubr.f32.mxu0 0.0
    %2246 = vmatmul.mubr.f32.gmra.mxu0 %v2122
    %v2247 = vpop.f32.mrf.mxu0
    %v2248 = vadd.f32 0.0, %v2247
    %v2249 = vpop.f32.mrf.mxu0
    %2250 = vmatprep.mubr.f32.mxu0 0.0
    %2251 = vmatmul.mubr.f32.gmra.mxu0 %v2125
    %v2252 = vpop.f32.mrf.mxu0
    %v2253 = vadd.f32 0.0, %v2252
    %v2254 = vpop.f32.mrf.mxu0
    %2255 = vmatprep.mubr.f32.mxu0 0.0
    %2256 = vmatmul.mubr.f32.gmra.mxu0 %v2128
    %v2257 = vpop.f32.mrf.mxu0
    %v2258 = vadd.f32 0.0, %v2257
    %v2259 = vpop.f32.mrf.mxu0
    %2260 = vmatprep.mubr.f32.mxu0 0.0
    %2261 = vmatmul.mubr.f32.gmra.mxu0 %v2131
    %v2262 = vpop.f32.mrf.mxu0
    %v2263 = vadd.f32 0.0, %v2262
    %v2264 = vpop.f32.mrf.mxu0
    %2265 = vmatprep.mubr.f32.mxu0 0.0
    %2266 = vmatmul.mubr.f32.gmra.mxu0 %v2134
    %v2267 = vpop.f32.mrf.mxu0
    %v2268 = vadd.f32 0.0, %v2267
    %v2269 = vpop.f32.mrf.mxu0
    %2270 = vmatprep.mubr.f32.mxu0 0.0
    %2271 = vmatmul.mubr.f32.gmra.mxu0 %v2137
    %v2272 = vpop.f32.mrf.mxu0
    %v2273 = vadd.f32 0.0, %v2272
    %v2274 = vpop.f32.mrf.mxu0
    %2275 = vmatprep.mubr.f32.mxu0 0.0
    %2276 = vmatmul.mubr.f32.gmra.mxu0 %v2140
    %v2277 = vpop.f32.mrf.mxu0
    %v2278 = vadd.f32 0.0, %v2277
    %v2279 = vpop.f32.mrf.mxu0
    %2280 = vmatprep.mubr.f32.mxu0 0.0
    %2281 = vmatmul.mubr.f32.gmra.mxu0 %v2143
    %v2282 = vpop.f32.mrf.mxu0
    %v2283 = vadd.f32 0.0, %v2282
    %v2284 = vpop.f32.mrf.mxu0
    %2285 = vmatprep.mubr.f32.mxu0 0.0
    %2286 = vmatmul.mubr.f32.gmra.mxu0 %v2146
    %v2287 = vpop.f32.mrf.mxu0
    %v2288 = vadd.f32 0.0, %v2287
    %v2289 = vpop.f32.mrf.mxu0
    %2290 = vmatprep.mubr.f32.mxu0 0.0
    %2291 = vmatmul.mubr.f32.gmra.mxu0 %v2149
    %v2292 = vpop.f32.mrf.mxu0
    %v2293 = vadd.f32 0.0, %v2292
    %v2294 = vpop.f32.mrf.mxu0
    %2295 = vdwg.mxu0
    %v2297 = vsel %vm1878, %v2006, 0
    %v2300 = vsel %vm1878, %v2007, 0
    %v2303 = vsel %vm1878, %v2008, 0
    %v2306 = vsel %vm1878, %v2009, 0
    %v2309 = vsel %vm1878, %v2010, 0
    %v2312 = vsel %vm1878, %v2011, 0
    %v2315 = vsel %vm1878, %v2012, 0
    %v2318 = vsel %vm1878, %v2013, 0
    %v2321 = vsel %vm1878, %v2014, 0
    %v2324 = vsel %vm1878, %v2015, 0
    %v2327 = vsel %vm1878, %v2016, 0
    %v2330 = vsel %vm1878, %v2017, 0
    %v2333 = vsel %vm1878, %v2018, 0
    %v2336 = vsel %vm1878, %v2019, 0
    %v2339 = vsel %vm1878, %v2020, 0
    %v2342 = vsel %vm1878, %v2021, 0
    %2344 = vmatprep.subr.mxu0 0.0
    %2345 = vmatpush1.msra.mxu0 0.0
    %2346 = vmatprep.subr.mxu0 0.0
    %2347 = vmatpush1.msra.mxu0 0.0
    %2348 = vmatprep.subr.mxu0 0.0
    %2349 = vmatpush1.msra.mxu0 0.0
    %2350 = vmatprep.subr.mxu0 0.0
    %2351 = vmatpush1.msra.mxu0 0.0
    %2352 = vmatprep.subr.mxu0 0.0
    %2353 = vmatpush1.msra.mxu0 0.0
    %2354 = vmatprep.subr.mxu0 0.0
    %2355 = vmatpush1.msra.mxu0 0.0
    %2356 = vmatprep.subr.mxu0 0.0
    %2357 = vmatpush1.msra.mxu0 0.0
    %2358 = vmatprep.subr.mxu0 0.0
    %2359 = vmatpush1.msra.mxu0 0.0
    %2360 = vmatprep.subr.mxu0 0.0
    %2361 = vmatpush1.msra.mxu0 %v2093
    %2362 = vmatprep.subr.mxu0 0.0
    %2363 = vmatpush1.msra.mxu0 %v2092
    %2364 = vmatprep.subr.mxu0 0.0
    %2365 = vmatpush1.msra.mxu0 %v2091
    %2366 = vmatprep.subr.mxu0 0.0
    %2367 = vmatpush1.msra.mxu0 %v2090
    %2368 = vmatprep.subr.mxu0 0.0
    %2369 = vmatpush1.msra.mxu0 %v2089
    %2370 = vmatprep.subr.mxu0 0.0
    %2371 = vmatpush1.msra.mxu0 %v2088
    %2372 = vmatprep.subr.mxu0 0.0
    %2373 = vmatpush1.msra.mxu0 %v2087
    %2374 = vmatprep.subr.mxu0 0.0
    %2375 = vmatpush1.msra.mxu0 %v2086
    %2376 = vmatprep.subr.mxu0 0.0
    %2377 = vmatpush2.msra.mxu0 0.0
    %2378 = vmatprep.subr.mxu0 0.0
    %2379 = vmatpush2.msra.mxu0 0.0
    %2380 = vmatprep.subr.mxu0 0.0
    %2381 = vmatpush2.msra.mxu0 0.0
    %2382 = vmatprep.subr.mxu0 0.0
    %2383 = vmatpush2.msra.mxu0 0.0
    %2384 = vmatprep.subr.mxu0 0.0
    %2385 = vmatpush2.msra.mxu0 0.0
    %2386 = vmatprep.subr.mxu0 0.0
    %2387 = vmatpush2.msra.mxu0 0.0
    %2388 = vmatprep.subr.mxu0 0.0
    %2389 = vmatpush2.msra.mxu0 0.0
    %2390 = vmatprep.subr.mxu0 0.0
    %2391 = vmatpush2.msra.mxu0 0.0
    %2392 = vmatprep.subr.mxu0 0.0
    %2393 = vmatpush2.msra.mxu0 0.0
    %2394 = vmatprep.subr.mxu0 0.0
    %2395 = vmatpush2.msra.mxu0 0.0
    %2396 = vmatprep.subr.mxu0 0.0
    %2397 = vmatpush2.msra.mxu0 0.0
    %2398 = vmatprep.subr.mxu0 0.0
    %2399 = vmatpush2.msra.mxu0 0.0
    %2400 = vmatprep.subr.mxu0 0.0
    %2401 = vmatpush2.msra.mxu0 0.0
    %2402 = vmatprep.subr.mxu0 0.0
    %2403 = vmatpush2.msra.mxu0 0.0
    %2404 = vmatprep.subr.mxu0 0.0
    %2405 = vmatpush2.msra.mxu0 0.0
    %2406 = vmatprep.subr.mxu0 0.0
    %2407 = vmatpush2.msra.mxu0 0.0
    %2408 = vmatprep.mubr.f32.mxu0 0.0
    %2409 = vmatmul.mubr.f32.gmra.mxu0 %v2297
    %v2410 = vpop.f32.mrf.mxu0
    %v2411 = vadd.f32 %v2218, %v2410
    %v2412 = vpop.f32.mrf.mxu0
    %2413 = vmatprep.mubr.f32.mxu0 0.0
    %2414 = vmatmul.mubr.f32.gmra.mxu0 %v2300
    %v2415 = vpop.f32.mrf.mxu0
    %v2416 = vadd.f32 %v2223, %v2415
    %v2417 = vpop.f32.mrf.mxu0
    %2418 = vmatprep.mubr.f32.mxu0 0.0
    %2419 = vmatmul.mubr.f32.gmra.mxu0 %v2303
    %v2420 = vpop.f32.mrf.mxu0
    %v2421 = vadd.f32 %v2228, %v2420
    %v2422 = vpop.f32.mrf.mxu0
    %2423 = vmatprep.mubr.f32.mxu0 0.0
    %2424 = vmatmul.mubr.f32.gmra.mxu0 %v2306
    %v2425 = vpop.f32.mrf.mxu0
    %v2426 = vadd.f32 %v2233, %v2425
    %v2427 = vpop.f32.mrf.mxu0
    %2428 = vmatprep.mubr.f32.mxu0 0.0
    %2429 = vmatmul.mubr.f32.gmra.mxu0 %v2309
    %v2430 = vpop.f32.mrf.mxu0
    %v2431 = vadd.f32 %v2238, %v2430
    %v2432 = vpop.f32.mrf.mxu0
    %2433 = vmatprep.mubr.f32.mxu0 0.0
    %2434 = vmatmul.mubr.f32.gmra.mxu0 %v2312
    %v2435 = vpop.f32.mrf.mxu0
    %v2436 = vadd.f32 %v2243, %v2435
    %v2437 = vpop.f32.mrf.mxu0
    %2438 = vmatprep.mubr.f32.mxu0 0.0
    %2439 = vmatmul.mubr.f32.gmra.mxu0 %v2315
    %v2440 = vpop.f32.mrf.mxu0
    %v2441 = vadd.f32 %v2248, %v2440
    %v2442 = vpop.f32.mrf.mxu0
    %2443 = vmatprep.mubr.f32.mxu0 0.0
    %2444 = vmatmul.mubr.f32.gmra.mxu0 %v2318
    %v2445 = vpop.f32.mrf.mxu0
    %v2446 = vadd.f32 %v2253, %v2445
    %v2447 = vpop.f32.mrf.mxu0
    %2448 = vmatprep.mubr.f32.mxu0 0.0
    %2449 = vmatmul.mubr.f32.gmra.mxu0 %v2321
    %v2450 = vpop.f32.mrf.mxu0
    %v2451 = vadd.f32 %v2258, %v2450
    %v2452 = vpop.f32.mrf.mxu0
    %2453 = vmatprep.mubr.f32.mxu0 0.0
    %2454 = vmatmul.mubr.f32.gmra.mxu0 %v2324
    %v2455 = vpop.f32.mrf.mxu0
    %v2456 = vadd.f32 %v2263, %v2455
    %v2457 = vpop.f32.mrf.mxu0
    %2458 = vmatprep.mubr.f32.mxu0 0.0
    %2459 = vmatmul.mubr.f32.gmra.mxu0 %v2327
    %v2460 = vpop.f32.mrf.mxu0
    %v2461 = vadd.f32 %v2268, %v2460
    %v2462 = vpop.f32.mrf.mxu0
    %2463 = vmatprep.mubr.f32.mxu0 0.0
    %2464 = vmatmul.mubr.f32.gmra.mxu0 %v2330
    %v2465 = vpop.f32.mrf.mxu0
    %v2466 = vadd.f32 %v2273, %v2465
    %v2467 = vpop.f32.mrf.mxu0
    %2468 = vmatprep.mubr.f32.mxu0 0.0
    %2469 = vmatmul.mubr.f32.gmra.mxu0 %v2333
    %v2470 = vpop.f32.mrf.mxu0
    %v2471 = vadd.f32 %v2278, %v2470
    %v2472 = vpop.f32.mrf.mxu0
    %2473 = vmatprep.mubr.f32.mxu0 0.0
    %2474 = vmatmul.mubr.f32.gmra.mxu0 %v2336
    %v2475 = vpop.f32.mrf.mxu0
    %v2476 = vadd.f32 %v2283, %v2475
    %v2477 = vpop.f32.mrf.mxu0
    %2478 = vmatprep.mubr.f32.mxu0 0.0
    %2479 = vmatmul.mubr.f32.gmra.mxu0 %v2339
    %v2480 = vpop.f32.mrf.mxu0
    %v2481 = vadd.f32 %v2288, %v2480
    %v2482 = vpop.f32.mrf.mxu0
    %2483 = vmatprep.mubr.f32.mxu0 0.0
    %2484 = vmatmul.mubr.f32.gmra.mxu0 %v2342
    %v2485 = vpop.f32.mrf.mxu0
    %v2486 = vadd.f32 %v2293, %v2485
    %v2487 = vpop.f32.mrf.mxu0
    %2488 = vdwg.mxu0
    %s2489 = scalar_lea.vmem %s3, 128
    %v2490 = vld [vmem:[%s2489] sm:$0xff]
    %v2491 = vld [vmem:[%s2489 + $0x8] sm:$0xff]
    %v2492 = vld [vmem:[%s2489 + $0x10] sm:$0xff]
    %v2493 = vld [vmem:[%s2489 + $0x18] sm:$0xff]
    %v2494 = vld [vmem:[%s2489 + $0x20] sm:$0xff]
    %v2495 = vld [vmem:[%s2489 + $0x28] sm:$0xff]
    %v2496 = vld [vmem:[%s2489 + $0x30] sm:$0xff]
    %v2497 = vld [vmem:[%s2489 + $0x38] sm:$0xff]
    %v2499 = vsel %vm1878, %v2070, 0
    %v2502 = vsel %vm1878, %v2071, 0
    %v2505 = vsel %vm1878, %v2072, 0
    %v2508 = vsel %vm1878, %v2073, 0
    %v2511 = vsel %vm1878, %v2074, 0
    %v2514 = vsel %vm1878, %v2075, 0
    %v2517 = vsel %vm1878, %v2076, 0
    %v2520 = vsel %vm1878, %v2077, 0
    %v2523 = vsel %vm1878, %v2078, 0
    %v2526 = vsel %vm1878, %v2079, 0
    %v2529 = vsel %vm1878, %v2080, 0
    %v2532 = vsel %vm1878, %v2081, 0
    %v2535 = vsel %vm1878, %v2082, 0
    %v2538 = vsel %vm1878, %v2083, 0
    %v2541 = vsel %vm1878, %v2084, 0
    %v2544 = vsel %vm1878, %v2085, 0
    %2546 = vmatprep.subr.mxu0 0.0
    %2547 = vmatpush1.msra.mxu0 0.0
    %2548 = vmatprep.subr.mxu0 0.0
    %2549 = vmatpush1.msra.mxu0 0.0
    %2550 = vmatprep.subr.mxu0 0.0
    %2551 = vmatpush1.msra.mxu0 0.0
    %2552 = vmatprep.subr.mxu0 0.0
    %2553 = vmatpush1.msra.mxu0 0.0
    %2554 = vmatprep.subr.mxu0 0.0
    %2555 = vmatpush1.msra.mxu0 0.0
    %2556 = vmatprep.subr.mxu0 0.0
    %2557 = vmatpush1.msra.mxu0 0.0
    %2558 = vmatprep.subr.mxu0 0.0
    %2559 = vmatpush1.msra.mxu0 0.0
    %2560 = vmatprep.subr.mxu0 0.0
    %2561 = vmatpush1.msra.mxu0 0.0
    %2562 = vmatprep.subr.mxu0 0.0
    %2563 = vmatpush1.msra.mxu0 %v2497
    %2564 = vmatprep.subr.mxu0 0.0
    %2565 = vmatpush1.msra.mxu0 %v2496
    %2566 = vmatprep.subr.mxu0 0.0
    %2567 = vmatpush1.msra.mxu0 %v2495
    %2568 = vmatprep.subr.mxu0 0.0
    %2569 = vmatpush1.msra.mxu0 %v2494
    %2570 = vmatprep.subr.mxu0 0.0
    %2571 = vmatpush1.msra.mxu0 %v2493
    %2572 = vmatprep.subr.mxu0 0.0
    %2573 = vmatpush1.msra.mxu0 %v2492
    %2574 = vmatprep.subr.mxu0 0.0
    %2575 = vmatpush1.msra.mxu0 %v2491
    %2576 = vmatprep.subr.mxu0 0.0
    %2577 = vmatpush1.msra.mxu0 %v2490
    %2578 = vmatprep.subr.mxu0 0.0
    %2579 = vmatpush2.msra.mxu0 0.0
    %2580 = vmatprep.subr.mxu0 0.0
    %2581 = vmatpush2.msra.mxu0 0.0
    %2582 = vmatprep.subr.mxu0 0.0
    %2583 = vmatpush2.msra.mxu0 0.0
    %2584 = vmatprep.subr.mxu0 0.0
    %2585 = vmatpush2.msra.mxu0 0.0
    %2586 = vmatprep.subr.mxu0 0.0
    %2587 = vmatpush2.msra.mxu0 0.0
    %2588 = vmatprep.subr.mxu0 0.0
    %2589 = vmatpush2.msra.mxu0 0.0
    %2590 = vmatprep.subr.mxu0 0.0
    %2591 = vmatpush2.msra.mxu0 0.0
    %2592 = vmatprep.subr.mxu0 0.0
    %2593 = vmatpush2.msra.mxu0 0.0
    %2594 = vmatprep.subr.mxu0 0.0
    %2595 = vmatpush2.msra.mxu0 0.0
    %2596 = vmatprep.subr.mxu0 0.0
    %2597 = vmatpush2.msra.mxu0 0.0
    %2598 = vmatprep.subr.mxu0 0.0
    %2599 = vmatpush2.msra.mxu0 0.0
    %2600 = vmatprep.subr.mxu0 0.0
    %2601 = vmatpush2.msra.mxu0 0.0
    %2602 = vmatprep.subr.mxu0 0.0
    %2603 = vmatpush2.msra.mxu0 0.0
    %2604 = vmatprep.subr.mxu0 0.0
    %2605 = vmatpush2.msra.mxu0 0.0
    %2606 = vmatprep.subr.mxu0 0.0
    %2607 = vmatpush2.msra.mxu0 0.0
    %2608 = vmatprep.subr.mxu0 0.0
    %2609 = vmatpush2.msra.mxu0 0.0
    %2610 = vmatprep.mubr.f32.mxu0 0.0
    %2611 = vmatmul.mubr.f32.gmra.mxu0 %v2499
    %v2612 = vpop.f32.mrf.mxu0
    %v2613 = vadd.f32 0.0, %v2612
    %v2614 = vpop.f32.mrf.mxu0
    %2615 = vmatprep.mubr.f32.mxu0 0.0
    %2616 = vmatmul.mubr.f32.gmra.mxu0 %v2502
    %v2617 = vpop.f32.mrf.mxu0
    %v2618 = vadd.f32 0.0, %v2617
    %v2619 = vpop.f32.mrf.mxu0
    %2620 = vmatprep.mubr.f32.mxu0 0.0
    %2621 = vmatmul.mubr.f32.gmra.mxu0 %v2505
    %v2622 = vpop.f32.mrf.mxu0
    %v2623 = vadd.f32 0.0, %v2622
    %v2624 = vpop.f32.mrf.mxu0
    %2625 = vmatprep.mubr.f32.mxu0 0.0
    %2626 = vmatmul.mubr.f32.gmra.mxu0 %v2508
    %v2627 = vpop.f32.mrf.mxu0
    %v2628 = vadd.f32 0.0, %v2627
    %v2629 = vpop.f32.mrf.mxu0
    %2630 = vmatprep.mubr.f32.mxu0 0.0
    %2631 = vmatmul.mubr.f32.gmra.mxu0 %v2511
    %v2632 = vpop.f32.mrf.mxu0
    %v2633 = vadd.f32 0.0, %v2632
    %v2634 = vpop.f32.mrf.mxu0
    %2635 = vmatprep.mubr.f32.mxu0 0.0
    %2636 = vmatmul.mubr.f32.gmra.mxu0 %v2514
    %v2637 = vpop.f32.mrf.mxu0
    %v2638 = vadd.f32 0.0, %v2637
    %v2639 = vpop.f32.mrf.mxu0
    %2640 = vmatprep.mubr.f32.mxu0 0.0
    %2641 = vmatmul.mubr.f32.gmra.mxu0 %v2517
    %v2642 = vpop.f32.mrf.mxu0
    %v2643 = vadd.f32 0.0, %v2642
    %v2644 = vpop.f32.mrf.mxu0
    %2645 = vmatprep.mubr.f32.mxu0 0.0
    %2646 = vmatmul.mubr.f32.gmra.mxu0 %v2520
    %v2647 = vpop.f32.mrf.mxu0
    %v2648 = vadd.f32 0.0, %v2647
    %v2649 = vpop.f32.mrf.mxu0
    %2650 = vmatprep.mubr.f32.mxu0 0.0
    %2651 = vmatmul.mubr.f32.gmra.mxu0 %v2523
    %v2652 = vpop.f32.mrf.mxu0
    %v2653 = vadd.f32 0.0, %v2652
    %v2654 = vpop.f32.mrf.mxu0
    %2655 = vmatprep.mubr.f32.mxu0 0.0
    %2656 = vmatmul.mubr.f32.gmra.mxu0 %v2526
    %v2657 = vpop.f32.mrf.mxu0
    %v2658 = vadd.f32 0.0, %v2657
    %v2659 = vpop.f32.mrf.mxu0
    %2660 = vmatprep.mubr.f32.mxu0 0.0
    %2661 = vmatmul.mubr.f32.gmra.mxu0 %v2529
    %v2662 = vpop.f32.mrf.mxu0
    %v2663 = vadd.f32 0.0, %v2662
    %v2664 = vpop.f32.mrf.mxu0
    %2665 = vmatprep.mubr.f32.mxu0 0.0
    %2666 = vmatmul.mubr.f32.gmra.mxu0 %v2532
    %v2667 = vpop.f32.mrf.mxu0
    %v2668 = vadd.f32 0.0, %v2667
    %v2669 = vpop.f32.mrf.mxu0
    %2670 = vmatprep.mubr.f32.mxu0 0.0
    %2671 = vmatmul.mubr.f32.gmra.mxu0 %v2535
    %v2672 = vpop.f32.mrf.mxu0
    %v2673 = vadd.f32 0.0, %v2672
    %v2674 = vpop.f32.mrf.mxu0
    %2675 = vmatprep.mubr.f32.mxu0 0.0
    %2676 = vmatmul.mubr.f32.gmra.mxu0 %v2538
    %v2677 = vpop.f32.mrf.mxu0
    %v2678 = vadd.f32 0.0, %v2677
    %v2679 = vpop.f32.mrf.mxu0
    %2680 = vmatprep.mubr.f32.mxu0 0.0
    %2681 = vmatmul.mubr.f32.gmra.mxu0 %v2541
    %v2682 = vpop.f32.mrf.mxu0
    %v2683 = vadd.f32 0.0, %v2682
    %v2684 = vpop.f32.mrf.mxu0
    %2685 = vmatprep.mubr.f32.mxu0 0.0
    %2686 = vmatmul.mubr.f32.gmra.mxu0 %v2544
    %v2687 = vpop.f32.mrf.mxu0
    %v2688 = vadd.f32 0.0, %v2687
    %v2689 = vpop.f32.mrf.mxu0
    %2690 = vdwg.mxu0
    %v2691 = vadd.f32 %v2411, %v2613
    %v2692 = vadd.f32 %v2416, %v2618
    %v2693 = vadd.f32 %v2421, %v2623
    %v2694 = vadd.f32 %v2426, %v2628
    %v2695 = vadd.f32 %v2431, %v2633
    %v2696 = vadd.f32 %v2436, %v2638
    %v2697 = vadd.f32 %v2441, %v2643
    %v2698 = vadd.f32 %v2446, %v2648
    %v2699 = vadd.f32 %v2451, %v2653
    %v2700 = vadd.f32 %v2456, %v2658
    %v2701 = vadd.f32 %v2461, %v2663
    %v2702 = vadd.f32 %v2466, %v2668
    %v2703 = vadd.f32 %v2471, %v2673
    %v2704 = vadd.f32 %v2476, %v2678
    %v2705 = vadd.f32 %v2481, %v2683
    %v2706 = vadd.f32 %v2486, %v2688
    %v2707 = vld [vmem:[%s4] sm:$0x1]
    %v2709 = vlaneseq
    %v2710 = vshrl.u32 %v2709, 7
    %v2711 = vsub.s32 0, %v2710
    %v2712 = vrot.slane %v2707, %v2711
    %v2714 = vadd.f32 %v2691, %v2712
    %v2715 = vadd.f32 %v2692, %v2712
    %v2716 = vadd.f32 %v2693, %v2712
    %v2717 = vadd.f32 %v2694, %v2712
    %v2718 = vadd.f32 %v2695, %v2712
    %v2719 = vadd.f32 %v2696, %v2712
    %v2720 = vadd.f32 %v2697, %v2712
    %v2721 = vadd.f32 %v2698, %v2712
    %v2722 = vadd.f32 %v2699, %v2712
    %v2723 = vadd.f32 %v2700, %v2712
    %v2724 = vadd.f32 %v2701, %v2712
    %v2725 = vadd.f32 %v2702, %v2712
    %v2726 = vadd.f32 %v2703, %v2712
    %v2727 = vadd.f32 %v2704, %v2712
    %v2728 = vadd.f32 %v2705, %v2712
    %v2729 = vadd.f32 %v2706, %v2712
    %vm2730 = vcmp.gt.f32.partialorder %v2714, 0.0
    %vm2731 = vcmp.gt.f32.partialorder %v2715, 0.0
    %vm2732 = vcmp.gt.f32.partialorder %v2716, 0.0
    %vm2733 = vcmp.gt.f32.partialorder %v2717, 0.0
    %vm2734 = vcmp.gt.f32.partialorder %v2718, 0.0
    %vm2735 = vcmp.gt.f32.partialorder %v2719, 0.0
    %vm2736 = vcmp.gt.f32.partialorder %v2720, 0.0
    %vm2737 = vcmp.gt.f32.partialorder %v2721, 0.0
    %vm2738 = vcmp.gt.f32.partialorder %v2722, 0.0
    %vm2739 = vcmp.gt.f32.partialorder %v2723, 0.0
    %vm2740 = vcmp.gt.f32.partialorder %v2724, 0.0
    %vm2741 = vcmp.gt.f32.partialorder %v2725, 0.0
    %vm2742 = vcmp.gt.f32.partialorder %v2726, 0.0
    %vm2743 = vcmp.gt.f32.partialorder %v2727, 0.0
    %vm2744 = vcmp.gt.f32.partialorder %v2728, 0.0
    %vm2745 = vcmp.gt.f32.partialorder %v2729, 0.0
    %v2746 = vmul.f32 %v2714, 0.01
    %v2747 = vmul.f32 %v2715, 0.01
    %v2748 = vmul.f32 %v2716, 0.01
    %v2749 = vmul.f32 %v2717, 0.01
    %v2750 = vmul.f32 %v2718, 0.01
    %v2751 = vmul.f32 %v2719, 0.01
    %v2752 = vmul.f32 %v2720, 0.01
    %v2753 = vmul.f32 %v2721, 0.01
    %v2754 = vmul.f32 %v2722, 0.01
    %v2755 = vmul.f32 %v2723, 0.01
    %v2756 = vmul.f32 %v2724, 0.01
    %v2757 = vmul.f32 %v2725, 0.01
    %v2758 = vmul.f32 %v2726, 0.01
    %v2759 = vmul.f32 %v2727, 0.01
    %v2760 = vmul.f32 %v2728, 0.01
    %v2761 = vmul.f32 %v2729, 0.01
    %v2762 = vsel %vm2730, %v2714, %v2746
    %v2763 = vsel %vm2731, %v2715, %v2747
    %v2764 = vsel %vm2732, %v2716, %v2748
    %v2765 = vsel %vm2733, %v2717, %v2749
    %v2766 = vsel %vm2734, %v2718, %v2750
    %v2767 = vsel %vm2735, %v2719, %v2751
    %v2768 = vsel %vm2736, %v2720, %v2752
    %v2769 = vsel %vm2737, %v2721, %v2753
    %v2770 = vsel %vm2738, %v2722, %v2754
    %v2771 = vsel %vm2739, %v2723, %v2755
    %v2772 = vsel %vm2740, %v2724, %v2756
    %v2773 = vsel %vm2741, %v2725, %v2757
    %v2774 = vsel %vm2742, %v2726, %v2758
    %v2775 = vsel %vm2743, %v2727, %v2759
    %v2776 = vsel %vm2744, %v2728, %v2760
    %v2777 = vsel %vm2745, %v2729, %v2761
    %v2778 = vrot.slane %v2762, 1
    %v2779 = vrot.slane %v2763, 1
    %v2780 = vrot.slane %v2764, 1
    %v2781 = vrot.slane %v2765, 1
    %v2782 = vrot.slane %v2766, 1
    %v2783 = vrot.slane %v2767, 1
    %v2784 = vrot.slane %v2768, 1
    %v2785 = vrot.slane %v2769, 1
    %v2786 = vrot.slane %v2770, 1
    %v2787 = vrot.slane %v2771, 1
    %v2788 = vrot.slane %v2772, 1
    %v2789 = vrot.slane %v2773, 1
    %v2790 = vrot.slane %v2774, 1
    %v2791 = vrot.slane %v2775, 1
    %v2792 = vrot.slane %v2776, 1
    %v2793 = vrot.slane %v2777, 1
    %v2794 = vsel %vm336, %v2792, %v2793
    %v2795 = vsel %vm336, %v2791, %v2792
    %v2796 = vsel %vm336, %v2790, %v2791
    %v2797 = vsel %vm336, %v2789, %v2790
    %v2798 = vsel %vm336, %v2788, %v2789
    %v2799 = vsel %vm336, %v2787, %v2788
    %v2800 = vsel %vm336, %v2786, %v2787
    %v2801 = vsel %vm336, %v2785, %v2786
    %v2802 = vsel %vm336, %v2784, %v2785
    %v2803 = vsel %vm336, %v2783, %v2784
    %v2804 = vsel %vm336, %v2782, %v2783
    %v2805 = vsel %vm336, %v2781, %v2782
    %v2806 = vsel %vm336, %v2780, %v2781
    %v2807 = vsel %vm336, %v2779, %v2780
    %v2808 = vsel %vm336, %v2778, %v2779
    %v2809 = vsel %vm336, %v2793, %v2778
    %v2810 = vmax.f32 %v2762, %v2808
    %v2811 = vmax.f32 %v2763, %v2807
    %v2812 = vmax.f32 %v2764, %v2806
    %v2813 = vmax.f32 %v2765, %v2805
    %v2814 = vmax.f32 %v2766, %v2804
    %v2815 = vmax.f32 %v2767, %v2803
    %v2816 = vmax.f32 %v2768, %v2802
    %v2817 = vmax.f32 %v2769, %v2801
    %v2818 = vmax.f32 %v2770, %v2800
    %v2819 = vmax.f32 %v2771, %v2799
    %v2820 = vmax.f32 %v2772, %v2798
    %v2821 = vmax.f32 %v2773, %v2797
    %v2822 = vmax.f32 %v2774, %v2796
    %v2823 = vmax.f32 %v2775, %v2795
    %v2824 = vmax.f32 %v2776, %v2794
    %v2825 = vmax.f32 %v2777, %v2809
    %vm2826 = vcmask 261120
    %2827 = vst.msk [vmem:[#allocation3] sm:$0xff] %vm2826, %v2810
    %2828 = vst.msk [vmem:[#allocation3 + $0x8] sm:$0xff] %vm2826, %v2811
    %2829 = vst.msk [vmem:[#allocation3 + $0x10] sm:$0xff] %vm2826, %v2812
    %2830 = vst.msk [vmem:[#allocation3 + $0x18] sm:$0xff] %vm2826, %v2813
    %2831 = vst.msk [vmem:[#allocation3 + $0x20] sm:$0xff] %vm2826, %v2814
    %2832 = vst.msk [vmem:[#allocation3 + $0x28] sm:$0xff] %vm2826, %v2815
    %2833 = vst.msk [vmem:[#allocation3 + $0x30] sm:$0xff] %vm2826, %v2816
    %2834 = vst.msk [vmem:[#allocation3 + $0x38] sm:$0xff] %vm2826, %v2817
    %2835 = vst.msk [vmem:[#allocation3 + $0x40] sm:$0xff] %vm2826, %v2818
    %2836 = vst.msk [vmem:[#allocation3 + $0x48] sm:$0xff] %vm2826, %v2819
    %2837 = vst.msk [vmem:[#allocation3 + $0x50] sm:$0xff] %vm2826, %v2820
    %2838 = vst.msk [vmem:[#allocation3 + $0x58] sm:$0xff] %vm2826, %v2821
    %2839 = vst.msk [vmem:[#allocation3 + $0x60] sm:$0xff] %vm2826, %v2822
    %2840 = vst.msk [vmem:[#allocation3 + $0x68] sm:$0xff] %vm2826, %v2823
    %2841 = vst.msk [vmem:[#allocation3 + $0x70] sm:$0xff] %vm2826, %v2824
    %2842 = vst.msk [vmem:[#allocation3 + $0x78] sm:$0xff] %vm2826, %v2825
    %v2843 = vld [vmem:[#allocation3] ss:$2 sm:$0xff]
    %s2844 = scalar_lea.vmem [#allocation3], 16
    %v2845 = vld [vmem:[%s2844] ss:$2 sm:$0xff]
    %s2846 = scalar_lea.vmem [#allocation3], 32
    %v2847 = vld [vmem:[%s2846] ss:$2 sm:$0xff]
    %s2848 = scalar_lea.vmem [#allocation3], 48
    %v2849 = vld [vmem:[%s2848] ss:$2 sm:$0xff]
    %s2850 = scalar_lea.vmem [#allocation3], 64
    %v2851 = vld [vmem:[%s2850] ss:$2 sm:$0xff]
    %s2852 = scalar_lea.vmem [#allocation3], 80
    %v2853 = vld [vmem:[%s2852] ss:$2 sm:$0xff]
    %s2854 = scalar_lea.vmem [#allocation3], 96
    %v2855 = vld [vmem:[%s2854] ss:$2 sm:$0xff]
    %s2856 = scalar_lea.vmem [#allocation3], 112
    %v2857 = vld [vmem:[%s2856] ss:$2 sm:$0xff]
    %v2858 = vand.u32 %v79, 31
    %v2859 = vand.u32 %v80, 31
    %v2860 = vand.u32 %v81, 31
    %v2861 = vand.u32 %v82, 31
    %v2862 = vand.u32 %v83, 31
    %v2863 = vand.u32 %v84, 31
    %v2864 = vand.u32 %v85, 31
    %v2865 = vand.u32 %v86, 31
    %vm2866 = vcmp.eq.s32.totalorder %v2858, 0
    %vm2867 = vcmp.eq.s32.totalorder %v2859, 0
    %vm2868 = vcmp.eq.s32.totalorder %v2860, 0
    %vm2869 = vcmp.eq.s32.totalorder %v2861, 0
    %vm2870 = vcmp.eq.s32.totalorder %v2862, 0
    %vm2871 = vcmp.eq.s32.totalorder %v2863, 0
    %vm2872 = vcmp.eq.s32.totalorder %v2864, 0
    %vm2873 = vcmp.eq.s32.totalorder %v2865, 0
    %v2874 = vrot.slane %v2843, 7
    %v2875 = vrot.slane %v2845, 7
    %v2876 = vrot.slane %v2847, 7
    %v2877 = vrot.slane %v2849, 7
    %v2878 = vrot.slane %v2851, 7
    %v2879 = vrot.slane %v2853, 7
    %v2880 = vrot.slane %v2855, 7
    %v2881 = vrot.slane %v2857, 7
    %v2882 = vsel %vm207, %v2880, %v2881
    %v2883 = vsel %vm207, %v2879, %v2880
    %v2884 = vsel %vm207, %v2878, %v2879
    %v2885 = vsel %vm207, %v2877, %v2878
    %v2886 = vsel %vm207, %v2876, %v2877
    %v2887 = vsel %vm207, %v2875, %v2876
    %v2888 = vsel %vm207, %v2874, %v2875
    %v2889 = vsel %vm207, %v2881, %v2874
    %v2890 = vsel %vm2866, 0.0, %v2889
    %v2891 = vsel %vm2867, 0.0, %v2888
    %v2892 = vsel %vm2868, 0.0, %v2887
    %v2893 = vsel %vm2869, 0.0, %v2886
    %v2894 = vsel %vm2870, 0.0, %v2885
    %v2895 = vsel %vm2871, 0.0, %v2884
    %v2896 = vsel %vm2872, 0.0, %v2883
    %v2897 = vsel %vm2873, 0.0, %v2882
    %vm2898 = vcmp.eq.s32.totalorder %v2858, 31
    %vm2899 = vcmp.eq.s32.totalorder %v2859, 31
    %vm2900 = vcmp.eq.s32.totalorder %v2860, 31
    %vm2901 = vcmp.eq.s32.totalorder %v2861, 31
    %vm2902 = vcmp.eq.s32.totalorder %v2862, 31
    %vm2903 = vcmp.eq.s32.totalorder %v2863, 31
    %vm2904 = vcmp.eq.s32.totalorder %v2864, 31
    %vm2905 = vcmp.eq.s32.totalorder %v2865, 31
    %v2906 = vrot.slane %v2843, 1
    %v2907 = vrot.slane %v2845, 1
    %v2908 = vrot.slane %v2847, 1
    %v2909 = vrot.slane %v2849, 1
    %v2910 = vrot.slane %v2851, 1
    %v2911 = vrot.slane %v2853, 1
    %v2912 = vrot.slane %v2855, 1
    %v2913 = vrot.slane %v2857, 1
    %v2914 = vsel %vm336, %v2912, %v2913
    %v2915 = vsel %vm336, %v2911, %v2912
    %v2916 = vsel %vm336, %v2910, %v2911
    %v2917 = vsel %vm336, %v2909, %v2910
    %v2918 = vsel %vm336, %v2908, %v2909
    %v2919 = vsel %vm336, %v2907, %v2908
    %v2920 = vsel %vm336, %v2906, %v2907
    %v2921 = vsel %vm336, %v2913, %v2906
    %v2922 = vsel %vm2898, 0.0, %v2920
    %v2923 = vsel %vm2899, 0.0, %v2919
    %v2924 = vsel %vm2900, 0.0, %v2918
    %v2925 = vsel %vm2901, 0.0, %v2917
    %v2926 = vsel %vm2902, 0.0, %v2916
    %v2927 = vsel %vm2903, 0.0, %v2915
    %v2928 = vsel %vm2904, 0.0, %v2914
    %v2929 = vsel %vm2905, 0.0, %v2921
    %v2930 = vld [vmem:[%s5] sm:$0xff]
    %v2931 = vld [vmem:[%s5 + $0x8] sm:$0xff]
    %v2932 = vld [vmem:[%s5 + $0x10] sm:$0xff]
    %v2933 = vld [vmem:[%s5 + $0x18] sm:$0xff]
    %s2934 = scalar_lea.vmem %s5, 32
    %v2935 = vld [vmem:[%s2934] sm:$0xff]
    %v2936 = vld [vmem:[%s2934 + $0x8] sm:$0xff]
    %v2937 = vld [vmem:[%s2934 + $0x10] sm:$0xff]
    %v2938 = vld [vmem:[%s2934 + $0x18] sm:$0xff]
    %v2940 = vsel %vm2826, %v2843, 0
    %v2943 = vsel %vm2826, %v2845, 0
    %v2946 = vsel %vm2826, %v2847, 0
    %v2949 = vsel %vm2826, %v2849, 0
    %v2952 = vsel %vm2826, %v2851, 0
    %v2955 = vsel %vm2826, %v2853, 0
    %v2958 = vsel %vm2826, %v2855, 0
    %v2961 = vsel %vm2826, %v2857, 0
    %2963 = vmatprep.subr.mxu0 0.0
    %2964 = vmatpush1.msra.mxu0 0.0
    %2965 = vmatprep.subr.mxu0 0.0
    %2966 = vmatpush1.msra.mxu0 0.0
    %2967 = vmatprep.subr.mxu0 0.0
    %2968 = vmatpush1.msra.mxu0 0.0
    %2969 = vmatprep.subr.mxu0 0.0
    %2970 = vmatpush1.msra.mxu0 0.0
    %2971 = vmatprep.subr.mxu0 0.0
    %2972 = vmatpush1.msra.mxu0 0.0
    %2973 = vmatprep.subr.mxu0 0.0
    %2974 = vmatpush1.msra.mxu0 0.0
    %2975 = vmatprep.subr.mxu0 0.0
    %2976 = vmatpush1.msra.mxu0 0.0
    %2977 = vmatprep.subr.mxu0 0.0
    %2978 = vmatpush1.msra.mxu0 0.0
    %2979 = vmatprep.subr.mxu0 0.0
    %2980 = vmatpush1.msra.mxu0 0.0
    %2981 = vmatprep.subr.mxu0 0.0
    %2982 = vmatpush1.msra.mxu0 0.0
    %2983 = vmatprep.subr.mxu0 0.0
    %2984 = vmatpush1.msra.mxu0 0.0
    %2985 = vmatprep.subr.mxu0 0.0
    %2986 = vmatpush1.msra.mxu0 0.0
    %2987 = vmatprep.subr.mxu0 0.0
    %2988 = vmatpush1.msra.mxu0 %v2938
    %2989 = vmatprep.subr.mxu0 0.0
    %2990 = vmatpush1.msra.mxu0 %v2937
    %2991 = vmatprep.subr.mxu0 0.0
    %2992 = vmatpush1.msra.mxu0 %v2936
    %2993 = vmatprep.subr.mxu0 0.0
    %2994 = vmatpush1.msra.mxu0 %v2935
    %2995 = vmatprep.subr.mxu0 0.0
    %2996 = vmatpush2.msra.mxu0 0.0
    %2997 = vmatprep.subr.mxu0 0.0
    %2998 = vmatpush2.msra.mxu0 0.0
    %2999 = vmatprep.subr.mxu0 0.0
    %3000 = vmatpush2.msra.mxu0 0.0
    %3001 = vmatprep.subr.mxu0 0.0
    %3002 = vmatpush2.msra.mxu0 0.0
    %3003 = vmatprep.subr.mxu0 0.0
    %3004 = vmatpush2.msra.mxu0 0.0
    %3005 = vmatprep.subr.mxu0 0.0
    %3006 = vmatpush2.msra.mxu0 0.0
    %3007 = vmatprep.subr.mxu0 0.0
    %3008 = vmatpush2.msra.mxu0 0.0
    %3009 = vmatprep.subr.mxu0 0.0
    %3010 = vmatpush2.msra.mxu0 0.0
    %3011 = vmatprep.subr.mxu0 0.0
    %3012 = vmatpush2.msra.mxu0 0.0
    %3013 = vmatprep.subr.mxu0 0.0
    %3014 = vmatpush2.msra.mxu0 0.0
    %3015 = vmatprep.subr.mxu0 0.0
    %3016 = vmatpush2.msra.mxu0 0.0
    %3017 = vmatprep.subr.mxu0 0.0
    %3018 = vmatpush2.msra.mxu0 0.0
    %3019 = vmatprep.subr.mxu0 0.0
    %3020 = vmatpush2.msra.mxu0 0.0
    %3021 = vmatprep.subr.mxu0 0.0
    %3022 = vmatpush2.msra.mxu0 0.0
    %3023 = vmatprep.subr.mxu0 0.0
    %3024 = vmatpush2.msra.mxu0 0.0
    %3025 = vmatprep.subr.mxu0 0.0
    %3026 = vmatpush2.msra.mxu0 0.0
    %3027 = vmatprep.mubr.f32.mxu0 0.0
    %3028 = vmatmul.mubr.f32.gmra.mxu0 %v2940
    %v3029 = vpop.f32.mrf.mxu0
    %v3030 = vadd.f32 0.0, %v3029
    %v3031 = vpop.f32.mrf.mxu0
    %3032 = vmatprep.mubr.f32.mxu0 0.0
    %3033 = vmatmul.mubr.f32.gmra.mxu0 %v2943
    %v3034 = vpop.f32.mrf.mxu0
    %v3035 = vadd.f32 0.0, %v3034
    %v3036 = vpop.f32.mrf.mxu0
    %3037 = vmatprep.mubr.f32.mxu0 0.0
    %3038 = vmatmul.mubr.f32.gmra.mxu0 %v2946
    %v3039 = vpop.f32.mrf.mxu0
    %v3040 = vadd.f32 0.0, %v3039
    %v3041 = vpop.f32.mrf.mxu0
    %3042 = vmatprep.mubr.f32.mxu0 0.0
    %3043 = vmatmul.mubr.f32.gmra.mxu0 %v2949
    %v3044 = vpop.f32.mrf.mxu0
    %v3045 = vadd.f32 0.0, %v3044
    %v3046 = vpop.f32.mrf.mxu0
    %3047 = vmatprep.mubr.f32.mxu0 0.0
    %3048 = vmatmul.mubr.f32.gmra.mxu0 %v2952
    %v3049 = vpop.f32.mrf.mxu0
    %v3050 = vadd.f32 0.0, %v3049
    %v3051 = vpop.f32.mrf.mxu0
    %3052 = vmatprep.mubr.f32.mxu0 0.0
    %3053 = vmatmul.mubr.f32.gmra.mxu0 %v2955
    %v3054 = vpop.f32.mrf.mxu0
    %v3055 = vadd.f32 0.0, %v3054
    %v3056 = vpop.f32.mrf.mxu0
    %3057 = vmatprep.mubr.f32.mxu0 0.0
    %3058 = vmatmul.mubr.f32.gmra.mxu0 %v2958
    %v3059 = vpop.f32.mrf.mxu0
    %v3060 = vadd.f32 0.0, %v3059
    %v3061 = vpop.f32.mrf.mxu0
    %3062 = vmatprep.mubr.f32.mxu0 0.0
    %3063 = vmatmul.mubr.f32.gmra.mxu0 %v2961
    %v3064 = vpop.f32.mrf.mxu0
    %v3065 = vadd.f32 0.0, %v3064
    %v3066 = vpop.f32.mrf.mxu0
    %3067 = vdwg.mxu0
    %v3069 = vsel %vm2826, %v2890, 0
    %v3072 = vsel %vm2826, %v2891, 0
    %v3075 = vsel %vm2826, %v2892, 0
    %v3078 = vsel %vm2826, %v2893, 0
    %v3081 = vsel %vm2826, %v2894, 0
    %v3084 = vsel %vm2826, %v2895, 0
    %v3087 = vsel %vm2826, %v2896, 0
    %v3090 = vsel %vm2826, %v2897, 0
    %3092 = vmatprep.subr.mxu0 0.0
    %3093 = vmatpush1.msra.mxu0 0.0
    %3094 = vmatprep.subr.mxu0 0.0
    %3095 = vmatpush1.msra.mxu0 0.0
    %3096 = vmatprep.subr.mxu0 0.0
    %3097 = vmatpush1.msra.mxu0 0.0
    %3098 = vmatprep.subr.mxu0 0.0
    %3099 = vmatpush1.msra.mxu0 0.0
    %3100 = vmatprep.subr.mxu0 0.0
    %3101 = vmatpush1.msra.mxu0 0.0
    %3102 = vmatprep.subr.mxu0 0.0
    %3103 = vmatpush1.msra.mxu0 0.0
    %3104 = vmatprep.subr.mxu0 0.0
    %3105 = vmatpush1.msra.mxu0 0.0
    %3106 = vmatprep.subr.mxu0 0.0
    %3107 = vmatpush1.msra.mxu0 0.0
    %3108 = vmatprep.subr.mxu0 0.0
    %3109 = vmatpush1.msra.mxu0 0.0
    %3110 = vmatprep.subr.mxu0 0.0
    %3111 = vmatpush1.msra.mxu0 0.0
    %3112 = vmatprep.subr.mxu0 0.0
    %3113 = vmatpush1.msra.mxu0 0.0
    %3114 = vmatprep.subr.mxu0 0.0
    %3115 = vmatpush1.msra.mxu0 0.0
    %3116 = vmatprep.subr.mxu0 0.0
    %3117 = vmatpush1.msra.mxu0 %v2933
    %3118 = vmatprep.subr.mxu0 0.0
    %3119 = vmatpush1.msra.mxu0 %v2932
    %3120 = vmatprep.subr.mxu0 0.0
    %3121 = vmatpush1.msra.mxu0 %v2931
    %3122 = vmatprep.subr.mxu0 0.0
    %3123 = vmatpush1.msra.mxu0 %v2930
    %3124 = vmatprep.subr.mxu0 0.0
    %3125 = vmatpush2.msra.mxu0 0.0
    %3126 = vmatprep.subr.mxu0 0.0
    %3127 = vmatpush2.msra.mxu0 0.0
    %3128 = vmatprep.subr.mxu0 0.0
    %3129 = vmatpush2.msra.mxu0 0.0
    %3130 = vmatprep.subr.mxu0 0.0
    %3131 = vmatpush2.msra.mxu0 0.0
    %3132 = vmatprep.subr.mxu0 0.0
    %3133 = vmatpush2.msra.mxu0 0.0
    %3134 = vmatprep.subr.mxu0 0.0
    %3135 = vmatpush2.msra.mxu0 0.0
    %3136 = vmatprep.subr.mxu0 0.0
    %3137 = vmatpush2.msra.mxu0 0.0
    %3138 = vmatprep.subr.mxu0 0.0
    %3139 = vmatpush2.msra.mxu0 0.0
    %3140 = vmatprep.subr.mxu0 0.0
    %3141 = vmatpush2.msra.mxu0 0.0
    %3142 = vmatprep.subr.mxu0 0.0
    %3143 = vmatpush2.msra.mxu0 0.0
    %3144 = vmatprep.subr.mxu0 0.0
    %3145 = vmatpush2.msra.mxu0 0.0
    %3146 = vmatprep.subr.mxu0 0.0
    %3147 = vmatpush2.msra.mxu0 0.0
    %3148 = vmatprep.subr.mxu0 0.0
    %3149 = vmatpush2.msra.mxu0 0.0
    %3150 = vmatprep.subr.mxu0 0.0
    %3151 = vmatpush2.msra.mxu0 0.0
    %3152 = vmatprep.subr.mxu0 0.0
    %3153 = vmatpush2.msra.mxu0 0.0
    %3154 = vmatprep.subr.mxu0 0.0
    %3155 = vmatpush2.msra.mxu0 0.0
    %3156 = vmatprep.mubr.f32.mxu0 0.0
    %3157 = vmatmul.mubr.f32.gmra.mxu0 %v3069
    %v3158 = vpop.f32.mrf.mxu0
    %v3159 = vadd.f32 %v3030, %v3158
    %v3160 = vpop.f32.mrf.mxu0
    %3161 = vmatprep.mubr.f32.mxu0 0.0
    %3162 = vmatmul.mubr.f32.gmra.mxu0 %v3072
    %v3163 = vpop.f32.mrf.mxu0
    %v3164 = vadd.f32 %v3035, %v3163
    %v3165 = vpop.f32.mrf.mxu0
    %3166 = vmatprep.mubr.f32.mxu0 0.0
    %3167 = vmatmul.mubr.f32.gmra.mxu0 %v3075
    %v3168 = vpop.f32.mrf.mxu0
    %v3169 = vadd.f32 %v3040, %v3168
    %v3170 = vpop.f32.mrf.mxu0
    %3171 = vmatprep.mubr.f32.mxu0 0.0
    %3172 = vmatmul.mubr.f32.gmra.mxu0 %v3078
    %v3173 = vpop.f32.mrf.mxu0
    %v3174 = vadd.f32 %v3045, %v3173
    %v3175 = vpop.f32.mrf.mxu0
    %3176 = vmatprep.mubr.f32.mxu0 0.0
    %3177 = vmatmul.mubr.f32.gmra.mxu0 %v3081
    %v3178 = vpop.f32.mrf.mxu0
    %v3179 = vadd.f32 %v3050, %v3178
    %v3180 = vpop.f32.mrf.mxu0
    %3181 = vmatprep.mubr.f32.mxu0 0.0
    %3182 = vmatmul.mubr.f32.gmra.mxu0 %v3084
    %v3183 = vpop.f32.mrf.mxu0
    %v3184 = vadd.f32 %v3055, %v3183
    %v3185 = vpop.f32.mrf.mxu0
    %3186 = vmatprep.mubr.f32.mxu0 0.0
    %3187 = vmatmul.mubr.f32.gmra.mxu0 %v3087
    %v3188 = vpop.f32.mrf.mxu0
    %v3189 = vadd.f32 %v3060, %v3188
    %v3190 = vpop.f32.mrf.mxu0
    %3191 = vmatprep.mubr.f32.mxu0 0.0
    %3192 = vmatmul.mubr.f32.gmra.mxu0 %v3090
    %v3193 = vpop.f32.mrf.mxu0
    %v3194 = vadd.f32 %v3065, %v3193
    %v3195 = vpop.f32.mrf.mxu0
    %3196 = vdwg.mxu0
    %s3197 = scalar_lea.vmem %s5, 64
    %v3198 = vld [vmem:[%s3197] sm:$0xff]
    %v3199 = vld [vmem:[%s3197 + $0x8] sm:$0xff]
    %v3200 = vld [vmem:[%s3197 + $0x10] sm:$0xff]
    %v3201 = vld [vmem:[%s3197 + $0x18] sm:$0xff]
    %v3203 = vsel %vm2826, %v2922, 0
    %v3206 = vsel %vm2826, %v2923, 0
    %v3209 = vsel %vm2826, %v2924, 0
    %v3212 = vsel %vm2826, %v2925, 0
    %v3215 = vsel %vm2826, %v2926, 0
    %v3218 = vsel %vm2826, %v2927, 0
    %v3221 = vsel %vm2826, %v2928, 0
    %v3224 = vsel %vm2826, %v2929, 0
    %3226 = vmatprep.subr.mxu0 0.0
    %3227 = vmatpush1.msra.mxu0 0.0
    %3228 = vmatprep.subr.mxu0 0.0
    %3229 = vmatpush1.msra.mxu0 0.0
    %3230 = vmatprep.subr.mxu0 0.0
    %3231 = vmatpush1.msra.mxu0 0.0
    %3232 = vmatprep.subr.mxu0 0.0
    %3233 = vmatpush1.msra.mxu0 0.0
    %3234 = vmatprep.subr.mxu0 0.0
    %3235 = vmatpush1.msra.mxu0 0.0
    %3236 = vmatprep.subr.mxu0 0.0
    %3237 = vmatpush1.msra.mxu0 0.0
    %3238 = vmatprep.subr.mxu0 0.0
    %3239 = vmatpush1.msra.mxu0 0.0
    %3240 = vmatprep.subr.mxu0 0.0
    %3241 = vmatpush1.msra.mxu0 0.0
    %3242 = vmatprep.subr.mxu0 0.0
    %3243 = vmatpush1.msra.mxu0 0.0
    %3244 = vmatprep.subr.mxu0 0.0
    %3245 = vmatpush1.msra.mxu0 0.0
    %3246 = vmatprep.subr.mxu0 0.0
    %3247 = vmatpush1.msra.mxu0 0.0
    %3248 = vmatprep.subr.mxu0 0.0
    %3249 = vmatpush1.msra.mxu0 0.0
    %3250 = vmatprep.subr.mxu0 0.0
    %3251 = vmatpush1.msra.mxu0 %v3201
    %3252 = vmatprep.subr.mxu0 0.0
    %3253 = vmatpush1.msra.mxu0 %v3200
    %3254 = vmatprep.subr.mxu0 0.0
    %3255 = vmatpush1.msra.mxu0 %v3199
    %3256 = vmatprep.subr.mxu0 0.0
    %3257 = vmatpush1.msra.mxu0 %v3198
    %3258 = vmatprep.subr.mxu0 0.0
    %3259 = vmatpush2.msra.mxu0 0.0
    %3260 = vmatprep.subr.mxu0 0.0
    %3261 = vmatpush2.msra.mxu0 0.0
    %3262 = vmatprep.subr.mxu0 0.0
    %3263 = vmatpush2.msra.mxu0 0.0
    %3264 = vmatprep.subr.mxu0 0.0
    %3265 = vmatpush2.msra.mxu0 0.0
    %3266 = vmatprep.subr.mxu0 0.0
    %3267 = vmatpush2.msra.mxu0 0.0
    %3268 = vmatprep.subr.mxu0 0.0
    %3269 = vmatpush2.msra.mxu0 0.0
    %3270 = vmatprep.subr.mxu0 0.0
    %3271 = vmatpush2.msra.mxu0 0.0
    %3272 = vmatprep.subr.mxu0 0.0
    %3273 = vmatpush2.msra.mxu0 0.0
    %3274 = vmatprep.subr.mxu0 0.0
    %3275 = vmatpush2.msra.mxu0 0.0
    %3276 = vmatprep.subr.mxu0 0.0
    %3277 = vmatpush2.msra.mxu0 0.0
    %3278 = vmatprep.subr.mxu0 0.0
    %3279 = vmatpush2.msra.mxu0 0.0
    %3280 = vmatprep.subr.mxu0 0.0
    %3281 = vmatpush2.msra.mxu0 0.0
    %3282 = vmatprep.subr.mxu0 0.0
    %3283 = vmatpush2.msra.mxu0 0.0
    %3284 = vmatprep.subr.mxu0 0.0
    %3285 = vmatpush2.msra.mxu0 0.0
    %3286 = vmatprep.subr.mxu0 0.0
    %3287 = vmatpush2.msra.mxu0 0.0
    %3288 = vmatprep.subr.mxu0 0.0
    %3289 = vmatpush2.msra.mxu0 0.0
    %3290 = vmatprep.mubr.f32.mxu0 0.0
    %3291 = vmatmul.mubr.f32.gmra.mxu0 %v3203
    %v3292 = vpop.f32.mrf.mxu0
    %v3293 = vadd.f32 0.0, %v3292
    %v3294 = vpop.f32.mrf.mxu0
    %3295 = vmatprep.mubr.f32.mxu0 0.0
    %3296 = vmatmul.mubr.f32.gmra.mxu0 %v3206
    %v3297 = vpop.f32.mrf.mxu0
    %v3298 = vadd.f32 0.0, %v3297
    %v3299 = vpop.f32.mrf.mxu0
    %3300 = vmatprep.mubr.f32.mxu0 0.0
    %3301 = vmatmul.mubr.f32.gmra.mxu0 %v3209
    %v3302 = vpop.f32.mrf.mxu0
    %v3303 = vadd.f32 0.0, %v3302
    %v3304 = vpop.f32.mrf.mxu0
    %3305 = vmatprep.mubr.f32.mxu0 0.0
    %3306 = vmatmul.mubr.f32.gmra.mxu0 %v3212
    %v3307 = vpop.f32.mrf.mxu0
    %v3308 = vadd.f32 0.0, %v3307
    %v3309 = vpop.f32.mrf.mxu0
    %3310 = vmatprep.mubr.f32.mxu0 0.0
    %3311 = vmatmul.mubr.f32.gmra.mxu0 %v3215
    %v3312 = vpop.f32.mrf.mxu0
    %v3313 = vadd.f32 0.0, %v3312
    %v3314 = vpop.f32.mrf.mxu0
    %3315 = vmatprep.mubr.f32.mxu0 0.0
    %3316 = vmatmul.mubr.f32.gmra.mxu0 %v3218
    %v3317 = vpop.f32.mrf.mxu0
    %v3318 = vadd.f32 0.0, %v3317
    %v3319 = vpop.f32.mrf.mxu0
    %3320 = vmatprep.mubr.f32.mxu0 0.0
    %3321 = vmatmul.mubr.f32.gmra.mxu0 %v3221
    %v3322 = vpop.f32.mrf.mxu0
    %v3323 = vadd.f32 0.0, %v3322
    %v3324 = vpop.f32.mrf.mxu0
    %3325 = vmatprep.mubr.f32.mxu0 0.0
    %3326 = vmatmul.mubr.f32.gmra.mxu0 %v3224
    %v3327 = vpop.f32.mrf.mxu0
    %v3328 = vadd.f32 0.0, %v3327
    %v3329 = vpop.f32.mrf.mxu0
    %3330 = vdwg.mxu0
    %v3331 = vadd.f32 %v3159, %v3293
    %v3332 = vadd.f32 %v3164, %v3298
    %v3333 = vadd.f32 %v3169, %v3303
    %v3334 = vadd.f32 %v3174, %v3308
    %v3335 = vadd.f32 %v3179, %v3313
    %v3336 = vadd.f32 %v3184, %v3318
    %v3337 = vadd.f32 %v3189, %v3323
    %v3338 = vadd.f32 %v3194, %v3328
    %v3339 = vld [vmem:[%s6] sm:$0x1]
    %v3341 = vlaneseq
    %v3342 = vshrl.u32 %v3341, 7
    %v3343 = vsub.s32 0, %v3342
    %v3344 = vrot.slane %v3339, %v3343
    %v3346 = vadd.f32 %v3331, %v3344
    %v3347 = vadd.f32 %v3332, %v3344
    %v3348 = vadd.f32 %v3333, %v3344
    %v3349 = vadd.f32 %v3334, %v3344
    %v3350 = vadd.f32 %v3335, %v3344
    %v3351 = vadd.f32 %v3336, %v3344
    %v3352 = vadd.f32 %v3337, %v3344
    %v3353 = vadd.f32 %v3338, %v3344
    %vm3354 = vcmp.gt.f32.partialorder %v3346, 0.0
    %vm3355 = vcmp.gt.f32.partialorder %v3347, 0.0
    %vm3356 = vcmp.gt.f32.partialorder %v3348, 0.0
    %vm3357 = vcmp.gt.f32.partialorder %v3349, 0.0
    %vm3358 = vcmp.gt.f32.partialorder %v3350, 0.0
    %vm3359 = vcmp.gt.f32.partialorder %v3351, 0.0
    %vm3360 = vcmp.gt.f32.partialorder %v3352, 0.0
    %vm3361 = vcmp.gt.f32.partialorder %v3353, 0.0
    %v3362 = vmul.f32 %v3346, 0.01
    %v3363 = vmul.f32 %v3347, 0.01
    %v3364 = vmul.f32 %v3348, 0.01
    %v3365 = vmul.f32 %v3349, 0.01
    %v3366 = vmul.f32 %v3350, 0.01
    %v3367 = vmul.f32 %v3351, 0.01
    %v3368 = vmul.f32 %v3352, 0.01
    %v3369 = vmul.f32 %v3353, 0.01
    %v3370 = vsel %vm3354, %v3346, %v3362
    %v3371 = vsel %vm3355, %v3347, %v3363
    %v3372 = vsel %vm3356, %v3348, %v3364
    %v3373 = vsel %vm3357, %v3349, %v3365
    %v3374 = vsel %vm3358, %v3350, %v3366
    %v3375 = vsel %vm3359, %v3351, %v3367
    %v3376 = vsel %vm3360, %v3352, %v3368
    %v3377 = vsel %vm3361, %v3353, %v3369
    %vm3378 = vcmask 130048
    %3379 = vst.msk [vmem:[#allocation4] sm:$0xff] %vm3378, %v3370
    %3380 = vst.msk [vmem:[#allocation4 + $0x8] sm:$0xff] %vm3378, %v3371
    %3381 = vst.msk [vmem:[#allocation4 + $0x10] sm:$0xff] %vm3378, %v3372
    %3382 = vst.msk [vmem:[#allocation4 + $0x18] sm:$0xff] %vm3378, %v3373
    %3383 = vst.msk [vmem:[#allocation4 + $0x20] sm:$0xff] %vm3378, %v3374
    %3384 = vst.msk [vmem:[#allocation4 + $0x28] sm:$0xff] %vm3378, %v3375
    %3385 = vst.msk [vmem:[#allocation4 + $0x30] sm:$0xff] %vm3378, %v3376
    %3386 = vst.msk [vmem:[#allocation4 + $0x38] sm:$0xff] %vm3378, %v3377
    %v3387 = vld [vmem:[#allocation4] ss:$32 sm:$0x1]
    %v3388 = vld [vmem:[#allocation4] ss:$32 sm:$0x2]
    %v3389 = vor.u32 %v3387, %v3388
    %vm3390 = vcmask 123904
    %3391 = vst.msk [vmem:[#allocation5] sm:$0x3] %vm3390, %v3389
    %s3392 = scalar_lea.vmem [#allocation4], 1
    %v3393 = vld [vmem:[%s3392] ss:$32 sm:$0x1]
    %v3394 = vld [vmem:[%s3392] ss:$32 sm:$0x2]
    %v3395 = vor.u32 %v3393, %v3394
    %v3398 = vunpack.c.l.s4 1983009808
    %v3399 = vunpack.c.0.s8 %v3398
    %v3400 = vlaneseq
    %v3401 = vshrl.u32 %v3400, 7
    %v3402 = vsub.s32 %v3399, %v3401
    %v3403 = vrot.slane %v3395, %v3402
    %3404 = vrot.lane.b32.xlu0 %v3403, 16
    %v3405 = vpop.permute.xlu0 %3404
    %vm3407 = vcmask 255104
    %3408 = vst.msk [vmem:[#allocation5] sm:$0x3] %vm3407, %v3405
    %s3409 = scalar_lea.vmem [#allocation4], 2
    %v3410 = vld [vmem:[%s3409] ss:$32 sm:$0x1]
    %v3411 = vld [vmem:[%s3409] ss:$32 sm:$0x2]
    %v3412 = vor.u32 %v3410, %v3411
    %v3415 = vunpack.c.l.s4 1983009808
    %v3416 = vunpack.c.0.s8 %v3415
    %v3417 = vlaneseq
    %v3418 = vshrl.u32 %v3417, 7
    %v3419 = vsub.s32 %v3416, %v3418
    %v3420 = vrot.slane %v3412, %v3419
    %3421 = vrot.lane.b32.xlu0 %v3420, 32
    %v3422 = vpop.permute.xlu0 %3421
    %vm3424 = vcmask 386304
    %3425 = vst.msk [vmem:[#allocation5] sm:$0x3] %vm3424, %v3422
    %s3426 = scalar_lea.vmem [#allocation4], 3
    %v3427 = vld [vmem:[%s3426] ss:$32 sm:$0x1]
    %v3428 = vld [vmem:[%s3426] ss:$32 sm:$0x2]
    %v3429 = vor.u32 %v3427, %v3428
    %v3432 = vunpack.c.l.s4 1983009808
    %v3433 = vunpack.c.0.s8 %v3432
    %v3434 = vlaneseq
    %v3435 = vshrl.u32 %v3434, 7
    %v3436 = vsub.s32 %v3433, %v3435
    %v3437 = vrot.slane %v3429, %v3436
    %3438 = vrot.lane.b32.xlu0 %v3437, 48
    %v3439 = vpop.permute.xlu0 %3438
    %vm3441 = vcmask 517504
    %3442 = vst.msk [vmem:[#allocation5] sm:$0x3] %vm3441, %v3439
    %s3443 = scalar_lea.vmem [#allocation4], 4
    %v3444 = vld [vmem:[%s3443] ss:$32 sm:$0x1]
    %v3445 = vld [vmem:[%s3443] ss:$32 sm:$0x2]
    %v3446 = vor.u32 %v3444, %v3445
    %v3449 = vunpack.c.l.s4 1983009808
    %v3450 = vunpack.c.0.s8 %v3449
    %v3451 = vlaneseq
    %v3452 = vshrl.u32 %v3451, 7
    %v3453 = vsub.s32 %v3450, %v3452
    %v3454 = vrot.slane %v3446, %v3453
    %3455 = vrot.lane.b32.xlu0 %v3454, 64
    %v3456 = vpop.permute.xlu0 %3455
    %vm3458 = vcmask 648704
    %3459 = vst.msk [vmem:[#allocation5] sm:$0x3] %vm3458, %v3456
    %s3460 = scalar_lea.vmem [#allocation4], 5
    %v3461 = vld [vmem:[%s3460] ss:$32 sm:$0x1]
    %v3462 = vld [vmem:[%s3460] ss:$32 sm:$0x2]
    %v3463 = vor.u32 %v3461, %v3462
    %v3466 = vunpack.c.l.s4 1983009808
    %v3467 = vunpack.c.0.s8 %v3466
    %v3468 = vlaneseq
    %v3469 = vshrl.u32 %v3468, 7
    %v3470 = vsub.s32 %v3467, %v3469
    %v3471 = vrot.slane %v3463, %v3470
    %3472 = vrot.lane.b32.xlu0 %v3471, 80
    %v3473 = vpop.permute.xlu0 %3472
    %vm3475 = vcmask 779904
    %3476 = vst.msk [vmem:[#allocation5] sm:$0x3] %vm3475, %v3473
    %s3477 = scalar_lea.vmem [#allocation4], 6
    %v3478 = vld [vmem:[%s3477] ss:$32 sm:$0x1]
    %v3479 = vld [vmem:[%s3477] ss:$32 sm:$0x2]
    %v3480 = vor.u32 %v3478, %v3479
    %v3483 = vunpack.c.l.s4 1983009808
    %v3484 = vunpack.c.0.s8 %v3483
    %v3485 = vlaneseq
    %v3486 = vshrl.u32 %v3485, 7
    %v3487 = vsub.s32 %v3484, %v3486
    %v3488 = vrot.slane %v3480, %v3487
    %3489 = vrot.lane.b32.xlu0 %v3488, 96
    %v3490 = vpop.permute.xlu0 %3489
    %vm3492 = vcmask 911104
    %3493 = vst.msk [vmem:[#allocation5] sm:$0x3] %vm3492, %v3490
    %s3494 = scalar_lea.vmem [#allocation4], 7
    %v3495 = vld [vmem:[%s3494] ss:$32 sm:$0x1]
    %v3496 = vld [vmem:[%s3494] ss:$32 sm:$0x2]
    %v3497 = vor.u32 %v3495, %v3496
    %v3500 = vunpack.c.l.s4 1983009808
    %v3501 = vunpack.c.0.s8 %v3500
    %v3502 = vlaneseq
    %v3503 = vshrl.u32 %v3502, 7
    %v3504 = vsub.s32 %v3501, %v3503
    %v3505 = vrot.slane %v3497, %v3504
    %3506 = vrot.lane.b32.xlu0 %v3505, 112
    %v3507 = vpop.permute.xlu0 %3506
    %vm3509 = vcmask 1042304
    %3510 = vst.msk [vmem:[#allocation5] sm:$0x3] %vm3509, %v3507
    %s3511 = scalar_lea.vmem [#allocation4], 8
    %v3512 = vld [vmem:[%s3511] ss:$32 sm:$0x1]
    %v3513 = vld [vmem:[%s3511] ss:$32 sm:$0x2]
    %v3514 = vor.u32 %v3512, %v3513
    %3515 = vst.msk [vmem:[#allocation5 + $0x2] sm:$0x3] %vm3390, %v3514
    %s3516 = scalar_lea.vmem [#allocation4], 9
    %v3517 = vld [vmem:[%s3516] ss:$32 sm:$0x1]
    %v3518 = vld [vmem:[%s3516] ss:$32 sm:$0x2]
    %v3519 = vor.u32 %v3517, %v3518
    %v3522 = vunpack.c.l.s4 1983009808
    %v3523 = vunpack.c.0.s8 %v3522
    %v3524 = vlaneseq
    %v3525 = vshrl.u32 %v3524, 7
    %v3526 = vsub.s32 %v3523, %v3525
    %v3527 = vrot.slane %v3519, %v3526
    %3528 = vrot.lane.b32.xlu0 %v3527, 16
    %v3529 = vpop.permute.xlu0 %3528
    %3531 = vst.msk [vmem:[#allocation5 + $0x2] sm:$0x3] %vm3407, %v3529
    %s3532 = scalar_lea.vmem [#allocation4], 10
    %v3533 = vld [vmem:[%s3532] ss:$32 sm:$0x1]
    %v3534 = vld [vmem:[%s3532] ss:$32 sm:$0x2]
    %v3535 = vor.u32 %v3533, %v3534
    %v3538 = vunpack.c.l.s4 1983009808
    %v3539 = vunpack.c.0.s8 %v3538
    %v3540 = vlaneseq
    %v3541 = vshrl.u32 %v3540, 7
    %v3542 = vsub.s32 %v3539, %v3541
    %v3543 = vrot.slane %v3535, %v3542
    %3544 = vrot.lane.b32.xlu0 %v3543, 32
    %v3545 = vpop.permute.xlu0 %3544
    %3547 = vst.msk [vmem:[#allocation5 + $0x2] sm:$0x3] %vm3424, %v3545
    %s3548 = scalar_lea.vmem [#allocation4], 11
    %v3549 = vld [vmem:[%s3548] ss:$32 sm:$0x1]
    %v3550 = vld [vmem:[%s3548] ss:$32 sm:$0x2]
    %v3551 = vor.u32 %v3549, %v3550
    %v3554 = vunpack.c.l.s4 1983009808
    %v3555 = vunpack.c.0.s8 %v3554
    %v3556 = vlaneseq
    %v3557 = vshrl.u32 %v3556, 7
    %v3558 = vsub.s32 %v3555, %v3557
    %v3559 = vrot.slane %v3551, %v3558
    %3560 = vrot.lane.b32.xlu0 %v3559, 48
    %v3561 = vpop.permute.xlu0 %3560
    %3563 = vst.msk [vmem:[#allocation5 + $0x2] sm:$0x3] %vm3441, %v3561
    %s3564 = scalar_lea.vmem [#allocation4], 12
    %v3565 = vld [vmem:[%s3564] ss:$32 sm:$0x1]
    %v3566 = vld [vmem:[%s3564] ss:$32 sm:$0x2]
    %v3567 = vor.u32 %v3565, %v3566
    %v3570 = vunpack.c.l.s4 1983009808
    %v3571 = vunpack.c.0.s8 %v3570
    %v3572 = vlaneseq
    %v3573 = vshrl.u32 %v3572, 7
    %v3574 = vsub.s32 %v3571, %v3573
    %v3575 = vrot.slane %v3567, %v3574
    %3576 = vrot.lane.b32.xlu0 %v3575, 64
    %v3577 = vpop.permute.xlu0 %3576
    %3579 = vst.msk [vmem:[#allocation5 + $0x2] sm:$0x3] %vm3458, %v3577
    %s3580 = scalar_lea.vmem [#allocation4], 13
    %v3581 = vld [vmem:[%s3580] ss:$32 sm:$0x1]
    %v3582 = vld [vmem:[%s3580] ss:$32 sm:$0x2]
    %v3583 = vor.u32 %v3581, %v3582
    %v3586 = vunpack.c.l.s4 1983009808
    %v3587 = vunpack.c.0.s8 %v3586
    %v3588 = vlaneseq
    %v3589 = vshrl.u32 %v3588, 7
    %v3590 = vsub.s32 %v3587, %v3589
    %v3591 = vrot.slane %v3583, %v3590
    %3592 = vrot.lane.b32.xlu0 %v3591, 80
    %v3593 = vpop.permute.xlu0 %3592
    %3595 = vst.msk [vmem:[#allocation5 + $0x2] sm:$0x3] %vm3475, %v3593
    %s3596 = scalar_lea.vmem [#allocation4], 14
    %v3597 = vld [vmem:[%s3596] ss:$32 sm:$0x1]
    %v3598 = vld [vmem:[%s3596] ss:$32 sm:$0x2]
    %v3599 = vor.u32 %v3597, %v3598
    %v3602 = vunpack.c.l.s4 1983009808
    %v3603 = vunpack.c.0.s8 %v3602
    %v3604 = vlaneseq
    %v3605 = vshrl.u32 %v3604, 7
    %v3606 = vsub.s32 %v3603, %v3605
    %v3607 = vrot.slane %v3599, %v3606
    %3608 = vrot.lane.b32.xlu0 %v3607, 96
    %v3609 = vpop.permute.xlu0 %3608
    %3611 = vst.msk [vmem:[#allocation5 + $0x2] sm:$0x3] %vm3492, %v3609
    %s3612 = scalar_lea.vmem [#allocation4], 15
    %v3613 = vld [vmem:[%s3612] ss:$32 sm:$0x1]
    %v3614 = vld [vmem:[%s3612] ss:$32 sm:$0x2]
    %v3615 = vor.u32 %v3613, %v3614
    %v3618 = vunpack.c.l.s4 1983009808
    %v3619 = vunpack.c.0.s8 %v3618
    %v3620 = vlaneseq
    %v3621 = vshrl.u32 %v3620, 7
    %v3622 = vsub.s32 %v3619, %v3621
    %v3623 = vrot.slane %v3615, %v3622
    %3624 = vrot.lane.b32.xlu0 %v3623, 112
    %v3625 = vpop.permute.xlu0 %3624
    %3627 = vst.msk [vmem:[#allocation5 + $0x2] sm:$0x3] %vm3509, %v3625
    %s3628 = scalar_lea.vmem [#allocation4], 16
    %v3629 = vld [vmem:[%s3628] ss:$32 sm:$0x1]
    %v3630 = vld [vmem:[%s3628] ss:$32 sm:$0x2]
    %v3631 = vor.u32 %v3629, %v3630
    %3632 = vst.msk [vmem:[#allocation5 + $0x4] sm:$0x3] %vm3390, %v3631
    %s3633 = scalar_lea.vmem [#allocation4], 17
    %v3634 = vld [vmem:[%s3633] ss:$32 sm:$0x1]
    %v3635 = vld [vmem:[%s3633] ss:$32 sm:$0x2]
    %v3636 = vor.u32 %v3634, %v3635
    %v3639 = vunpack.c.l.s4 1983009808
    %v3640 = vunpack.c.0.s8 %v3639
    %v3641 = vlaneseq
    %v3642 = vshrl.u32 %v3641, 7
    %v3643 = vsub.s32 %v3640, %v3642
    %v3644 = vrot.slane %v3636, %v3643
    %3645 = vrot.lane.b32.xlu0 %v3644, 16
    %v3646 = vpop.permute.xlu0 %3645
    %3648 = vst.msk [vmem:[#allocation5 + $0x4] sm:$0x3] %vm3407, %v3646
    %s3649 = scalar_lea.vmem [#allocation4], 18
    %v3650 = vld [vmem:[%s3649] ss:$32 sm:$0x1]
    %v3651 = vld [vmem:[%s3649] ss:$32 sm:$0x2]
    %v3652 = vor.u32 %v3650, %v3651
    %v3655 = vunpack.c.l.s4 1983009808
    %v3656 = vunpack.c.0.s8 %v3655
    %v3657 = vlaneseq
    %v3658 = vshrl.u32 %v3657, 7
    %v3659 = vsub.s32 %v3656, %v3658
    %v3660 = vrot.slane %v3652, %v3659
    %3661 = vrot.lane.b32.xlu0 %v3660, 32
    %v3662 = vpop.permute.xlu0 %3661
    %3664 = vst.msk [vmem:[#allocation5 + $0x4] sm:$0x3] %vm3424, %v3662
    %s3665 = scalar_lea.vmem [#allocation4], 19
    %v3666 = vld [vmem:[%s3665] ss:$32 sm:$0x1]
    %v3667 = vld [vmem:[%s3665] ss:$32 sm:$0x2]
    %v3668 = vor.u32 %v3666, %v3667
    %v3671 = vunpack.c.l.s4 1983009808
    %v3672 = vunpack.c.0.s8 %v3671
    %v3673 = vlaneseq
    %v3674 = vshrl.u32 %v3673, 7
    %v3675 = vsub.s32 %v3672, %v3674
    %v3676 = vrot.slane %v3668, %v3675
    %3677 = vrot.lane.b32.xlu0 %v3676, 48
    %v3678 = vpop.permute.xlu0 %3677
    %3680 = vst.msk [vmem:[#allocation5 + $0x4] sm:$0x3] %vm3441, %v3678
    %s3681 = scalar_lea.vmem [#allocation4], 20
    %v3682 = vld [vmem:[%s3681] ss:$32 sm:$0x1]
    %v3683 = vld [vmem:[%s3681] ss:$32 sm:$0x2]
    %v3684 = vor.u32 %v3682, %v3683
    %v3687 = vunpack.c.l.s4 1983009808
    %v3688 = vunpack.c.0.s8 %v3687
    %v3689 = vlaneseq
    %v3690 = vshrl.u32 %v3689, 7
    %v3691 = vsub.s32 %v3688, %v3690
    %v3692 = vrot.slane %v3684, %v3691
    %3693 = vrot.lane.b32.xlu0 %v3692, 64
    %v3694 = vpop.permute.xlu0 %3693
    %3696 = vst.msk [vmem:[#allocation5 + $0x4] sm:$0x3] %vm3458, %v3694
    %s3697 = scalar_lea.vmem [#allocation4], 21
    %v3698 = vld [vmem:[%s3697] ss:$32 sm:$0x1]
    %v3699 = vld [vmem:[%s3697] ss:$32 sm:$0x2]
    %v3700 = vor.u32 %v3698, %v3699
    %v3703 = vunpack.c.l.s4 1983009808
    %v3704 = vunpack.c.0.s8 %v3703
    %v3705 = vlaneseq
    %v3706 = vshrl.u32 %v3705, 7
    %v3707 = vsub.s32 %v3704, %v3706
    %v3708 = vrot.slane %v3700, %v3707
    %3709 = vrot.lane.b32.xlu0 %v3708, 80
    %v3710 = vpop.permute.xlu0 %3709
    %3712 = vst.msk [vmem:[#allocation5 + $0x4] sm:$0x3] %vm3475, %v3710
    %s3713 = scalar_lea.vmem [#allocation4], 22
    %v3714 = vld [vmem:[%s3713] ss:$32 sm:$0x1]
    %v3715 = vld [vmem:[%s3713] ss:$32 sm:$0x2]
    %v3716 = vor.u32 %v3714, %v3715
    %v3719 = vunpack.c.l.s4 1983009808
    %v3720 = vunpack.c.0.s8 %v3719
    %v3721 = vlaneseq
    %v3722 = vshrl.u32 %v3721, 7
    %v3723 = vsub.s32 %v3720, %v3722
    %v3724 = vrot.slane %v3716, %v3723
    %3725 = vrot.lane.b32.xlu0 %v3724, 96
    %v3726 = vpop.permute.xlu0 %3725
    %3728 = vst.msk [vmem:[#allocation5 + $0x4] sm:$0x3] %vm3492, %v3726
    %s3729 = scalar_lea.vmem [#allocation4], 23
    %v3730 = vld [vmem:[%s3729] ss:$32 sm:$0x1]
    %v3731 = vld [vmem:[%s3729] ss:$32 sm:$0x2]
    %v3732 = vor.u32 %v3730, %v3731
    %v3735 = vunpack.c.l.s4 1983009808
    %v3736 = vunpack.c.0.s8 %v3735
    %v3737 = vlaneseq
    %v3738 = vshrl.u32 %v3737, 7
    %v3739 = vsub.s32 %v3736, %v3738
    %v3740 = vrot.slane %v3732, %v3739
    %3741 = vrot.lane.b32.xlu0 %v3740, 112
    %v3742 = vpop.permute.xlu0 %3741
    %3744 = vst.msk [vmem:[#allocation5 + $0x4] sm:$0x3] %vm3509, %v3742
    %s3745 = scalar_lea.vmem [#allocation4], 24
    %v3746 = vld [vmem:[%s3745] ss:$32 sm:$0x1]
    %v3747 = vld [vmem:[%s3745] ss:$32 sm:$0x2]
    %v3748 = vor.u32 %v3746, %v3747
    %3749 = vst.msk [vmem:[#allocation5 + $0x6] sm:$0x3] %vm3390, %v3748
    %s3750 = scalar_lea.vmem [#allocation4], 25
    %v3751 = vld [vmem:[%s3750] ss:$32 sm:$0x1]
    %v3752 = vld [vmem:[%s3750] ss:$32 sm:$0x2]
    %v3753 = vor.u32 %v3751, %v3752
    %v3756 = vunpack.c.l.s4 1983009808
    %v3757 = vunpack.c.0.s8 %v3756
    %v3758 = vlaneseq
    %v3759 = vshrl.u32 %v3758, 7
    %v3760 = vsub.s32 %v3757, %v3759
    %v3761 = vrot.slane %v3753, %v3760
    %3762 = vrot.lane.b32.xlu0 %v3761, 16
    %v3763 = vpop.permute.xlu0 %3762
    %3765 = vst.msk [vmem:[#allocation5 + $0x6] sm:$0x3] %vm3407, %v3763
    %s3766 = scalar_lea.vmem [#allocation4], 26
    %v3767 = vld [vmem:[%s3766] ss:$32 sm:$0x1]
    %v3768 = vld [vmem:[%s3766] ss:$32 sm:$0x2]
    %v3769 = vor.u32 %v3767, %v3768
    %v3772 = vunpack.c.l.s4 1983009808
    %v3773 = vunpack.c.0.s8 %v3772
    %v3774 = vlaneseq
    %v3775 = vshrl.u32 %v3774, 7
    %v3776 = vsub.s32 %v3773, %v3775
    %v3777 = vrot.slane %v3769, %v3776
    %3778 = vrot.lane.b32.xlu0 %v3777, 32
    %v3779 = vpop.permute.xlu0 %3778
    %3781 = vst.msk [vmem:[#allocation5 + $0x6] sm:$0x3] %vm3424, %v3779
    %s3782 = scalar_lea.vmem [#allocation4], 27
    %v3783 = vld [vmem:[%s3782] ss:$32 sm:$0x1]
    %v3784 = vld [vmem:[%s3782] ss:$32 sm:$0x2]
    %v3785 = vor.u32 %v3783, %v3784
    %v3788 = vunpack.c.l.s4 1983009808
    %v3789 = vunpack.c.0.s8 %v3788
    %v3790 = vlaneseq
    %v3791 = vshrl.u32 %v3790, 7
    %v3792 = vsub.s32 %v3789, %v3791
    %v3793 = vrot.slane %v3785, %v3792
    %3794 = vrot.lane.b32.xlu0 %v3793, 48
    %v3795 = vpop.permute.xlu0 %3794
    %3797 = vst.msk [vmem:[#allocation5 + $0x6] sm:$0x3] %vm3441, %v3795
    %s3798 = scalar_lea.vmem [#allocation4], 28
    %v3799 = vld [vmem:[%s3798] ss:$32 sm:$0x1]
    %v3800 = vld [vmem:[%s3798] ss:$32 sm:$0x2]
    %v3801 = vor.u32 %v3799, %v3800
    %v3804 = vunpack.c.l.s4 1983009808
    %v3805 = vunpack.c.0.s8 %v3804
    %v3806 = vlaneseq
    %v3807 = vshrl.u32 %v3806, 7
    %v3808 = vsub.s32 %v3805, %v3807
    %v3809 = vrot.slane %v3801, %v3808
    %3810 = vrot.lane.b32.xlu0 %v3809, 64
    %v3811 = vpop.permute.xlu0 %3810
    %3813 = vst.msk [vmem:[#allocation5 + $0x6] sm:$0x3] %vm3458, %v3811
    %s3814 = scalar_lea.vmem [#allocation4], 29
    %v3815 = vld [vmem:[%s3814] ss:$32 sm:$0x1]
    %v3816 = vld [vmem:[%s3814] ss:$32 sm:$0x2]
    %v3817 = vor.u32 %v3815, %v3816
    %v3820 = vunpack.c.l.s4 1983009808
    %v3821 = vunpack.c.0.s8 %v3820
    %v3822 = vlaneseq
    %v3823 = vshrl.u32 %v3822, 7
    %v3824 = vsub.s32 %v3821, %v3823
    %v3825 = vrot.slane %v3817, %v3824
    %3826 = vrot.lane.b32.xlu0 %v3825, 80
    %v3827 = vpop.permute.xlu0 %3826
    %3829 = vst.msk [vmem:[#allocation5 + $0x6] sm:$0x3] %vm3475, %v3827
    %s3830 = scalar_lea.vmem [#allocation4], 30
    %v3831 = vld [vmem:[%s3830] ss:$32 sm:$0x1]
    %v3832 = vld [vmem:[%s3830] ss:$32 sm:$0x2]
    %v3833 = vor.u32 %v3831, %v3832
    %v3836 = vunpack.c.l.s4 1983009808
    %v3837 = vunpack.c.0.s8 %v3836
    %v3838 = vlaneseq
    %v3839 = vshrl.u32 %v3838, 7
    %v3840 = vsub.s32 %v3837, %v3839
    %v3841 = vrot.slane %v3833, %v3840
    %3842 = vrot.lane.b32.xlu0 %v3841, 96
    %v3843 = vpop.permute.xlu0 %3842
    %3845 = vst.msk [vmem:[#allocation5 + $0x6] sm:$0x3] %vm3492, %v3843
    %s3846 = scalar_lea.vmem [#allocation4], 31
    %v3847 = vld [vmem:[%s3846] ss:$32 sm:$0x1]
    %v3848 = vld [vmem:[%s3846] ss:$32 sm:$0x2]
    %v3849 = vor.u32 %v3847, %v3848
    %v3852 = vunpack.c.l.s4 1983009808
    %v3853 = vunpack.c.0.s8 %v3852
    %v3854 = vlaneseq
    %v3855 = vshrl.u32 %v3854, 7
    %v3856 = vsub.s32 %v3853, %v3855
    %v3857 = vrot.slane %v3849, %v3856
    %3858 = vrot.lane.b32.xlu0 %v3857, 112
    %v3859 = vpop.permute.xlu0 %3858
    %3861 = vst.msk [vmem:[#allocation5 + $0x6] sm:$0x3] %vm3509, %v3859
    %v3862 = vld [vmem:[#allocation5] sm:$0xff]
    %v3864 = vcombine.high %v3862, %v3862
    %v3866 = vunpack.c.l.s4 1983009808
    %v3867 = vunpack.c.0.s8 %v3866
    %v3868 = vlaneseq
    %v3869 = vshrl.u32 %v3868, 7
    %v3870 = vsub.s32 %v3867, %v3869
    %v3871 = vrot.slane %v3862, %v3870
    %v3873 = vunpack.c.l.s4 1983009808
    %v3874 = vunpack.c.0.s8 %v3873
    %v3875 = vlaneseq
    %v3876 = vshrl.u32 %v3875, 7
    %v3877 = vsub.s32 %v3874, %v3876
    %v3878 = vrot.slane %v3864, %v3877
    %v3879 = vcombine.high %v3871, %v3871
    %v3880 = vcombine.high %v3878, %v3878
    %v3885 = vpack.c.bf16 %v3871, %v3871
    %v3886 = vpack.c.bf16 %v3879, %v3879
    %v3887 = vpack.c.bf16 %v3878, %v3878
    %v3888 = vpack.c.bf16 %v3880, %v3880
    %v3889 = vld [vmem:[%s7] sm:$0xff]
    %v3890 = vld [vmem:[%s7 + $0x8] sm:$0xff]
    %v3891 = vld [vmem:[%s7 + $0x10] sm:$0xff]
    %v3892 = vld [vmem:[%s7 + $0x18] sm:$0xff]
    %v3893 = vld [vmem:[%s7 + $0x20] sm:$0xff]
    %v3894 = vld [vmem:[%s7 + $0x28] sm:$0xff]
    %v3895 = vld [vmem:[%s7 + $0x30] sm:$0xff]
    %v3896 = vld [vmem:[%s7 + $0x38] sm:$0xff]
    %v3897 = vld [vmem:[%s7 + $0x40] sm:$0xff]
    %v3898 = vld [vmem:[%s7 + $0x48] sm:$0xff]
    %v3899 = vld [vmem:[%s7 + $0x50] sm:$0xff]
    %v3900 = vld [vmem:[%s7 + $0x58] sm:$0xff]
    %v3901 = vld [vmem:[%s7 + $0x60] sm:$0xff]
    %v3902 = vld [vmem:[%s7 + $0x68] sm:$0xff]
    %v3903 = vld [vmem:[%s7 + $0x70] sm:$0xff]
    %v3904 = vld [vmem:[%s7 + $0x78] sm:$0xff]
    %v3905 = vld [vmem:[%s7 + $0x80] sm:$0xff]
    %v3906 = vld [vmem:[%s7 + $0x88] sm:$0xff]
    %v3907 = vld [vmem:[%s7 + $0x90] sm:$0xff]
    %v3908 = vld [vmem:[%s7 + $0x98] sm:$0xff]
    %v3909 = vld [vmem:[%s7 + $0xa0] sm:$0xff]
    %v3910 = vld [vmem:[%s7 + $0xa8] sm:$0xff]
    %v3911 = vld [vmem:[%s7 + $0xb0] sm:$0xff]
    %v3912 = vld [vmem:[%s7 + $0xb8] sm:$0xff]
    %v3913 = vld [vmem:[%s7 + $0xc0] sm:$0xff]
    %v3914 = vld [vmem:[%s7 + $0xc8] sm:$0xff]
    %v3915 = vld [vmem:[%s7 + $0xd0] sm:$0xff]
    %v3916 = vld [vmem:[%s7 + $0xd8] sm:$0xff]
    %v3917 = vld [vmem:[%s7 + $0xe0] sm:$0xff]
    %v3918 = vld [vmem:[%s7 + $0xe8] sm:$0xff]
    %v3919 = vld [vmem:[%s7 + $0xf0] sm:$0xff]
    %v3920 = vld [vmem:[%s7 + $0xf8] sm:$0xff]
    %v3921 = vld [vmem:[%s7 + $0x100] sm:$0xff]
    %v3922 = vld [vmem:[%s7 + $0x108] sm:$0xff]
    %v3923 = vld [vmem:[%s7 + $0x110] sm:$0xff]
    %v3924 = vld [vmem:[%s7 + $0x118] sm:$0xff]
    %v3925 = vld [vmem:[%s7 + $0x120] sm:$0xff]
    %v3926 = vld [vmem:[%s7 + $0x128] sm:$0xff]
    %v3927 = vld [vmem:[%s7 + $0x130] sm:$0xff]
    %v3928 = vld [vmem:[%s7 + $0x138] sm:$0xff]
    %v3929 = vld [vmem:[%s7 + $0x140] sm:$0xff]
    %v3930 = vld [vmem:[%s7 + $0x148] sm:$0xff]
    %v3931 = vld [vmem:[%s7 + $0x150] sm:$0xff]
    %v3932 = vld [vmem:[%s7 + $0x158] sm:$0xff]
    %v3933 = vld [vmem:[%s7 + $0x160] sm:$0xff]
    %v3934 = vld [vmem:[%s7 + $0x168] sm:$0xff]
    %v3935 = vld [vmem:[%s7 + $0x170] sm:$0xff]
    %v3936 = vld [vmem:[%s7 + $0x178] sm:$0xff]
    %v3937 = vld [vmem:[%s7 + $0x180] sm:$0xff]
    %v3938 = vld [vmem:[%s7 + $0x188] sm:$0xff]
    %v3939 = vld [vmem:[%s7 + $0x190] sm:$0xff]
    %v3940 = vld [vmem:[%s7 + $0x198] sm:$0xff]
    %v3941 = vld [vmem:[%s7 + $0x1a0] sm:$0xff]
    %v3942 = vld [vmem:[%s7 + $0x1a8] sm:$0xff]
    %v3943 = vld [vmem:[%s7 + $0x1b0] sm:$0xff]
    %v3944 = vld [vmem:[%s7 + $0x1b8] sm:$0xff]
    %v3945 = vld [vmem:[%s7 + $0x1c0] sm:$0xff]
    %v3946 = vld [vmem:[%s7 + $0x1c8] sm:$0xff]
    %v3947 = vld [vmem:[%s7 + $0x1d0] sm:$0xff]
    %v3948 = vld [vmem:[%s7 + $0x1d8] sm:$0xff]
    %v3949 = vld [vmem:[%s7 + $0x1e0] sm:$0xff]
    %v3950 = vld [vmem:[%s7 + $0x1e8] sm:$0xff]
    %v3951 = vld [vmem:[%s7 + $0x1f0] sm:$0xff]
    %v3952 = vld [vmem:[%s7 + $0x1f8] sm:$0xff]
    %v3953 = vld [vmem:[%s8] sm:$0x3]
    %v3955 = vlaneseq
    %v3956 = vshrl.u32 %v3955, 7
    %v3957 = vsub.s32 0, %v3956
    %v3958 = vrot.slane %v3953, %v3957
    %v3959 = vlaneseq
    %v3960 = vshrl.u32 %v3959, 7
    %v3961 = vsub.s32 1, %v3960
    %v3962 = vrot.slane %v3953, %v3961
    %v4029 = vunpack.c.l.b16 %v3889
    %v4030 = vunpack.c.h.b16 %v3889
    %v4031 = vunpack.c.l.b16 %v3890
    %v4032 = vunpack.c.h.b16 %v3890
    %v4033 = vunpack.c.l.b16 %v3891
    %v4034 = vunpack.c.h.b16 %v3891
    %v4035 = vunpack.c.l.b16 %v3892
    %v4036 = vunpack.c.h.b16 %v3892
    %v4037 = vunpack.c.l.b16 %v3893
    %v4038 = vunpack.c.h.b16 %v3893
    %v4039 = vunpack.c.l.b16 %v3894
    %v4040 = vunpack.c.h.b16 %v3894
    %v4041 = vunpack.c.l.b16 %v3895
    %v4042 = vunpack.c.h.b16 %v3895
    %v4043 = vunpack.c.l.b16 %v3896
    %v4044 = vunpack.c.h.b16 %v3896
    %v4045 = vunpack.c.l.b16 %v3897
    %v4046 = vunpack.c.h.b16 %v3897
    %v4047 = vunpack.c.l.b16 %v3898
    %v4048 = vunpack.c.h.b16 %v3898
    %v4049 = vunpack.c.l.b16 %v3899
    %v4050 = vunpack.c.h.b16 %v3899
    %v4051 = vunpack.c.l.b16 %v3900
    %v4052 = vunpack.c.h.b16 %v3900
    %v4053 = vunpack.c.l.b16 %v3901
    %v4054 = vunpack.c.h.b16 %v3901
    %v4055 = vunpack.c.l.b16 %v3902
    %v4056 = vunpack.c.h.b16 %v3902
    %v4057 = vunpack.c.l.b16 %v3903
    %v4058 = vunpack.c.h.b16 %v3903
    %v4059 = vunpack.c.l.b16 %v3904
    %v4060 = vunpack.c.h.b16 %v3904
    %v4061 = vunpack.c.l.b16 %v3905
    %v4062 = vunpack.c.h.b16 %v3905
    %v4063 = vunpack.c.l.b16 %v3906
    %v4064 = vunpack.c.h.b16 %v3906
    %v4065 = vunpack.c.l.b16 %v3907
    %v4066 = vunpack.c.h.b16 %v3907
    %v4067 = vunpack.c.l.b16 %v3908
    %v4068 = vunpack.c.h.b16 %v3908
    %v4069 = vunpack.c.l.b16 %v3909
    %v4070 = vunpack.c.h.b16 %v3909
    %v4071 = vunpack.c.l.b16 %v3910
    %v4072 = vunpack.c.h.b16 %v3910
    %v4073 = vunpack.c.l.b16 %v3911
    %v4074 = vunpack.c.h.b16 %v3911
    %v4075 = vunpack.c.l.b16 %v3912
    %v4076 = vunpack.c.h.b16 %v3912
    %v4077 = vunpack.c.l.b16 %v3913
    %v4078 = vunpack.c.h.b16 %v3913
    %v4079 = vunpack.c.l.b16 %v3914
    %v4080 = vunpack.c.h.b16 %v3914
    %v4081 = vunpack.c.l.b16 %v3915
    %v4082 = vunpack.c.h.b16 %v3915
    %v4083 = vunpack.c.l.b16 %v3916
    %v4084 = vunpack.c.h.b16 %v3916
    %v4085 = vunpack.c.l.b16 %v3917
    %v4086 = vunpack.c.h.b16 %v3917
    %v4087 = vunpack.c.l.b16 %v3918
    %v4088 = vunpack.c.h.b16 %v3918
    %v4089 = vunpack.c.l.b16 %v3919
    %v4090 = vunpack.c.h.b16 %v3919
    %v4091 = vunpack.c.l.b16 %v3920
    %v4092 = vunpack.c.h.b16 %v3920
    %v4093 = vunpack.c.l.b16 %v3921
    %v4094 = vunpack.c.h.b16 %v3921
    %v4095 = vunpack.c.l.b16 %v3922
    %v4096 = vunpack.c.h.b16 %v3922
    %v4097 = vunpack.c.l.b16 %v3923
    %v4098 = vunpack.c.h.b16 %v3923
    %v4099 = vunpack.c.l.b16 %v3924
    %v4100 = vunpack.c.h.b16 %v3924
    %v4101 = vunpack.c.l.b16 %v3925
    %v4102 = vunpack.c.h.b16 %v3925
    %v4103 = vunpack.c.l.b16 %v3926
    %v4104 = vunpack.c.h.b16 %v3926
    %v4105 = vunpack.c.l.b16 %v3927
    %v4106 = vunpack.c.h.b16 %v3927
    %v4107 = vunpack.c.l.b16 %v3928
    %v4108 = vunpack.c.h.b16 %v3928
    %v4109 = vunpack.c.l.b16 %v3929
    %v4110 = vunpack.c.h.b16 %v3929
    %v4111 = vunpack.c.l.b16 %v3930
    %v4112 = vunpack.c.h.b16 %v3930
    %v4113 = vunpack.c.l.b16 %v3931
    %v4114 = vunpack.c.h.b16 %v3931
    %v4115 = vunpack.c.l.b16 %v3932
    %v4116 = vunpack.c.h.b16 %v3932
    %v4117 = vunpack.c.l.b16 %v3933
    %v4118 = vunpack.c.h.b16 %v3933
    %v4119 = vunpack.c.l.b16 %v3934
    %v4120 = vunpack.c.h.b16 %v3934
    %v4121 = vunpack.c.l.b16 %v3935
    %v4122 = vunpack.c.h.b16 %v3935
    %v4123 = vunpack.c.l.b16 %v3936
    %v4124 = vunpack.c.h.b16 %v3936
    %v4125 = vunpack.c.l.b16 %v3937
    %v4126 = vunpack.c.h.b16 %v3937
    %v4127 = vunpack.c.l.b16 %v3938
    %v4128 = vunpack.c.h.b16 %v3938
    %v4129 = vunpack.c.l.b16 %v3939
    %v4130 = vunpack.c.h.b16 %v3939
    %v4131 = vunpack.c.l.b16 %v3940
    %v4132 = vunpack.c.h.b16 %v3940
    %v4133 = vunpack.c.l.b16 %v3941
    %v4134 = vunpack.c.h.b16 %v3941
    %v4135 = vunpack.c.l.b16 %v3942
    %v4136 = vunpack.c.h.b16 %v3942
    %v4137 = vunpack.c.l.b16 %v3943
    %v4138 = vunpack.c.h.b16 %v3943
    %v4139 = vunpack.c.l.b16 %v3944
    %v4140 = vunpack.c.h.b16 %v3944
    %v4141 = vunpack.c.l.b16 %v3945
    %v4142 = vunpack.c.h.b16 %v3945
    %v4143 = vunpack.c.l.b16 %v3946
    %v4144 = vunpack.c.h.b16 %v3946
    %v4145 = vunpack.c.l.b16 %v3947
    %v4146 = vunpack.c.h.b16 %v3947
    %v4147 = vunpack.c.l.b16 %v3948
    %v4148 = vunpack.c.h.b16 %v3948
    %v4149 = vunpack.c.l.b16 %v3949
    %v4150 = vunpack.c.h.b16 %v3949
    %v4151 = vunpack.c.l.b16 %v3950
    %v4152 = vunpack.c.h.b16 %v3950
    %v4153 = vunpack.c.l.b16 %v3951
    %v4154 = vunpack.c.h.b16 %v3951
    %v4155 = vunpack.c.l.b16 %v3952
    %v4156 = vunpack.c.h.b16 %v3952
    %v4157 = vpack.c.b16 %v4031, %v4029
    %v4158 = vpack.c.b16 %v4032, %v4030
    %v4159 = vpack.c.b16 %v4035, %v4033
    %v4160 = vpack.c.b16 %v4036, %v4034
    %v4161 = vpack.c.b16 %v4039, %v4037
    %v4162 = vpack.c.b16 %v4040, %v4038
    %v4163 = vpack.c.b16 %v4043, %v4041
    %v4164 = vpack.c.b16 %v4044, %v4042
    %v4165 = vpack.c.b16 %v4047, %v4045
    %v4166 = vpack.c.b16 %v4048, %v4046
    %v4167 = vpack.c.b16 %v4051, %v4049
    %v4168 = vpack.c.b16 %v4052, %v4050
    %v4169 = vpack.c.b16 %v4055, %v4053
    %v4170 = vpack.c.b16 %v4056, %v4054
    %v4171 = vpack.c.b16 %v4059, %v4057
    %v4172 = vpack.c.b16 %v4060, %v4058
    %v4173 = vpack.c.b16 %v4063, %v4061
    %v4174 = vpack.c.b16 %v4064, %v4062
    %v4175 = vpack.c.b16 %v4067, %v4065
    %v4176 = vpack.c.b16 %v4068, %v4066
    %v4177 = vpack.c.b16 %v4071, %v4069
    %v4178 = vpack.c.b16 %v4072, %v4070
    %v4179 = vpack.c.b16 %v4075, %v4073
    %v4180 = vpack.c.b16 %v4076, %v4074
    %v4181 = vpack.c.b16 %v4079, %v4077
    %v4182 = vpack.c.b16 %v4080, %v4078
    %v4183 = vpack.c.b16 %v4083, %v4081
    %v4184 = vpack.c.b16 %v4084, %v4082
    %v4185 = vpack.c.b16 %v4087, %v4085
    %v4186 = vpack.c.b16 %v4088, %v4086
    %v4187 = vpack.c.b16 %v4091, %v4089
    %v4188 = vpack.c.b16 %v4092, %v4090
    %v4189 = vpack.c.b16 %v4095, %v4093
    %v4190 = vpack.c.b16 %v4096, %v4094
    %v4191 = vpack.c.b16 %v4099, %v4097
    %v4192 = vpack.c.b16 %v4100, %v4098
    %v4193 = vpack.c.b16 %v4103, %v4101
    %v4194 = vpack.c.b16 %v4104, %v4102
    %v4195 = vpack.c.b16 %v4107, %v4105
    %v4196 = vpack.c.b16 %v4108, %v4106
    %v4197 = vpack.c.b16 %v4111, %v4109
    %v4198 = vpack.c.b16 %v4112, %v4110
    %v4199 = vpack.c.b16 %v4115, %v4113
    %v4200 = vpack.c.b16 %v4116, %v4114
    %v4201 = vpack.c.b16 %v4119, %v4117
    %v4202 = vpack.c.b16 %v4120, %v4118
    %v4203 = vpack.c.b16 %v4123, %v4121
    %v4204 = vpack.c.b16 %v4124, %v4122
    %v4205 = vpack.c.b16 %v4127, %v4125
    %v4206 = vpack.c.b16 %v4128, %v4126
    %v4207 = vpack.c.b16 %v4131, %v4129
    %v4208 = vpack.c.b16 %v4132, %v4130
    %v4209 = vpack.c.b16 %v4135, %v4133
    %v4210 = vpack.c.b16 %v4136, %v4134
    %v4211 = vpack.c.b16 %v4139, %v4137
    %v4212 = vpack.c.b16 %v4140, %v4138
    %v4213 = vpack.c.b16 %v4143, %v4141
    %v4214 = vpack.c.b16 %v4144, %v4142
    %v4215 = vpack.c.b16 %v4147, %v4145
    %v4216 = vpack.c.b16 %v4148, %v4146
    %v4217 = vpack.c.b16 %v4151, %v4149
    %v4218 = vpack.c.b16 %v4152, %v4150
    %v4219 = vpack.c.b16 %v4155, %v4153
    %v4220 = vpack.c.b16 %v4156, %v4154
    %4285 = vmatprep.subr.bf16.mxu0 %v4172
    %4286 = vmatpush1.bf16.msra.mxu0 %v4171
    %4287 = vmatprep.subr.bf16.mxu0 %v4170
    %4288 = vmatpush1.bf16.msra.mxu0 %v4169
    %4289 = vmatprep.subr.bf16.mxu0 %v4168
    %4290 = vmatpush1.bf16.msra.mxu0 %v4167
    %4291 = vmatprep.subr.bf16.mxu0 %v4166
    %4292 = vmatpush1.bf16.msra.mxu0 %v4165
    %4293 = vmatprep.subr.bf16.mxu0 %v4164
    %4294 = vmatpush1.bf16.msra.mxu0 %v4163
    %4295 = vmatprep.subr.bf16.mxu0 %v4162
    %4296 = vmatpush1.bf16.msra.mxu0 %v4161
    %4297 = vmatprep.subr.bf16.mxu0 %v4160
    %4298 = vmatpush1.bf16.msra.mxu0 %v4159
    %4299 = vmatprep.subr.bf16.mxu0 %v4158
    %4300 = vmatpush1.bf16.msra.mxu0 %v4157
    %4301 = vmatprep.subr.bf16.mxu0 %v4188
    %4302 = vmatpush2.bf16.msra.mxu0 %v4187
    %4303 = vmatprep.subr.bf16.mxu0 %v4186
    %4304 = vmatpush2.bf16.msra.mxu0 %v4185
    %4305 = vmatprep.subr.bf16.mxu0 %v4184
    %4306 = vmatpush2.bf16.msra.mxu0 %v4183
    %4307 = vmatprep.subr.bf16.mxu0 %v4182
    %4308 = vmatpush2.bf16.msra.mxu0 %v4181
    %4309 = vmatprep.subr.bf16.mxu0 %v4180
    %4310 = vmatpush2.bf16.msra.mxu0 %v4179
    %4311 = vmatprep.subr.bf16.mxu0 %v4178
    %4312 = vmatpush2.bf16.msra.mxu0 %v4177
    %4313 = vmatprep.subr.bf16.mxu0 %v4176
    %4314 = vmatpush2.bf16.msra.mxu0 %v4175
    %4315 = vmatprep.subr.bf16.mxu0 %v4174
    %4316 = vmatpush2.bf16.msra.mxu0 %v4173
    %4317 = vmatprep.mubr.bf16.mxu0 %v3886
    %4318 = vmatmul.mubr.bf16.gmra.mxu0 %v3885
    %v4319 = vpop.f32.mrf.mxu0
    %v4320 = vadd.f32 %v3958, %v4319
    %v4321 = vpop.f32.mrf.mxu0
    %v4322 = vadd.f32 %v3962, %v4321
    %v4323 = vpop.f32.mrf.mxu0
    %v4324 = vpop.f32.mrf.mxu0
    %4325 = vdwg.mxu0
    %4326 = vmatprep.subr.bf16.mxu0 %v4204
    %4327 = vmatpush1.bf16.msra.mxu0 %v4203
    %4328 = vmatprep.subr.bf16.mxu0 %v4202
    %4329 = vmatpush1.bf16.msra.mxu0 %v4201
    %4330 = vmatprep.subr.bf16.mxu0 %v4200
    %4331 = vmatpush1.bf16.msra.mxu0 %v4199
    %4332 = vmatprep.subr.bf16.mxu0 %v4198
    %4333 = vmatpush1.bf16.msra.mxu0 %v4197
    %4334 = vmatprep.subr.bf16.mxu0 %v4196
    %4335 = vmatpush1.bf16.msra.mxu0 %v4195
    %4336 = vmatprep.subr.bf16.mxu0 %v4194
    %4337 = vmatpush1.bf16.msra.mxu0 %v4193
    %4338 = vmatprep.subr.bf16.mxu0 %v4192
    %4339 = vmatpush1.bf16.msra.mxu0 %v4191
    %4340 = vmatprep.subr.bf16.mxu0 %v4190
    %4341 = vmatpush1.bf16.msra.mxu0 %v4189
    %4342 = vmatprep.subr.bf16.mxu0 %v4220
    %4343 = vmatpush2.bf16.msra.mxu0 %v4219
    %4344 = vmatprep.subr.bf16.mxu0 %v4218
    %4345 = vmatpush2.bf16.msra.mxu0 %v4217
    %4346 = vmatprep.subr.bf16.mxu0 %v4216
    %4347 = vmatpush2.bf16.msra.mxu0 %v4215
    %4348 = vmatprep.subr.bf16.mxu0 %v4214
    %4349 = vmatpush2.bf16.msra.mxu0 %v4213
    %4350 = vmatprep.subr.bf16.mxu0 %v4212
    %4351 = vmatpush2.bf16.msra.mxu0 %v4211
    %4352 = vmatprep.subr.bf16.mxu0 %v4210
    %4353 = vmatpush2.bf16.msra.mxu0 %v4209
    %4354 = vmatprep.subr.bf16.mxu0 %v4208
    %4355 = vmatpush2.bf16.msra.mxu0 %v4207
    %4356 = vmatprep.subr.bf16.mxu0 %v4206
    %4357 = vmatpush2.bf16.msra.mxu0 %v4205
    %4358 = vmatprep.mubr.bf16.mxu0 %v3888
    %4359 = vmatmul.mubr.bf16.gmra.mxu0 %v3887
    %v4360 = vpop.f32.mrf.mxu0
    %v4361 = vadd.f32 %v4320, %v4360
    %v4362 = vpop.f32.mrf.mxu0
    %v4363 = vadd.f32 %v4322, %v4362
    %v4364 = vpop.f32.mrf.mxu0
    %v4365 = vpop.f32.mrf.mxu0
    %4366 = vdwg.mxu0
    %vm4367 = vcmp.gt.f32.partialorder %v4361, 0.0
    %vm4368 = vcmp.gt.f32.partialorder %v4363, 0.0
    %v4369 = vmul.f32 %v4361, 0.01
    %v4370 = vmul.f32 %v4363, 0.01
    %v4371 = vsel %vm4367, %v4361, %v4369
    %v4372 = vsel %vm4368, %v4363, %v4370
    %v4373 = vpack.c.bf16 %v4371, %v4371
    %v4374 = vpack.c.bf16 %v4372, %v4372
    %v4375 = vld [vmem:[%s9] sm:$0xf]
    %v4376 = vld [vmem:[%s9 + $0x4] sm:$0xf]
    %v4377 = vld [vmem:[%s9 + $0x8] sm:$0xf]
    %v4378 = vld [vmem:[%s9 + $0xc] sm:$0xf]
    %v4379 = vld [vmem:[%s9 + $0x10] sm:$0xf]
    %v4380 = vld [vmem:[%s9 + $0x14] sm:$0xf]
    %v4381 = vld [vmem:[%s9 + $0x18] sm:$0xf]
    %v4382 = vld [vmem:[%s9 + $0x1c] sm:$0xf]
    %v4383 = vld [vmem:[%s9 + $0x20] sm:$0xf]
    %v4384 = vld [vmem:[%s9 + $0x24] sm:$0xf]
    %v4385 = vld [vmem:[%s9 + $0x28] sm:$0xf]
    %v4386 = vld [vmem:[%s9 + $0x2c] sm:$0xf]
    %v4387 = vld [vmem:[%s9 + $0x30] sm:$0xf]
    %v4388 = vld [vmem:[%s9 + $0x34] sm:$0xf]
    %v4389 = vld [vmem:[%s9 + $0x38] sm:$0xf]
    %v4390 = vld [vmem:[%s9 + $0x3c] sm:$0xf]
    %v4391 = vld [vmem:[%s9 + $0x40] sm:$0xf]
    %v4392 = vld [vmem:[%s9 + $0x44] sm:$0xf]
    %v4393 = vld [vmem:[%s9 + $0x48] sm:$0xf]
    %v4394 = vld [vmem:[%s9 + $0x4c] sm:$0xf]
    %v4395 = vld [vmem:[%s9 + $0x50] sm:$0xf]
    %v4396 = vld [vmem:[%s9 + $0x54] sm:$0xf]
    %v4397 = vld [vmem:[%s9 + $0x58] sm:$0xf]
    %v4398 = vld [vmem:[%s9 + $0x5c] sm:$0xf]
    %v4399 = vld [vmem:[%s9 + $0x60] sm:$0xf]
    %v4400 = vld [vmem:[%s9 + $0x64] sm:$0xf]
    %v4401 = vld [vmem:[%s9 + $0x68] sm:$0xf]
    %v4402 = vld [vmem:[%s9 + $0x6c] sm:$0xf]
    %v4403 = vld [vmem:[%s9 + $0x70] sm:$0xf]
    %v4404 = vld [vmem:[%s9 + $0x74] sm:$0xf]
    %v4405 = vld [vmem:[%s9 + $0x78] sm:$0xf]
    %v4406 = vld [vmem:[%s9 + $0x7c] sm:$0xf]
    %v4407 = vld [vmem:[%s10] sm:$0x1]
    %v4409 = vlaneseq
    %v4410 = vshrl.u32 %v4409, 7
    %v4411 = vsub.s32 0, %v4410
    %v4412 = vrot.slane %v4407, %v4411
    %v4446 = vunpack.c.l.b16 %v4375
    %v4447 = vunpack.c.l.b16 %v4376
    %v4448 = vunpack.c.l.b16 %v4377
    %v4449 = vunpack.c.l.b16 %v4378
    %v4450 = vunpack.c.l.b16 %v4379
    %v4451 = vunpack.c.l.b16 %v4380
    %v4452 = vunpack.c.l.b16 %v4381
    %v4453 = vunpack.c.l.b16 %v4382
    %v4454 = vunpack.c.l.b16 %v4383
    %v4455 = vunpack.c.l.b16 %v4384
    %v4456 = vunpack.c.l.b16 %v4385
    %v4457 = vunpack.c.l.b16 %v4386
    %v4458 = vunpack.c.l.b16 %v4387
    %v4459 = vunpack.c.l.b16 %v4388
    %v4460 = vunpack.c.l.b16 %v4389
    %v4461 = vunpack.c.l.b16 %v4390
    %v4462 = vunpack.c.l.b16 %v4391
    %v4463 = vunpack.c.l.b16 %v4392
    %v4464 = vunpack.c.l.b16 %v4393
    %v4465 = vunpack.c.l.b16 %v4394
    %v4466 = vunpack.c.l.b16 %v4395
    %v4467 = vunpack.c.l.b16 %v4396
    %v4468 = vunpack.c.l.b16 %v4397
    %v4469 = vunpack.c.l.b16 %v4398
    %v4470 = vunpack.c.l.b16 %v4399
    %v4471 = vunpack.c.l.b16 %v4400
    %v4472 = vunpack.c.l.b16 %v4401
    %v4473 = vunpack.c.l.b16 %v4402
    %v4474 = vunpack.c.l.b16 %v4403
    %v4475 = vunpack.c.l.b16 %v4404
    %v4476 = vunpack.c.l.b16 %v4405
    %v4477 = vunpack.c.l.b16 %v4406
    %v4478 = vpack.c.b16 %v4447, %v4446
    %v4479 = vpack.c.b16 %v4449, %v4448
    %v4480 = vpack.c.b16 %v4451, %v4450
    %v4481 = vpack.c.b16 %v4453, %v4452
    %v4482 = vpack.c.b16 %v4455, %v4454
    %v4483 = vpack.c.b16 %v4457, %v4456
    %v4484 = vpack.c.b16 %v4459, %v4458
    %v4485 = vpack.c.b16 %v4461, %v4460
    %v4486 = vpack.c.b16 %v4463, %v4462
    %v4487 = vpack.c.b16 %v4465, %v4464
    %v4488 = vpack.c.b16 %v4467, %v4466
    %v4489 = vpack.c.b16 %v4469, %v4468
    %v4490 = vpack.c.b16 %v4471, %v4470
    %v4491 = vpack.c.b16 %v4473, %v4472
    %v4492 = vpack.c.b16 %v4475, %v4474
    %v4493 = vpack.c.b16 %v4477, %v4476
    %4510 = vmatprep.subr.bf16.mxu0 0
    %4511 = vmatpush1.bf16.msra.mxu0 %v4485
    %4512 = vmatprep.subr.bf16.mxu0 0
    %4513 = vmatpush1.bf16.msra.mxu0 %v4484
    %4514 = vmatprep.subr.bf16.mxu0 0
    %4515 = vmatpush1.bf16.msra.mxu0 %v4483
    %4516 = vmatprep.subr.bf16.mxu0 0
    %4517 = vmatpush1.bf16.msra.mxu0 %v4482
    %4518 = vmatprep.subr.bf16.mxu0 0
    %4519 = vmatpush1.bf16.msra.mxu0 %v4481
    %4520 = vmatprep.subr.bf16.mxu0 0
    %4521 = vmatpush1.bf16.msra.mxu0 %v4480
    %4522 = vmatprep.subr.bf16.mxu0 0
    %4523 = vmatpush1.bf16.msra.mxu0 %v4479
    %4524 = vmatprep.subr.bf16.mxu0 0
    %4525 = vmatpush1.bf16.msra.mxu0 %v4478
    %4526 = vmatprep.subr.bf16.mxu0 0
    %4527 = vmatpush2.bf16.msra.mxu0 %v4493
    %4528 = vmatprep.subr.bf16.mxu0 0
    %4529 = vmatpush2.bf16.msra.mxu0 %v4492
    %4530 = vmatprep.subr.bf16.mxu0 0
    %4531 = vmatpush2.bf16.msra.mxu0 %v4491
    %4532 = vmatprep.subr.bf16.mxu0 0
    %4533 = vmatpush2.bf16.msra.mxu0 %v4490
    %4534 = vmatprep.subr.bf16.mxu0 0
    %4535 = vmatpush2.bf16.msra.mxu0 %v4489
    %4536 = vmatprep.subr.bf16.mxu0 0
    %4537 = vmatpush2.bf16.msra.mxu0 %v4488
    %4538 = vmatprep.subr.bf16.mxu0 0
    %4539 = vmatpush2.bf16.msra.mxu0 %v4487
    %4540 = vmatprep.subr.bf16.mxu0 0
    %4541 = vmatpush2.bf16.msra.mxu0 %v4486
    %4542 = vmatprep.mubr.bf16.mxu0 %v4374
    %4543 = vmatmul.mubr.bf16.gmra.mxu0 %v4373
    %v4544 = vpop.f32.mrf.mxu0
    %v4545 = vadd.f32 %v4412, %v4544
    %v4546 = vpop.f32.mrf.mxu0
    %v4547 = vpop.f32.mrf.mxu0
    %v4548 = vpop.f32.mrf.mxu0
    %4549 = vdwg.mxu0
    %vm4550 = vcmp.gt.f32.partialorder %v4545, 0.0
    %v4551 = vmul.f32 %v4545, 0.01
    %v4552 = vsel %vm4550, %v4545, %v4551
    %v4553 = vpack.c.bf16 %v4552, %v4552
    %v4554 = vld [vmem:[%s11] sm:$0xf]
    %v4555 = vld [vmem:[%s11 + $0x4] sm:$0xf]
    %v4556 = vld [vmem:[%s11 + $0x8] sm:$0xf]
    %v4557 = vld [vmem:[%s11 + $0xc] sm:$0xf]
    %v4558 = vld [vmem:[%s11 + $0x10] sm:$0xf]
    %v4559 = vld [vmem:[%s11 + $0x14] sm:$0xf]
    %v4560 = vld [vmem:[%s11 + $0x18] sm:$0xf]
    %v4561 = vld [vmem:[%s11 + $0x1c] sm:$0xf]
    %v4562 = vld [vmem:[%s11 + $0x20] sm:$0xf]
    %v4563 = vld [vmem:[%s11 + $0x24] sm:$0xf]
    %v4564 = vld [vmem:[%s11 + $0x28] sm:$0xf]
    %v4565 = vld [vmem:[%s11 + $0x2c] sm:$0xf]
    %v4566 = vld [vmem:[%s11 + $0x30] sm:$0xf]
    %v4567 = vld [vmem:[%s11 + $0x34] sm:$0xf]
    %v4568 = vld [vmem:[%s11 + $0x38] sm:$0xf]
    %v4569 = vld [vmem:[%s11 + $0x3c] sm:$0xf]
    %v4570 = vld [vmem:[%s12] sm:$0x1]
    %v4572 = vlaneseq
    %v4573 = vshrl.u32 %v4572, 7
    %v4574 = vsub.s32 0, %v4573
    %v4575 = vrot.slane %v4570, %v4574
    %v4593 = vunpack.c.l.b16 %v4554
    %v4594 = vunpack.c.l.b16 %v4555
    %v4595 = vunpack.c.l.b16 %v4556
    %v4596 = vunpack.c.l.b16 %v4557
    %v4597 = vunpack.c.l.b16 %v4558
    %v4598 = vunpack.c.l.b16 %v4559
    %v4599 = vunpack.c.l.b16 %v4560
    %v4600 = vunpack.c.l.b16 %v4561
    %v4601 = vunpack.c.l.b16 %v4562
    %v4602 = vunpack.c.l.b16 %v4563
    %v4603 = vunpack.c.l.b16 %v4564
    %v4604 = vunpack.c.l.b16 %v4565
    %v4605 = vunpack.c.l.b16 %v4566
    %v4606 = vunpack.c.l.b16 %v4567
    %v4607 = vunpack.c.l.b16 %v4568
    %v4608 = vunpack.c.l.b16 %v4569
    %v4609 = vpack.c.b16 %v4594, %v4593
    %v4610 = vpack.c.b16 %v4596, %v4595
    %v4611 = vpack.c.b16 %v4598, %v4597
    %v4612 = vpack.c.b16 %v4600, %v4599
    %v4613 = vpack.c.b16 %v4602, %v4601
    %v4614 = vpack.c.b16 %v4604, %v4603
    %v4615 = vpack.c.b16 %v4606, %v4605
    %v4616 = vpack.c.b16 %v4608, %v4607
    %4625 = vmatprep.subr.bf16.mxu0 0
    %4626 = vmatpush1.bf16.msra.mxu0 %v4616
    %4627 = vmatprep.subr.bf16.mxu0 0
    %4628 = vmatpush1.bf16.msra.mxu0 %v4615
    %4629 = vmatprep.subr.bf16.mxu0 0
    %4630 = vmatpush1.bf16.msra.mxu0 %v4614
    %4631 = vmatprep.subr.bf16.mxu0 0
    %4632 = vmatpush1.bf16.msra.mxu0 %v4613
    %4633 = vmatprep.subr.bf16.mxu0 0
    %4634 = vmatpush1.bf16.msra.mxu0 %v4612
    %4635 = vmatprep.subr.bf16.mxu0 0
    %4636 = vmatpush1.bf16.msra.mxu0 %v4611
    %4637 = vmatprep.subr.bf16.mxu0 0
    %4638 = vmatpush1.bf16.msra.mxu0 %v4610
    %4639 = vmatprep.subr.bf16.mxu0 0
    %4640 = vmatpush1.bf16.msra.mxu0 %v4609
    %4641 = vmatprep.subr.bf16.mxu0 0
    %4642 = vmatpush2.bf16.msra.mxu0 0
    %4643 = vmatprep.subr.bf16.mxu0 0
    %4644 = vmatpush2.bf16.msra.mxu0 0
    %4645 = vmatprep.subr.bf16.mxu0 0
    %4646 = vmatpush2.bf16.msra.mxu0 0
    %4647 = vmatprep.subr.bf16.mxu0 0
    %4648 = vmatpush2.bf16.msra.mxu0 0
    %4649 = vmatprep.subr.bf16.mxu0 0
    %4650 = vmatpush2.bf16.msra.mxu0 0
    %4651 = vmatprep.subr.bf16.mxu0 0
    %4652 = vmatpush2.bf16.msra.mxu0 0
    %4653 = vmatprep.subr.bf16.mxu0 0
    %4654 = vmatpush2.bf16.msra.mxu0 0
    %4655 = vmatprep.subr.bf16.mxu0 0
    %4656 = vmatpush2.bf16.msra.mxu0 0
    %4657 = vmatprep.mubr.bf16.mxu0 0
    %4658 = vmatmul.mubr.bf16.gmra.mxu0 %v4553
    %v4659 = vpop.f32.mrf.mxu0
    %v4660 = vadd.f32 %v4575, %v4659
    %v4661 = vpop.f32.mrf.mxu0
    %v4662 = vpop.f32.mrf.mxu0
    %v4663 = vpop.f32.mrf.mxu0
    %4664 = vdwg.mxu0
    %vm4665 = vcmask 74752
    %4666 = vst.msk [vmem:[#allocation6] sm:$0x3] %vm4665, %v4660
    // Predicated region
    $region54: #{tpu_custom_call.1} parent=1 // pred_check
      _
    $region55: #{tpu_custom_call.1} parent=1 // pred_check_branch
      %4668 = sbr.rel (0) target = $region57
    $region56: #{tpu_custom_call.1} parent=1 // pred_region
      %s4670 = ssub.s32 32, 32
      %4671 = vsyncadd [#allocation7], %s4670
      %s4673 = sshll.u32 [#allocation6], 4
      %s4674 = int_to_ptr.vmem [resolvable:$true] %s4673
      %4676 = dma.vmem_to_hbm [thread:$0]  %s4674, 32, %s13, [#allocation7]
    $region57: #{tpu_custom_call.1} parent=1 // pred_fallthru
      _
    // Predicated region
    $region58: #{tpu_custom_call.1} parent=1 // pred_check
      _
    $region59: #{tpu_custom_call.1} parent=1 // pred_check_branch
      %4678 = sbr.rel (0) target = $region61
    $region60: #{tpu_custom_call.1} parent=1 // pred_region
      %4679 = dma.done [#allocation7], 32
    $region61: #{tpu_custom_call.1} parent=1 // pred_fallthru
      _
    %4680 = vsyncpa [#allocation7], 1

</llo_original>
